<compile_context>
chip_gen: v6e
topology: v6e:2x2x1
jax: 0.10.0
libtpu: 0.0.40
codegen_flags: <defaults>
</compile_context>

<pallas_src>
import functools

import jax
import jax.numpy as jnp
from jax.experimental import pallas as pl
from jax.experimental.pallas import tpu as pltpu


# ----------------------------------------------------------------------------
# Weight layout helpers (one-time transforms, run in XLA outside the kernel)
# ----------------------------------------------------------------------------
def _conv_gemm_weight(w):
    """Conv2d weight (Cout, Cin, kh, kw) -> (kh*kw*Cin, Cout), K order (ki,kj,cin)."""
    cout, cin, kh, kw = w.shape
    return w.transpose(2, 3, 1, 0).reshape(kh * kw * cin, cout)


def _convT_phase_weights(w, b):
    """ConvTranspose2d (k=4,s=2,p=1) weight (Cin, Cout, 4, 4) -> phase GEMM matrix.

    B[(a,b,cin), (py,px,cout)] = flip(w).T[cout, cin, py+2a, px+2b]
    """
    cin, cout = w.shape[0], w.shape[1]
    wf = jnp.flip(w, (-2, -1)).transpose(1, 0, 2, 3)            # (cout, cin, 4, 4)
    wr = wf.reshape(cout, cin, 2, 2, 2, 2)                       # [co, ci, a, py, b, px]
    bmat = wr.transpose(2, 4, 1, 3, 5, 0).reshape(4 * cin, 4 * cout)
    return bmat, jnp.tile(b, 4)                                  # bias in (py,px,co) order


# ----------------------------------------------------------------------------
# The fused Pallas kernel (one batch element per grid step)
# ----------------------------------------------------------------------------
def _cyclegan_kernel(a1_ref, w1_ref, b1_ref, w2_ref, b2_ref,
                     wt1_ref, bt1_ref, wt2_ref, bt2_ref,
                     z2_ref, g_ref, h2p_ref, yq_ref, *, P, Q, compute_dtype):
    """P, Q = spatial size of the conv2 output (= H//4, W//4)."""

    def mm(a, w_ref):
        w = w_ref[...]
        if compute_dtype is not None:                 # bf16 MXU operands (all gens)
            a = a.astype(compute_dtype)
            w = w.astype(compute_dtype)
        return jnp.dot(a, w, preferred_element_type=jnp.float32)

    # ---------- layer 1: Conv2d(3, 64, k4, s2, p1) + ReLU -------------------
    # A1 rows were pre-ordered phase-major (py, px, r, c) in the wrapper so the
    # stride-2 access of layer 2 becomes unit-stride below.
    h1 = jnp.maximum(mm(a1_ref[0], w1_ref) + b1_ref[...], 0.0)   # (4*P*Q, 64)

    # Scatter h1 into zero-padded per-parity grids G[py,px] of shape (P+2, Q+2, 64).
    g_ref[...] = jnp.zeros(g_ref.shape, g_ref.dtype)
    for py in range(2):
        for px in range(2):
            base = (2 * py + px) * P * Q
            for r in range(P):
                g_ref[2 * py + px, 1 + r, 1:1 + Q, :] = \
                    h1[base + Q * r: base + Q * r + Q, :]

    # ---------- layer 2: Conv2d(64, 128, k4, s2, p1) + ReLU -----------------
    # tap (ki,kj) of output row oi lives at parity ((ki+1)%2,(kj+1)%2) and
    # offset ((ki+1)//2 + oi, (kj+1)//2 + oj) of G -> unit-stride slices.
    row_blocks = []
    for oi in range(P):
        taps = []
        for ki in range(4):
            pr, r0 = (ki + 1) % 2, (ki + 1) // 2
            for kj in range(4):
                pc, c0 = (kj + 1) % 2, (kj + 1) // 2
                taps.append(g_ref[2 * pr + pc, r0 + oi, c0:c0 + Q, :])   # (Q, 64)
        row_blocks.append(jnp.concatenate(taps, axis=-1))                # (Q, 1024)
    a2 = jnp.concatenate(row_blocks, axis=0)                              # (P*Q, 1024)
    h2 = jnp.maximum(mm(a2, w2_ref) + b2_ref[...], 0.0)                  # (P*Q, 128)

    # ---------- layer 3: ConvTranspose2d(128, 64, k4, s2, p1) + ReLU --------
    # Sub-pixel phase GEMM: one stride-1 2x2-tap GEMM -> 4*64 phase channels.
    h2p_ref[...] = jnp.zeros(h2p_ref.shape, h2p_ref.dtype)
    for oi in range(P):
        h2p_ref[1 + oi, 1:1 + Q, :] = h2[Q * oi: Q * oi + Q, :]
    t1_rows = []
    for u in range(P + 1):
        taps = [h2p_ref[u + a, b:b + Q + 1, :] for a in range(2) for b in range(2)]
        t1_rows.append(jnp.concatenate(taps, axis=-1))                    # (Q+1, 512)
    at1 = jnp.concatenate(t1_rows, axis=0)                                 # ((P+1)(Q+1), 512)
    z1 = jnp.maximum(mm(at1, wt1_ref) + bt1_ref[...], 0.0)                # (.., 256)

    # ---------- re-index z1 phases as the parity grid of padded y1 ----------
    # yq[py, px, R, C, :] == pad(y1, 1)[2R+py, 2C+px, :]   (y1 = layer-3 output)
    yq_ref[...] = jnp.zeros(yq_ref.shape, yq_ref.dtype)
    for py in range(2):
        for px in range(2):
            src = (2 * (1 - py) + (1 - px)) * 64
            r_lo, c_lo = 1 - py, 1 - px
            for rr in range(P):
                R = r_lo + rr
                row0 = (Q + 1) * R + c_lo
                yq_ref[2 * py + px, R, c_lo:c_lo + Q, :] = \
                    z1[row0:row0 + Q, src:src + 64]

    # ---------- layer 4: ConvTranspose2d(64, 3, k4, s2, p1) + Tanh ----------
    # Split the phase GEMM by window parity (ei, ej) -> all taps unit-stride.
    t2_rows = []
    for ei in range(2):
        for ej in range(2):
            for s in range(P + 1):
                taps = []
                for a in range(2):
                    pr, R = (ei + a) % 2, s + (ei + a) // 2
                    for b in range(2):
                        pc, C0 = (ej + b) % 2, (ej + b) // 2
                        taps.append(yq_ref[2 * pr + pc, R, C0:C0 + Q + 1, :])  # (Q+1, 64)
                t2_rows.append(jnp.concatenate(taps, axis=-1))                  # (Q+1, 256)
    at2 = jnp.concatenate(t2_rows, axis=0)                        # (4(P+1)(Q+1), 256)
    z2_ref[0] = jnp.tanh(mm(at2, wt2_ref) + bt2_ref[...])         # phase-major output


# ----------------------------------------------------------------------------
# Wrapper: weight/layout prep, one pallas_call, tiny boundary decode
# ----------------------------------------------------------------------------
def cyclegan_forward(x_nchw, params, *, compute_dtype=None):
    N, cin, H, W = x_nchw.shape
    assert cin == 3 and H % 4 == 0 and W % 4 == 0
    P, Q = H // 4, W // 4
    Hh, Ww = H // 2, W // 2
    M1 = 4 * P * Q                       # rows of GEMM-1 (c1 output pixels)
    M2 = 4 * (P + 1) * (Q + 1)           # rows of the final phase GEMM
    K1p = 128                            # layer-1 contraction padded 48 -> 128

    w1, b1 = params["c1"]
    w2, b2 = params["c2"]
    wt1, bt1 = params["t1"]
    wt2, bt2 = params["t2"]

    # --- GEMM weight matrices (one-time layout transforms) -------------------
    W1 = jnp.pad(_conv_gemm_weight(w1), ((0, K1p - 48), (0, 0)))       # (128, 64)
    W2 = _conv_gemm_weight(w2)                                          # (1024, 128)
    Wt1, Bt1 = _convT_phase_weights(wt1, bt1)                           # (512, 256)
    Wt2, Bt2 = _convT_phase_weights(wt2, bt2)                           # (256, 12)

    # --- layer-1 im2col in the wrapper (Cin=3, tiny input), phase-major rows -
    x = x_nchw.transpose(0, 2, 3, 1)                                    # NHWC once
    xp = jnp.pad(x, ((0, 0), (1, 1), (1, 1), (0, 0)))
    taps = [xp[:, ki: ki + 2 * (Hh - 1) + 1: 2, kj: kj + 2 * (Ww - 1) + 1: 2, :]
            for ki in range(4) for kj in range(4)]
    A1 = jnp.concatenate(taps, axis=-1)                                 # (N, Hh, Ww, 48)
    A1 = (A1.reshape(N, P, 2, Q, 2, 48)
             .transpose(0, 2, 4, 1, 3, 5)
             .reshape(N, M1, 48))
    A1 = jnp.pad(A1, ((0, 0), (0, 0), (0, K1p - 48)))                   # lane-aligned K

    if compute_dtype is not None:        # cast BEFORE the kernel: halves DMA bytes
        A1 = A1.astype(compute_dtype)
        W1, W2 = W1.astype(compute_dtype), W2.astype(compute_dtype)
        Wt1, Wt2 = Wt1.astype(compute_dtype), Wt2.astype(compute_dtype)

    b1m, b2m = b1.reshape(1, 64), b2.reshape(1, 128)
    bt1m, bt2m = Bt1.reshape(1, 256), Bt2.reshape(1, 12)

    kern = functools.partial(_cyclegan_kernel, P=P, Q=Q, compute_dtype=compute_dtype)
    z2 = pl.pallas_call(
        kern,
        out_shape=jax.ShapeDtypeStruct((N, M2, 12), jnp.float32),
        grid=(N,),
        in_specs=[
            pl.BlockSpec((1, M1, K1p), lambda n: (n, 0, 0)),
            pl.BlockSpec((K1p, 64), lambda n: (0, 0)),
            pl.BlockSpec((1, 64), lambda n: (0, 0)),
            pl.BlockSpec((16 * 64, 128), lambda n: (0, 0)),
            pl.BlockSpec((1, 128), lambda n: (0, 0)),
            pl.BlockSpec((4 * 128, 256), lambda n: (0, 0)),
            pl.BlockSpec((1, 256), lambda n: (0, 0)),
            pl.BlockSpec((4 * 64, 12), lambda n: (0, 0)),
            pl.BlockSpec((1, 12), lambda n: (0, 0)),
        ],
        out_specs=pl.BlockSpec((1, M2, 12), lambda n: (n, 0, 0)),
        scratch_shapes=[
            pltpu.VMEM((4, P + 2, Q + 2, 64), jnp.float32),     # parity grid of c1 out
            pltpu.VMEM((P + 2, Q + 2, 128), jnp.float32),       # padded c2 out
            pltpu.VMEM((4, P + 2, Q + 2, 64), jnp.float32),     # parity grid of padded t1 out
        ],
        compiler_params=pltpu.CompilerParams(
            dimension_semantics=("parallel",)),
    )(A1, W1, b1m, W2, b2m, Wt1, bt1m, Wt2, bt2m)

    # --- boundary decode on the tiny output: depth-to-space + NHWC->NCHW -----
    # z2 rows: ((ei*2+ej)*(P+1) + s)*(Q+1) + t  ;  cols: (qy*2+qx)*3 + co
    z = z2.reshape(N, 2, 2, P + 1, Q + 1, 2, 2, 3)
    zwin = (z.transpose(0, 3, 1, 4, 2, 5, 6, 7)
              .reshape(N, 2 * P + 2, 2 * Q + 2, 2, 2, 3))       # windows (i, j)
    rows = []
    for qy in range(2):
        cols = [zwin[:, qy:qy + 2 * P, qx:qx + 2 * Q, qy, qx, :] for qx in range(2)]
        rows.append(jnp.stack(cols, axis=3))                     # (N, 2P, 2Q, 2, 3)
    y = jnp.stack(rows, axis=2)                                  # (N, 2P, 2, 2Q, 2, 3)
    y = y.reshape(N, H, W, 3)
    return y.transpose(0, 3, 1, 2)                               # NHWC -> NCHW once


# ----------------------------------------------------------------------------
# Parameter init (PyTorch weight conventions) + pure-lax reference
# ----------------------------------------------------------------------------
def init_params(key):
    ks = jax.random.split(key, 8)

    def w(k, shape, fan_in):
        return jax.random.normal(k, shape, jnp.float32) / jnp.sqrt(fan_in)

    return {
        "c1": (w(ks[0], (64, 3, 4, 4), 3 * 16),
               0.01 * jax.random.normal(ks[1], (64,), jnp.float32)),
        "c2": (w(ks[2], (128, 64, 4, 4), 64 * 16),
               0.01 * jax.random.normal(ks[3], (128,), jnp.float32)),
        "t1": (w(ks[4], (128, 64, 4, 4), 128 * 16),   # ConvT weight: (Cin, Cout, k, k)
               0.01 * jax.random.normal(ks[5], (64,), jnp.float32)),
        "t2": (w(ks[6], (64, 3, 4, 4), 64 * 16),
               0.01 * jax.random.normal(ks[7], (3,), jnp.float32)),
    }


def ref_forward(x, params):
    dn = ("NCHW", "OIHW", "NCHW")

    def conv(x, w, b, stride, pad):
        y = jax.lax.conv_general_dilated(
            x, w, (stride, stride), ((pad, pad), (pad, pad)), dimension_numbers=dn)
        return y + b[None, :, None, None]

    def convT(x, w, b, stride, pad):
        k = w.shape[-1]
        wf = jnp.flip(w, (-2, -1)).transpose(1, 0, 2, 3)
        y = jax.lax.conv_general_dilated(
            x, wf, (1, 1), ((k - 1 - pad, k - 1 - pad),) * 2,
            lhs_dilation=(stride, stride), dimension_numbers=dn)
        return y + b[None, :, None, None]

    h = jax.nn.relu(conv(x, *params["c1"], 2, 1))
    h = jax.nn.relu(conv(h, *params["c2"], 2, 1))
    h = jax.nn.relu(convT(h, *params["t1"], 2, 1))
    return jnp.tanh(convT(h, *params["t2"], 2, 1))


if __name__ == "__main__":
    x = jax.random.uniform(jax.random.PRNGKey(0), (2, 3, 16, 16), jnp.float32,
                           minval=-1.0, maxval=1.0)
    params = init_params(jax.random.PRNGKey(42))

    y = jax.block_until_ready(jax.jit(cyclegan_forward)(x, params))
    assert y.shape == (2, 3, 16, 16), y.shape

    y_ref = jax.block_until_ready(ref_forward(x, params))
    max_err = float(jnp.max(jnp.abs(y - y_ref)))
    assert jnp.allclose(y, y_ref, rtol=5e-4, atol=5e-4), max_err

    print("KERNEL_OK")
</pallas_src>

<mosaic_0001>
module attributes {stable_mosaic.version = 11 : i64} {
  func.func @_cyclegan_kernel(%arg0: i32, %arg1: memref<1x64x128xf32, #tpu.memory_space<vmem>>, %arg2: memref<128x64xf32, #tpu.memory_space<vmem>>, %arg3: memref<1x64xf32, #tpu.memory_space<vmem>>, %arg4: memref<1024x128xf32, #tpu.memory_space<vmem>>, %arg5: memref<1x128xf32, #tpu.memory_space<vmem>>, %arg6: memref<512x256xf32, #tpu.memory_space<vmem>>, %arg7: memref<1x256xf32, #tpu.memory_space<vmem>>, %arg8: memref<256x12xf32, #tpu.memory_space<vmem>>, %arg9: memref<1x12xf32, #tpu.memory_space<vmem>>, %arg10: memref<1x100x12xf32, #tpu.memory_space<vmem>>, %arg11: memref<4x6x6x64xf32, #tpu.memory_space<vmem>>, %arg12: memref<6x6x128xf32, #tpu.memory_space<vmem>>, %arg13: memref<4x6x6x64xf32, #tpu.memory_space<vmem>>) attributes {dimension_semantics = [#tpu.dimension_semantics<parallel>], iteration_bounds = array<i64: 2>, scalar_prefetch = 0 : i64, scratch_operands = 3 : i64, tpu.core_type = #tpu.core_type<tc>, window_params = [{transform_indices = @transform_0, window_bounds = array<i64: 1, 64, 128>}, {pipeline_mode = #tpu.pipeline_mode<synchronous>, transform_indices = @transform_1, window_bounds = array<i64: 128, 64>}, {pipeline_mode = #tpu.pipeline_mode<synchronous>, transform_indices = @transform_2, window_bounds = array<i64: 1, 64>}, {pipeline_mode = #tpu.pipeline_mode<synchronous>, transform_indices = @transform_3, window_bounds = array<i64: 1024, 128>}, {pipeline_mode = #tpu.pipeline_mode<synchronous>, transform_indices = @transform_4, window_bounds = array<i64: 1, 128>}, {pipeline_mode = #tpu.pipeline_mode<synchronous>, transform_indices = @transform_5, window_bounds = array<i64: 512, 256>}, {pipeline_mode = #tpu.pipeline_mode<synchronous>, transform_indices = @transform_6, window_bounds = array<i64: 1, 256>}, {pipeline_mode = #tpu.pipeline_mode<synchronous>, transform_indices = @transform_7, window_bounds = array<i64: 256, 12>}, {pipeline_mode = #tpu.pipeline_mode<synchronous>, transform_indices = @transform_8, window_bounds = array<i64: 1, 12>}, {transform_indices = @transform_9, window_bounds = array<i64: 1, 100, 12>}]} {
    %c0 = arith.constant 0 : index
    %c0_0 = arith.constant 0 : index
    %c0_1 = arith.constant 0 : index
    %0 = vector.load %arg1[%c0, %c0_0, %c0_1] : memref<1x64x128xf32, #tpu.memory_space<vmem>>, vector<1x64x128xf32>
    %1 = vector.shape_cast %0 : vector<1x64x128xf32> to vector<64x128xf32>
    %c0_2 = arith.constant 0 : index
    %c0_3 = arith.constant 0 : index
    %2 = vector.load %arg2[%c0_2, %c0_3] : memref<128x64xf32, #tpu.memory_space<vmem>>, vector<128x64xf32>
    %cst = arith.constant dense<0.000000e+00> : vector<64x64xf32>
    %3 = tpu.matmul %1, %2, %cst {dimension_numbers = #tpu.dot_dimension_numbers<[1], [0], [0], [1], [0, 0, 1, 1], [], []>} : vector<64x128xf32>, vector<128x64xf32>, vector<64x64xf32> -> vector<64x64xf32>
    %c0_4 = arith.constant 0 : index
    %c0_5 = arith.constant 0 : index
    %4 = vector.load %arg3[%c0_4, %c0_5] : memref<1x64xf32, #tpu.memory_space<vmem>>, vector<1x64xf32>
    %5 = vector.broadcast %4 : vector<1x64xf32> to vector<64x64xf32>
    %6 = arith.addf %3, %5 : vector<64x64xf32>
    %cst_6 = arith.constant 0.000000e+00 : f32
    %7 = vector.broadcast %cst_6 : f32 to vector<64x64xf32>
    %8 = arith.maximumf %6, %7 : vector<64x64xf32>
    %cst_7 = arith.constant 0.000000e+00 : f32
    %9 = vector.broadcast %cst_7 : f32 to vector<4x6x6x64xf32>
    %c0_8 = arith.constant 0 : index
    %c0_9 = arith.constant 0 : index
    %c0_10 = arith.constant 0 : index
    %c0_11 = arith.constant 0 : index
    %10 = vector.load %arg11[%c0_8, %c0_9, %c0_10, %c0_11] : memref<4x6x6x64xf32, #tpu.memory_space<vmem>>, vector<4x6x6x64xf32>
    tpu.vector_store %arg11[%c0_8, %c0_9, %c0_10, %c0_11], %9 {strides = array<i32>} : memref<4x6x6x64xf32, #tpu.memory_space<vmem>>, vector<4x6x6x64xf32>,
    %11 = vector.extract_strided_slice %8 {offsets = [0, 0], sizes = [4, 64], strides = [1, 1]} : vector<64x64xf32> to vector<4x64xf32>
    %c0_12 = arith.constant 0 : index
    %c1 = arith.constant 1 : index
    %c1_13 = arith.constant 1 : index
    %c0_14 = arith.constant 0 : index
    %12 = vector.load %arg11[%c0_12, %c1, %c1_13, %c0_14] : memref<4x6x6x64xf32, #tpu.memory_space<vmem>>, vector<1x1x4x64xf32>
    %13 = vector.shape_cast %12 : vector<1x1x4x64xf32> to vector<4x64xf32>
    %14 = vector.shape_cast %11 : vector<4x64xf32> to vector<1x1x4x64xf32>
    tpu.vector_store %arg11[%c0_12, %c1, %c1_13, %c0_14], %14 {strides = array<i32>} : memref<4x6x6x64xf32, #tpu.memory_space<vmem>>, vector<1x1x4x64xf32>,
    %15 = vector.extract_strided_slice %8 {offsets = [4, 0], sizes = [4, 64], strides = [1, 1]} : vector<64x64xf32> to vector<4x64xf32>
    %c0_15 = arith.constant 0 : index
    %c2 = arith.constant 2 : index
    %c1_16 = arith.constant 1 : index
    %c0_17 = arith.constant 0 : index
    %16 = vector.load %arg11[%c0_15, %c2, %c1_16, %c0_17] : memref<4x6x6x64xf32, #tpu.memory_space<vmem>>, vector<1x1x4x64xf32>
    %17 = vector.shape_cast %16 : vector<1x1x4x64xf32> to vector<4x64xf32>
    %18 = vector.shape_cast %15 : vector<4x64xf32> to vector<1x1x4x64xf32>
    tpu.vector_store %arg11[%c0_15, %c2, %c1_16, %c0_17], %18 {strides = array<i32>} : memref<4x6x6x64xf32, #tpu.memory_space<vmem>>, vector<1x1x4x64xf32>,
    %19 = vector.extract_strided_slice %8 {offsets = [8, 0], sizes = [4, 64], strides = [1, 1]} : vector<64x64xf32> to vector<4x64xf32>
    %c0_18 = arith.constant 0 : index
    %c3 = arith.constant 3 : index
    %c1_19 = arith.constant 1 : index
    %c0_20 = arith.constant 0 : index
    %20 = vector.load %arg11[%c0_18, %c3, %c1_19, %c0_20] : memref<4x6x6x64xf32, #tpu.memory_space<vmem>>, vector<1x1x4x64xf32>
    %21 = vector.shape_cast %20 : vector<1x1x4x64xf32> to vector<4x64xf32>
    %22 = vector.shape_cast %19 : vector<4x64xf32> to vector<1x1x4x64xf32>
    tpu.vector_store %arg11[%c0_18, %c3, %c1_19, %c0_20], %22 {strides = array<i32>} : memref<4x6x6x64xf32, #tpu.memory_space<vmem>>, vector<1x1x4x64xf32>,
    %23 = vector.extract_strided_slice %8 {offsets = [12, 0], sizes = [4, 64], strides = [1, 1]} : vector<64x64xf32> to vector<4x64xf32>
    %c0_21 = arith.constant 0 : index
    %c4 = arith.constant 4 : index
    %c1_22 = arith.constant 1 : index
    %c0_23 = arith.constant 0 : index
    %24 = vector.load %arg11[%c0_21, %c4, %c1_22, %c0_23] : memref<4x6x6x64xf32, #tpu.memory_space<vmem>>, vector<1x1x4x64xf32>
    %25 = vector.shape_cast %24 : vector<1x1x4x64xf32> to vector<4x64xf32>
    %26 = vector.shape_cast %23 : vector<4x64xf32> to vector<1x1x4x64xf32>
    tpu.vector_store %arg11[%c0_21, %c4, %c1_22, %c0_23], %26 {strides = array<i32>} : memref<4x6x6x64xf32, #tpu.memory_space<vmem>>, vector<1x1x4x64xf32>,
    %27 = vector.extract_strided_slice %8 {offsets = [16, 0], sizes = [4, 64], strides = [1, 1]} : vector<64x64xf32> to vector<4x64xf32>
    %c1_24 = arith.constant 1 : index
    %c1_25 = arith.constant 1 : index
    %c1_26 = arith.constant 1 : index
    %c0_27 = arith.constant 0 : index
    %28 = vector.load %arg11[%c1_24, %c1_25, %c1_26, %c0_27] : memref<4x6x6x64xf32, #tpu.memory_space<vmem>>, vector<1x1x4x64xf32>
    %29 = vector.shape_cast %28 : vector<1x1x4x64xf32> to vector<4x64xf32>
    %30 = vector.shape_cast %27 : vector<4x64xf32> to vector<1x1x4x64xf32>
    tpu.vector_store %arg11[%c1_24, %c1_25, %c1_26, %c0_27], %30 {strides = array<i32>} : memref<4x6x6x64xf32, #tpu.memory_space<vmem>>, vector<1x1x4x64xf32>,
    %31 = vector.extract_strided_slice %8 {offsets = [20, 0], sizes = [4, 64], strides = [1, 1]} : vector<64x64xf32> to vector<4x64xf32>
    %c1_28 = arith.constant 1 : index
    %c2_29 = arith.constant 2 : index
    %c1_30 = arith.constant 1 : index
    %c0_31 = arith.constant 0 : index
    %32 = vector.load %arg11[%c1_28, %c2_29, %c1_30, %c0_31] : memref<4x6x6x64xf32, #tpu.memory_space<vmem>>, vector<1x1x4x64xf32>
    %33 = vector.shape_cast %32 : vector<1x1x4x64xf32> to vector<4x64xf32>
    %34 = vector.shape_cast %31 : vector<4x64xf32> to vector<1x1x4x64xf32>
    tpu.vector_store %arg11[%c1_28, %c2_29, %c1_30, %c0_31], %34 {strides = array<i32>} : memref<4x6x6x64xf32, #tpu.memory_space<vmem>>, vector<1x1x4x64xf32>,
    %35 = vector.extract_strided_slice %8 {offsets = [24, 0], sizes = [4, 64], strides = [1, 1]} : vector<64x64xf32> to vector<4x64xf32>
    %c1_32 = arith.constant 1 : index
    %c3_33 = arith.constant 3 : index
    %c1_34 = arith.constant 1 : index
    %c0_35 = arith.constant 0 : index
    %36 = vector.load %arg11[%c1_32, %c3_33, %c1_34, %c0_35] : memref<4x6x6x64xf32, #tpu.memory_space<vmem>>, vector<1x1x4x64xf32>
    %37 = vector.shape_cast %36 : vector<1x1x4x64xf32> to vector<4x64xf32>
    %38 = vector.shape_cast %35 : vector<4x64xf32> to vector<1x1x4x64xf32>
    tpu.vector_store %arg11[%c1_32, %c3_33, %c1_34, %c0_35], %38 {strides = array<i32>} : memref<4x6x6x64xf32, #tpu.memory_space<vmem>>, vector<1x1x4x64xf32>,
    %39 = vector.extract_strided_slice %8 {offsets = [28, 0], sizes = [4, 64], strides = [1, 1]} : vector<64x64xf32> to vector<4x64xf32>
    %c1_36 = arith.constant 1 : index
    %c4_37 = arith.constant 4 : index
    %c1_38 = arith.constant 1 : index
    %c0_39 = arith.constant 0 : index
    %40 = vector.load %arg11[%c1_36, %c4_37, %c1_38, %c0_39] : memref<4x6x6x64xf32, #tpu.memory_space<vmem>>, vector<1x1x4x64xf32>
    %41 = vector.shape_cast %40 : vector<1x1x4x64xf32> to vector<4x64xf32>
    %42 = vector.shape_cast %39 : vector<4x64xf32> to vector<1x1x4x64xf32>
    tpu.vector_store %arg11[%c1_36, %c4_37, %c1_38, %c0_39], %42 {strides = array<i32>} : memref<4x6x6x64xf32, #tpu.memory_space<vmem>>, vector<1x1x4x64xf32>,
    %43 = vector.extract_strided_slice %8 {offsets = [32, 0], sizes = [4, 64], strides = [1, 1]} : vector<64x64xf32> to vector<4x64xf32>
    %c2_40 = arith.constant 2 : index
    %c1_41 = arith.constant 1 : index
    %c1_42 = arith.constant 1 : index
    %c0_43 = arith.constant 0 : index
    %44 = vector.load %arg11[%c2_40, %c1_41, %c1_42, %c0_43] : memref<4x6x6x64xf32, #tpu.memory_space<vmem>>, vector<1x1x4x64xf32>
    %45 = vector.shape_cast %44 : vector<1x1x4x64xf32> to vector<4x64xf32>
    %46 = vector.shape_cast %43 : vector<4x64xf32> to vector<1x1x4x64xf32>
    tpu.vector_store %arg11[%c2_40, %c1_41, %c1_42, %c0_43], %46 {strides = array<i32>} : memref<4x6x6x64xf32, #tpu.memory_space<vmem>>, vector<1x1x4x64xf32>,
    %47 = vector.extract_strided_slice %8 {offsets = [36, 0], sizes = [4, 64], strides = [1, 1]} : vector<64x64xf32> to vector<4x64xf32>
    %c2_44 = arith.constant 2 : index
    %c2_45 = arith.constant 2 : index
    %c1_46 = arith.constant 1 : index
    %c0_47 = arith.constant 0 : index
    %48 = vector.load %arg11[%c2_44, %c2_45, %c1_46, %c0_47] : memref<4x6x6x64xf32, #tpu.memory_space<vmem>>, vector<1x1x4x64xf32>
    %49 = vector.shape_cast %48 : vector<1x1x4x64xf32> to vector<4x64xf32>
    %50 = vector.shape_cast %47 : vector<4x64xf32> to vector<1x1x4x64xf32>
    tpu.vector_store %arg11[%c2_44, %c2_45, %c1_46, %c0_47], %50 {strides = array<i32>} : memref<4x6x6x64xf32, #tpu.memory_space<vmem>>, vector<1x1x4x64xf32>,
    %51 = vector.extract_strided_slice %8 {offsets = [40, 0], sizes = [4, 64], strides = [1, 1]} : vector<64x64xf32> to vector<4x64xf32>
    %c2_48 = arith.constant 2 : index
    %c3_49 = arith.constant 3 : index
    %c1_50 = arith.constant 1 : index
    %c0_51 = arith.constant 0 : index
    %52 = vector.load %arg11[%c2_48, %c3_49, %c1_50, %c0_51] : memref<4x6x6x64xf32, #tpu.memory_space<vmem>>, vector<1x1x4x64xf32>
    %53 = vector.shape_cast %52 : vector<1x1x4x64xf32> to vector<4x64xf32>
    %54 = vector.shape_cast %51 : vector<4x64xf32> to vector<1x1x4x64xf32>
    tpu.vector_store %arg11[%c2_48, %c3_49, %c1_50, %c0_51], %54 {strides = array<i32>} : memref<4x6x6x64xf32, #tpu.memory_space<vmem>>, vector<1x1x4x64xf32>,
    %55 = vector.extract_strided_slice %8 {offsets = [44, 0], sizes = [4, 64], strides = [1, 1]} : vector<64x64xf32> to vector<4x64xf32>
    %c2_52 = arith.constant 2 : index
    %c4_53 = arith.constant 4 : index
    %c1_54 = arith.constant 1 : index
    %c0_55 = arith.constant 0 : index
    %56 = vector.load %arg11[%c2_52, %c4_53, %c1_54, %c0_55] : memref<4x6x6x64xf32, #tpu.memory_space<vmem>>, vector<1x1x4x64xf32>
    %57 = vector.shape_cast %56 : vector<1x1x4x64xf32> to vector<4x64xf32>
    %58 = vector.shape_cast %55 : vector<4x64xf32> to vector<1x1x4x64xf32>
    tpu.vector_store %arg11[%c2_52, %c4_53, %c1_54, %c0_55], %58 {strides = array<i32>} : memref<4x6x6x64xf32, #tpu.memory_space<vmem>>, vector<1x1x4x64xf32>,
    %59 = vector.extract_strided_slice %8 {offsets = [48, 0], sizes = [4, 64], strides = [1, 1]} : vector<64x64xf32> to vector<4x64xf32>
    %c3_56 = arith.constant 3 : index
    %c1_57 = arith.constant 1 : index
    %c1_58 = arith.constant 1 : index
    %c0_59 = arith.constant 0 : index
    %60 = vector.load %arg11[%c3_56, %c1_57, %c1_58, %c0_59] : memref<4x6x6x64xf32, #tpu.memory_space<vmem>>, vector<1x1x4x64xf32>
    %61 = vector.shape_cast %60 : vector<1x1x4x64xf32> to vector<4x64xf32>
    %62 = vector.shape_cast %59 : vector<4x64xf32> to vector<1x1x4x64xf32>
    tpu.vector_store %arg11[%c3_56, %c1_57, %c1_58, %c0_59], %62 {strides = array<i32>} : memref<4x6x6x64xf32, #tpu.memory_space<vmem>>, vector<1x1x4x64xf32>,
    %63 = vector.extract_strided_slice %8 {offsets = [52, 0], sizes = [4, 64], strides = [1, 1]} : vector<64x64xf32> to vector<4x64xf32>
    %c3_60 = arith.constant 3 : index
    %c2_61 = arith.constant 2 : index
    %c1_62 = arith.constant 1 : index
    %c0_63 = arith.constant 0 : index
    %64 = vector.load %arg11[%c3_60, %c2_61, %c1_62, %c0_63] : memref<4x6x6x64xf32, #tpu.memory_space<vmem>>, vector<1x1x4x64xf32>
    %65 = vector.shape_cast %64 : vector<1x1x4x64xf32> to vector<4x64xf32>
    %66 = vector.shape_cast %63 : vector<4x64xf32> to vector<1x1x4x64xf32>
    tpu.vector_store %arg11[%c3_60, %c2_61, %c1_62, %c0_63], %66 {strides = array<i32>} : memref<4x6x6x64xf32, #tpu.memory_space<vmem>>, vector<1x1x4x64xf32>,
    %67 = vector.extract_strided_slice %8 {offsets = [56, 0], sizes = [4, 64], strides = [1, 1]} : vector<64x64xf32> to vector<4x64xf32>
    %c3_64 = arith.constant 3 : index
    %c3_65 = arith.constant 3 : index
    %c1_66 = arith.constant 1 : index
    %c0_67 = arith.constant 0 : index
    %68 = vector.load %arg11[%c3_64, %c3_65, %c1_66, %c0_67] : memref<4x6x6x64xf32, #tpu.memory_space<vmem>>, vector<1x1x4x64xf32>
    %69 = vector.shape_cast %68 : vector<1x1x4x64xf32> to vector<4x64xf32>
    %70 = vector.shape_cast %67 : vector<4x64xf32> to vector<1x1x4x64xf32>
    tpu.vector_store %arg11[%c3_64, %c3_65, %c1_66, %c0_67], %70 {strides = array<i32>} : memref<4x6x6x64xf32, #tpu.memory_space<vmem>>, vector<1x1x4x64xf32>,
    %71 = vector.extract_strided_slice %8 {offsets = [60, 0], sizes = [4, 64], strides = [1, 1]} : vector<64x64xf32> to vector<4x64xf32>
    %c3_68 = arith.constant 3 : index
    %c4_69 = arith.constant 4 : index
    %c1_70 = arith.constant 1 : index
    %c0_71 = arith.constant 0 : index
    %72 = vector.load %arg11[%c3_68, %c4_69, %c1_70, %c0_71] : memref<4x6x6x64xf32, #tpu.memory_space<vmem>>, vector<1x1x4x64xf32>
    %73 = vector.shape_cast %72 : vector<1x1x4x64xf32> to vector<4x64xf32>
    %74 = vector.shape_cast %71 : vector<4x64xf32> to vector<1x1x4x64xf32>
    tpu.vector_store %arg11[%c3_68, %c4_69, %c1_70, %c0_71], %74 {strides = array<i32>} : memref<4x6x6x64xf32, #tpu.memory_space<vmem>>, vector<1x1x4x64xf32>,
    %c3_72 = arith.constant 3 : index
    %c0_73 = arith.constant 0 : index
    %c0_74 = arith.constant 0 : index
    %c0_75 = arith.constant 0 : index
    %75 = vector.load %arg11[%c3_72, %c0_73, %c0_74, %c0_75] : memref<4x6x6x64xf32, #tpu.memory_space<vmem>>, vector<1x1x4x64xf32>
    %76 = vector.shape_cast %75 : vector<1x1x4x64xf32> to vector<4x64xf32>
    %c2_76 = arith.constant 2 : index
    %c0_77 = arith.constant 0 : index
    %c1_78 = arith.constant 1 : index
    %c0_79 = arith.constant 0 : index
    %77 = vector.load %arg11[%c2_76, %c0_77, %c1_78, %c0_79] : memref<4x6x6x64xf32, #tpu.memory_space<vmem>>, vector<1x1x4x64xf32>
    %78 = vector.shape_cast %77 : vector<1x1x4x64xf32> to vector<4x64xf32>
    %c3_80 = arith.constant 3 : index
    %c0_81 = arith.constant 0 : index
    %c1_82 = arith.constant 1 : index
    %c0_83 = arith.constant 0 : index
    %79 = vector.load %arg11[%c3_80, %c0_81, %c1_82, %c0_83] : memref<4x6x6x64xf32, #tpu.memory_space<vmem>>, vector<1x1x4x64xf32>
    %80 = vector.shape_cast %79 : vector<1x1x4x64xf32> to vector<4x64xf32>
    %c2_84 = arith.constant 2 : index
    %c0_85 = arith.constant 0 : index
    %c2_86 = arith.constant 2 : index
    %c0_87 = arith.constant 0 : index
    %81 = vector.load %arg11[%c2_84, %c0_85, %c2_86, %c0_87] : memref<4x6x6x64xf32, #tpu.memory_space<vmem>>, vector<1x1x4x64xf32>
    %82 = vector.shape_cast %81 : vector<1x1x4x64xf32> to vector<4x64xf32>
    %c1_88 = arith.constant 1 : index
    %c1_89 = arith.constant 1 : index
    %c0_90 = arith.constant 0 : index
    %c0_91 = arith.constant 0 : index
    %83 = vector.load %arg11[%c1_88, %c1_89, %c0_90, %c0_91] : memref<4x6x6x64xf32, #tpu.memory_space<vmem>>, vector<1x1x4x64xf32>
    %84 = vector.shape_cast %83 : vector<1x1x4x64xf32> to vector<4x64xf32>
    %c0_92 = arith.constant 0 : index
    %c1_93 = arith.constant 1 : index
    %c1_94 = arith.constant 1 : index
    %c0_95 = arith.constant 0 : index
    %85 = vector.load %arg11[%c0_92, %c1_93, %c1_94, %c0_95] : memref<4x6x6x64xf32, #tpu.memory_space<vmem>>, vector<1x1x4x64xf32>
    %86 = vector.shape_cast %85 : vector<1x1x4x64xf32> to vector<4x64xf32>
    %c1_96 = arith.constant 1 : index
    %c1_97 = arith.constant 1 : index
    %c1_98 = arith.constant 1 : index
    %c0_99 = arith.constant 0 : index
    %87 = vector.load %arg11[%c1_96, %c1_97, %c1_98, %c0_99] : memref<4x6x6x64xf32, #tpu.memory_space<vmem>>, vector<1x1x4x64xf32>
    %88 = vector.shape_cast %87 : vector<1x1x4x64xf32> to vector<4x64xf32>
    %c0_100 = arith.constant 0 : index
    %c1_101 = arith.constant 1 : index
    %c2_102 = arith.constant 2 : index
    %c0_103 = arith.constant 0 : index
    %89 = vector.load %arg11[%c0_100, %c1_101, %c2_102, %c0_103] : memref<4x6x6x64xf32, #tpu.memory_space<vmem>>, vector<1x1x4x64xf32>
    %90 = vector.shape_cast %89 : vector<1x1x4x64xf32> to vector<4x64xf32>
    %c3_104 = arith.constant 3 : index
    %c1_105 = arith.constant 1 : index
    %c0_106 = arith.constant 0 : index
    %c0_107 = arith.constant 0 : index
    %91 = vector.load %arg11[%c3_104, %c1_105, %c0_106, %c0_107] : memref<4x6x6x64xf32, #tpu.memory_space<vmem>>, vector<1x1x4x64xf32>
    %92 = vector.shape_cast %91 : vector<1x1x4x64xf32> to vector<4x64xf32>
    %c2_108 = arith.constant 2 : index
    %c1_109 = arith.constant 1 : index
    %c1_110 = arith.constant 1 : index
    %c0_111 = arith.constant 0 : index
    %93 = vector.load %arg11[%c2_108, %c1_109, %c1_110, %c0_111] : memref<4x6x6x64xf32, #tpu.memory_space<vmem>>, vector<1x1x4x64xf32>
    %94 = vector.shape_cast %93 : vector<1x1x4x64xf32> to vector<4x64xf32>
    %c3_112 = arith.constant 3 : index
    %c1_113 = arith.constant 1 : index
    %c1_114 = arith.constant 1 : index
    %c0_115 = arith.constant 0 : index
    %95 = vector.load %arg11[%c3_112, %c1_113, %c1_114, %c0_115] : memref<4x6x6x64xf32, #tpu.memory_space<vmem>>, vector<1x1x4x64xf32>
    %96 = vector.shape_cast %95 : vector<1x1x4x64xf32> to vector<4x64xf32>
    %c2_116 = arith.constant 2 : index
    %c1_117 = arith.constant 1 : index
    %c2_118 = arith.constant 2 : index
    %c0_119 = arith.constant 0 : index
    %97 = vector.load %arg11[%c2_116, %c1_117, %c2_118, %c0_119] : memref<4x6x6x64xf32, #tpu.memory_space<vmem>>, vector<1x1x4x64xf32>
    %98 = vector.shape_cast %97 : vector<1x1x4x64xf32> to vector<4x64xf32>
    %c1_120 = arith.constant 1 : index
    %c2_121 = arith.constant 2 : index
    %c0_122 = arith.constant 0 : index
    %c0_123 = arith.constant 0 : index
    %99 = vector.load %arg11[%c1_120, %c2_121, %c0_122, %c0_123] : memref<4x6x6x64xf32, #tpu.memory_space<vmem>>, vector<1x1x4x64xf32>
    %100 = vector.shape_cast %99 : vector<1x1x4x64xf32> to vector<4x64xf32>
    %c0_124 = arith.constant 0 : index
    %c2_125 = arith.constant 2 : index
    %c1_126 = arith.constant 1 : index
    %c0_127 = arith.constant 0 : index
    %101 = vector.load %arg11[%c0_124, %c2_125, %c1_126, %c0_127] : memref<4x6x6x64xf32, #tpu.memory_space<vmem>>, vector<1x1x4x64xf32>
    %102 = vector.shape_cast %101 : vector<1x1x4x64xf32> to vector<4x64xf32>
    %c1_128 = arith.constant 1 : index
    %c2_129 = arith.constant 2 : index
    %c1_130 = arith.constant 1 : index
    %c0_131 = arith.constant 0 : index
    %103 = vector.load %arg11[%c1_128, %c2_129, %c1_130, %c0_131] : memref<4x6x6x64xf32, #tpu.memory_space<vmem>>, vector<1x1x4x64xf32>
    %104 = vector.shape_cast %103 : vector<1x1x4x64xf32> to vector<4x64xf32>
    %c0_132 = arith.constant 0 : index
    %c2_133 = arith.constant 2 : index
    %c2_134 = arith.constant 2 : index
    %c0_135 = arith.constant 0 : index
    %105 = vector.load %arg11[%c0_132, %c2_133, %c2_134, %c0_135] : memref<4x6x6x64xf32, #tpu.memory_space<vmem>>, vector<1x1x4x64xf32>
    %106 = vector.shape_cast %105 : vector<1x1x4x64xf32> to vector<4x64xf32>
    %107 = tpu.concatenate %76, %78, %80, %82, %84, %86, %88, %90, %92, %94, %96, %98, %100, %102, %104, %106 in 1 : vector<4x64xf32>, vector<4x64xf32>, vector<4x64xf32>, vector<4x64xf32>, vector<4x64xf32>, vector<4x64xf32>, vector<4x64xf32>, vector<4x64xf32>, vector<4x64xf32>, vector<4x64xf32>, vector<4x64xf32>, vector<4x64xf32>, vector<4x64xf32>, vector<4x64xf32>, vector<4x64xf32>, vector<4x64xf32> -> vector<4x1024xf32>
    %c3_136 = arith.constant 3 : index
    %c1_137 = arith.constant 1 : index
    %c0_138 = arith.constant 0 : index
    %c0_139 = arith.constant 0 : index
    %108 = vector.load %arg11[%c3_136, %c1_137, %c0_138, %c0_139] : memref<4x6x6x64xf32, #tpu.memory_space<vmem>>, vector<1x1x4x64xf32>
    %109 = vector.shape_cast %108 : vector<1x1x4x64xf32> to vector<4x64xf32>
    %c2_140 = arith.constant 2 : index
    %c1_141 = arith.constant 1 : index
    %c1_142 = arith.constant 1 : index
    %c0_143 = arith.constant 0 : index
    %110 = vector.load %arg11[%c2_140, %c1_141, %c1_142, %c0_143] : memref<4x6x6x64xf32, #tpu.memory_space<vmem>>, vector<1x1x4x64xf32>
    %111 = vector.shape_cast %110 : vector<1x1x4x64xf32> to vector<4x64xf32>
    %c3_144 = arith.constant 3 : index
    %c1_145 = arith.constant 1 : index
    %c1_146 = arith.constant 1 : index
    %c0_147 = arith.constant 0 : index
    %112 = vector.load %arg11[%c3_144, %c1_145, %c1_146, %c0_147] : memref<4x6x6x64xf32, #tpu.memory_space<vmem>>, vector<1x1x4x64xf32>
    %113 = vector.shape_cast %112 : vector<1x1x4x64xf32> to vector<4x64xf32>
    %c2_148 = arith.constant 2 : index
    %c1_149 = arith.constant 1 : index
    %c2_150 = arith.constant 2 : index
    %c0_151 = arith.constant 0 : index
    %114 = vector.load %arg11[%c2_148, %c1_149, %c2_150, %c0_151] : memref<4x6x6x64xf32, #tpu.memory_space<vmem>>, vector<1x1x4x64xf32>
    %115 = vector.shape_cast %114 : vector<1x1x4x64xf32> to vector<4x64xf32>
    %c1_152 = arith.constant 1 : index
    %c2_153 = arith.constant 2 : index
    %c0_154 = arith.constant 0 : index
    %c0_155 = arith.constant 0 : index
    %116 = vector.load %arg11[%c1_152, %c2_153, %c0_154, %c0_155] : memref<4x6x6x64xf32, #tpu.memory_space<vmem>>, vector<1x1x4x64xf32>
    %117 = vector.shape_cast %116 : vector<1x1x4x64xf32> to vector<4x64xf32>
    %c0_156 = arith.constant 0 : index
    %c2_157 = arith.constant 2 : index
    %c1_158 = arith.constant 1 : index
    %c0_159 = arith.constant 0 : index
    %118 = vector.load %arg11[%c0_156, %c2_157, %c1_158, %c0_159] : memref<4x6x6x64xf32, #tpu.memory_space<vmem>>, vector<1x1x4x64xf32>
    %119 = vector.shape_cast %118 : vector<1x1x4x64xf32> to vector<4x64xf32>
    %c1_160 = arith.constant 1 : index
    %c2_161 = arith.constant 2 : index
    %c1_162 = arith.constant 1 : index
    %c0_163 = arith.constant 0 : index
    %120 = vector.load %arg11[%c1_160, %c2_161, %c1_162, %c0_163] : memref<4x6x6x64xf32, #tpu.memory_space<vmem>>, vector<1x1x4x64xf32>
    %121 = vector.shape_cast %120 : vector<1x1x4x64xf32> to vector<4x64xf32>
    %c0_164 = arith.constant 0 : index
    %c2_165 = arith.constant 2 : index
    %c2_166 = arith.constant 2 : index
    %c0_167 = arith.constant 0 : index
    %122 = vector.load %arg11[%c0_164, %c2_165, %c2_166, %c0_167] : memref<4x6x6x64xf32, #tpu.memory_space<vmem>>, vector<1x1x4x64xf32>
    %123 = vector.shape_cast %122 : vector<1x1x4x64xf32> to vector<4x64xf32>
    %c3_168 = arith.constant 3 : index
    %c2_169 = arith.constant 2 : index
    %c0_170 = arith.constant 0 : index
    %c0_171 = arith.constant 0 : index
    %124 = vector.load %arg11[%c3_168, %c2_169, %c0_170, %c0_171] : memref<4x6x6x64xf32, #tpu.memory_space<vmem>>, vector<1x1x4x64xf32>
    %125 = vector.shape_cast %124 : vector<1x1x4x64xf32> to vector<4x64xf32>
    %c2_172 = arith.constant 2 : index
    %c2_173 = arith.constant 2 : index
    %c1_174 = arith.constant 1 : index
    %c0_175 = arith.constant 0 : index
    %126 = vector.load %arg11[%c2_172, %c2_173, %c1_174, %c0_175] : memref<4x6x6x64xf32, #tpu.memory_space<vmem>>, vector<1x1x4x64xf32>
    %127 = vector.shape_cast %126 : vector<1x1x4x64xf32> to vector<4x64xf32>
    %c3_176 = arith.constant 3 : index
    %c2_177 = arith.constant 2 : index
    %c1_178 = arith.constant 1 : index
    %c0_179 = arith.constant 0 : index
    %128 = vector.load %arg11[%c3_176, %c2_177, %c1_178, %c0_179] : memref<4x6x6x64xf32, #tpu.memory_space<vmem>>, vector<1x1x4x64xf32>
    %129 = vector.shape_cast %128 : vector<1x1x4x64xf32> to vector<4x64xf32>
    %c2_180 = arith.constant 2 : index
    %c2_181 = arith.constant 2 : index
    %c2_182 = arith.constant 2 : index
    %c0_183 = arith.constant 0 : index
    %130 = vector.load %arg11[%c2_180, %c2_181, %c2_182, %c0_183] : memref<4x6x6x64xf32, #tpu.memory_space<vmem>>, vector<1x1x4x64xf32>
    %131 = vector.shape_cast %130 : vector<1x1x4x64xf32> to vector<4x64xf32>
    %c1_184 = arith.constant 1 : index
    %c3_185 = arith.constant 3 : index
    %c0_186 = arith.constant 0 : index
    %c0_187 = arith.constant 0 : index
    %132 = vector.load %arg11[%c1_184, %c3_185, %c0_186, %c0_187] : memref<4x6x6x64xf32, #tpu.memory_space<vmem>>, vector<1x1x4x64xf32>
    %133 = vector.shape_cast %132 : vector<1x1x4x64xf32> to vector<4x64xf32>
    %c0_188 = arith.constant 0 : index
    %c3_189 = arith.constant 3 : index
    %c1_190 = arith.constant 1 : index
    %c0_191 = arith.constant 0 : index
    %134 = vector.load %arg11[%c0_188, %c3_189, %c1_190, %c0_191] : memref<4x6x6x64xf32, #tpu.memory_space<vmem>>, vector<1x1x4x64xf32>
    %135 = vector.shape_cast %134 : vector<1x1x4x64xf32> to vector<4x64xf32>
    %c1_192 = arith.constant 1 : index
    %c3_193 = arith.constant 3 : index
    %c1_194 = arith.constant 1 : index
    %c0_195 = arith.constant 0 : index
    %136 = vector.load %arg11[%c1_192, %c3_193, %c1_194, %c0_195] : memref<4x6x6x64xf32, #tpu.memory_space<vmem>>, vector<1x1x4x64xf32>
    %137 = vector.shape_cast %136 : vector<1x1x4x64xf32> to vector<4x64xf32>
    %c0_196 = arith.constant 0 : index
    %c3_197 = arith.constant 3 : index
    %c2_198 = arith.constant 2 : index
    %c0_199 = arith.constant 0 : index
    %138 = vector.load %arg11[%c0_196, %c3_197, %c2_198, %c0_199] : memref<4x6x6x64xf32, #tpu.memory_space<vmem>>, vector<1x1x4x64xf32>
    %139 = vector.shape_cast %138 : vector<1x1x4x64xf32> to vector<4x64xf32>
    %140 = tpu.concatenate %109, %111, %113, %115, %117, %119, %121, %123, %125, %127, %129, %131, %133, %135, %137, %139 in 1 : vector<4x64xf32>, vector<4x64xf32>, vector<4x64xf32>, vector<4x64xf32>, vector<4x64xf32>, vector<4x64xf32>, vector<4x64xf32>, vector<4x64xf32>, vector<4x64xf32>, vector<4x64xf32>, vector<4x64xf32>, vector<4x64xf32>, vector<4x64xf32>, vector<4x64xf32>, vector<4x64xf32>, vector<4x64xf32> -> vector<4x1024xf32>
    %c3_200 = arith.constant 3 : index
    %c2_201 = arith.constant 2 : index
    %c0_202 = arith.constant 0 : index
    %c0_203 = arith.constant 0 : index
    %141 = vector.load %arg11[%c3_200, %c2_201, %c0_202, %c0_203] : memref<4x6x6x64xf32, #tpu.memory_space<vmem>>, vector<1x1x4x64xf32>
    %142 = vector.shape_cast %141 : vector<1x1x4x64xf32> to vector<4x64xf32>
    %c2_204 = arith.constant 2 : index
    %c2_205 = arith.constant 2 : index
    %c1_206 = arith.constant 1 : index
    %c0_207 = arith.constant 0 : index
    %143 = vector.load %arg11[%c2_204, %c2_205, %c1_206, %c0_207] : memref<4x6x6x64xf32, #tpu.memory_space<vmem>>, vector<1x1x4x64xf32>
    %144 = vector.shape_cast %143 : vector<1x1x4x64xf32> to vector<4x64xf32>
    %c3_208 = arith.constant 3 : index
    %c2_209 = arith.constant 2 : index
    %c1_210 = arith.constant 1 : index
    %c0_211 = arith.constant 0 : index
    %145 = vector.load %arg11[%c3_208, %c2_209, %c1_210, %c0_211] : memref<4x6x6x64xf32, #tpu.memory_space<vmem>>, vector<1x1x4x64xf32>
    %146 = vector.shape_cast %145 : vector<1x1x4x64xf32> to vector<4x64xf32>
    %c2_212 = arith.constant 2 : index
    %c2_213 = arith.constant 2 : index
    %c2_214 = arith.constant 2 : index
    %c0_215 = arith.constant 0 : index
    %147 = vector.load %arg11[%c2_212, %c2_213, %c2_214, %c0_215] : memref<4x6x6x64xf32, #tpu.memory_space<vmem>>, vector<1x1x4x64xf32>
    %148 = vector.shape_cast %147 : vector<1x1x4x64xf32> to vector<4x64xf32>
    %c1_216 = arith.constant 1 : index
    %c3_217 = arith.constant 3 : index
    %c0_218 = arith.constant 0 : index
    %c0_219 = arith.constant 0 : index
    %149 = vector.load %arg11[%c1_216, %c3_217, %c0_218, %c0_219] : memref<4x6x6x64xf32, #tpu.memory_space<vmem>>, vector<1x1x4x64xf32>
    %150 = vector.shape_cast %149 : vector<1x1x4x64xf32> to vector<4x64xf32>
    %c0_220 = arith.constant 0 : index
    %c3_221 = arith.constant 3 : index
    %c1_222 = arith.constant 1 : index
    %c0_223 = arith.constant 0 : index
    %151 = vector.load %arg11[%c0_220, %c3_221, %c1_222, %c0_223] : memref<4x6x6x64xf32, #tpu.memory_space<vmem>>, vector<1x1x4x64xf32>
    %152 = vector.shape_cast %151 : vector<1x1x4x64xf32> to vector<4x64xf32>
    %c1_224 = arith.constant 1 : index
    %c3_225 = arith.constant 3 : index
    %c1_226 = arith.constant 1 : index
    %c0_227 = arith.constant 0 : index
    %153 = vector.load %arg11[%c1_224, %c3_225, %c1_226, %c0_227] : memref<4x6x6x64xf32, #tpu.memory_space<vmem>>, vector<1x1x4x64xf32>
    %154 = vector.shape_cast %153 : vector<1x1x4x64xf32> to vector<4x64xf32>
    %c0_228 = arith.constant 0 : index
    %c3_229 = arith.constant 3 : index
    %c2_230 = arith.constant 2 : index
    %c0_231 = arith.constant 0 : index
    %155 = vector.load %arg11[%c0_228, %c3_229, %c2_230, %c0_231] : memref<4x6x6x64xf32, #tpu.memory_space<vmem>>, vector<1x1x4x64xf32>
    %156 = vector.shape_cast %155 : vector<1x1x4x64xf32> to vector<4x64xf32>
    %c3_232 = arith.constant 3 : index
    %c3_233 = arith.constant 3 : index
    %c0_234 = arith.constant 0 : index
    %c0_235 = arith.constant 0 : index
    %157 = vector.load %arg11[%c3_232, %c3_233, %c0_234, %c0_235] : memref<4x6x6x64xf32, #tpu.memory_space<vmem>>, vector<1x1x4x64xf32>
    %158 = vector.shape_cast %157 : vector<1x1x4x64xf32> to vector<4x64xf32>
    %c2_236 = arith.constant 2 : index
    %c3_237 = arith.constant 3 : index
    %c1_238 = arith.constant 1 : index
    %c0_239 = arith.constant 0 : index
    %159 = vector.load %arg11[%c2_236, %c3_237, %c1_238, %c0_239] : memref<4x6x6x64xf32, #tpu.memory_space<vmem>>, vector<1x1x4x64xf32>
    %160 = vector.shape_cast %159 : vector<1x1x4x64xf32> to vector<4x64xf32>
    %c3_240 = arith.constant 3 : index
    %c3_241 = arith.constant 3 : index
    %c1_242 = arith.constant 1 : index
    %c0_243 = arith.constant 0 : index
    %161 = vector.load %arg11[%c3_240, %c3_241, %c1_242, %c0_243] : memref<4x6x6x64xf32, #tpu.memory_space<vmem>>, vector<1x1x4x64xf32>
    %162 = vector.shape_cast %161 : vector<1x1x4x64xf32> to vector<4x64xf32>
    %c2_244 = arith.constant 2 : index
    %c3_245 = arith.constant 3 : index
    %c2_246 = arith.constant 2 : index
    %c0_247 = arith.constant 0 : index
    %163 = vector.load %arg11[%c2_244, %c3_245, %c2_246, %c0_247] : memref<4x6x6x64xf32, #tpu.memory_space<vmem>>, vector<1x1x4x64xf32>
    %164 = vector.shape_cast %163 : vector<1x1x4x64xf32> to vector<4x64xf32>
    %c1_248 = arith.constant 1 : index
    %c4_249 = arith.constant 4 : index
    %c0_250 = arith.constant 0 : index
    %c0_251 = arith.constant 0 : index
    %165 = vector.load %arg11[%c1_248, %c4_249, %c0_250, %c0_251] : memref<4x6x6x64xf32, #tpu.memory_space<vmem>>, vector<1x1x4x64xf32>
    %166 = vector.shape_cast %165 : vector<1x1x4x64xf32> to vector<4x64xf32>
    %c0_252 = arith.constant 0 : index
    %c4_253 = arith.constant 4 : index
    %c1_254 = arith.constant 1 : index
    %c0_255 = arith.constant 0 : index
    %167 = vector.load %arg11[%c0_252, %c4_253, %c1_254, %c0_255] : memref<4x6x6x64xf32, #tpu.memory_space<vmem>>, vector<1x1x4x64xf32>
    %168 = vector.shape_cast %167 : vector<1x1x4x64xf32> to vector<4x64xf32>
    %c1_256 = arith.constant 1 : index
    %c4_257 = arith.constant 4 : index
    %c1_258 = arith.constant 1 : index
    %c0_259 = arith.constant 0 : index
    %169 = vector.load %arg11[%c1_256, %c4_257, %c1_258, %c0_259] : memref<4x6x6x64xf32, #tpu.memory_space<vmem>>, vector<1x1x4x64xf32>
    %170 = vector.shape_cast %169 : vector<1x1x4x64xf32> to vector<4x64xf32>
    %c0_260 = arith.constant 0 : index
    %c4_261 = arith.constant 4 : index
    %c2_262 = arith.constant 2 : index
    %c0_263 = arith.constant 0 : index
    %171 = vector.load %arg11[%c0_260, %c4_261, %c2_262, %c0_263] : memref<4x6x6x64xf32, #tpu.memory_space<vmem>>, vector<1x1x4x64xf32>
    %172 = vector.shape_cast %171 : vector<1x1x4x64xf32> to vector<4x64xf32>
    %173 = tpu.concatenate %142, %144, %146, %148, %150, %152, %154, %156, %158, %160, %162, %164, %166, %168, %170, %172 in 1 : vector<4x64xf32>, vector<4x64xf32>, vector<4x64xf32>, vector<4x64xf32>, vector<4x64xf32>, vector<4x64xf32>, vector<4x64xf32>, vector<4x64xf32>, vector<4x64xf32>, vector<4x64xf32>, vector<4x64xf32>, vector<4x64xf32>, vector<4x64xf32>, vector<4x64xf32>, vector<4x64xf32>, vector<4x64xf32> -> vector<4x1024xf32>
    %c3_264 = arith.constant 3 : index
    %c3_265 = arith.constant 3 : index
    %c0_266 = arith.constant 0 : index
    %c0_267 = arith.constant 0 : index
    %174 = vector.load %arg11[%c3_264, %c3_265, %c0_266, %c0_267] : memref<4x6x6x64xf32, #tpu.memory_space<vmem>>, vector<1x1x4x64xf32>
    %175 = vector.shape_cast %174 : vector<1x1x4x64xf32> to vector<4x64xf32>
    %c2_268 = arith.constant 2 : index
    %c3_269 = arith.constant 3 : index
    %c1_270 = arith.constant 1 : index
    %c0_271 = arith.constant 0 : index
    %176 = vector.load %arg11[%c2_268, %c3_269, %c1_270, %c0_271] : memref<4x6x6x64xf32, #tpu.memory_space<vmem>>, vector<1x1x4x64xf32>
    %177 = vector.shape_cast %176 : vector<1x1x4x64xf32> to vector<4x64xf32>
    %c3_272 = arith.constant 3 : index
    %c3_273 = arith.constant 3 : index
    %c1_274 = arith.constant 1 : index
    %c0_275 = arith.constant 0 : index
    %178 = vector.load %arg11[%c3_272, %c3_273, %c1_274, %c0_275] : memref<4x6x6x64xf32, #tpu.memory_space<vmem>>, vector<1x1x4x64xf32>
    %179 = vector.shape_cast %178 : vector<1x1x4x64xf32> to vector<4x64xf32>
    %c2_276 = arith.constant 2 : index
    %c3_277 = arith.constant 3 : index
    %c2_278 = arith.constant 2 : index
    %c0_279 = arith.constant 0 : index
    %180 = vector.load %arg11[%c2_276, %c3_277, %c2_278, %c0_279] : memref<4x6x6x64xf32, #tpu.memory_space<vmem>>, vector<1x1x4x64xf32>
    %181 = vector.shape_cast %180 : vector<1x1x4x64xf32> to vector<4x64xf32>
    %c1_280 = arith.constant 1 : index
    %c4_281 = arith.constant 4 : index
    %c0_282 = arith.constant 0 : index
    %c0_283 = arith.constant 0 : index
    %182 = vector.load %arg11[%c1_280, %c4_281, %c0_282, %c0_283] : memref<4x6x6x64xf32, #tpu.memory_space<vmem>>, vector<1x1x4x64xf32>
    %183 = vector.shape_cast %182 : vector<1x1x4x64xf32> to vector<4x64xf32>
    %c0_284 = arith.constant 0 : index
    %c4_285 = arith.constant 4 : index
    %c1_286 = arith.constant 1 : index
    %c0_287 = arith.constant 0 : index
    %184 = vector.load %arg11[%c0_284, %c4_285, %c1_286, %c0_287] : memref<4x6x6x64xf32, #tpu.memory_space<vmem>>, vector<1x1x4x64xf32>
    %185 = vector.shape_cast %184 : vector<1x1x4x64xf32> to vector<4x64xf32>
    %c1_288 = arith.constant 1 : index
    %c4_289 = arith.constant 4 : index
    %c1_290 = arith.constant 1 : index
    %c0_291 = arith.constant 0 : index
    %186 = vector.load %arg11[%c1_288, %c4_289, %c1_290, %c0_291] : memref<4x6x6x64xf32, #tpu.memory_space<vmem>>, vector<1x1x4x64xf32>
    %187 = vector.shape_cast %186 : vector<1x1x4x64xf32> to vector<4x64xf32>
    %c0_292 = arith.constant 0 : index
    %c4_293 = arith.constant 4 : index
    %c2_294 = arith.constant 2 : index
    %c0_295 = arith.constant 0 : index
    %188 = vector.load %arg11[%c0_292, %c4_293, %c2_294, %c0_295] : memref<4x6x6x64xf32, #tpu.memory_space<vmem>>, vector<1x1x4x64xf32>
    %189 = vector.shape_cast %188 : vector<1x1x4x64xf32> to vector<4x64xf32>
    %c3_296 = arith.constant 3 : index
    %c4_297 = arith.constant 4 : index
    %c0_298 = arith.constant 0 : index
    %c0_299 = arith.constant 0 : index
    %190 = vector.load %arg11[%c3_296, %c4_297, %c0_298, %c0_299] : memref<4x6x6x64xf32, #tpu.memory_space<vmem>>, vector<1x1x4x64xf32>
    %191 = vector.shape_cast %190 : vector<1x1x4x64xf32> to vector<4x64xf32>
    %c2_300 = arith.constant 2 : index
    %c4_301 = arith.constant 4 : index
    %c1_302 = arith.constant 1 : index
    %c0_303 = arith.constant 0 : index
    %192 = vector.load %arg11[%c2_300, %c4_301, %c1_302, %c0_303] : memref<4x6x6x64xf32, #tpu.memory_space<vmem>>, vector<1x1x4x64xf32>
    %193 = vector.shape_cast %192 : vector<1x1x4x64xf32> to vector<4x64xf32>
    %c3_304 = arith.constant 3 : index
    %c4_305 = arith.constant 4 : index
    %c1_306 = arith.constant 1 : index
    %c0_307 = arith.constant 0 : index
    %194 = vector.load %arg11[%c3_304, %c4_305, %c1_306, %c0_307] : memref<4x6x6x64xf32, #tpu.memory_space<vmem>>, vector<1x1x4x64xf32>
    %195 = vector.shape_cast %194 : vector<1x1x4x64xf32> to vector<4x64xf32>
    %c2_308 = arith.constant 2 : index
    %c4_309 = arith.constant 4 : index
    %c2_310 = arith.constant 2 : index
    %c0_311 = arith.constant 0 : index
    %196 = vector.load %arg11[%c2_308, %c4_309, %c2_310, %c0_311] : memref<4x6x6x64xf32, #tpu.memory_space<vmem>>, vector<1x1x4x64xf32>
    %197 = vector.shape_cast %196 : vector<1x1x4x64xf32> to vector<4x64xf32>
    %c1_312 = arith.constant 1 : index
    %c5 = arith.constant 5 : index
    %c0_313 = arith.constant 0 : index
    %c0_314 = arith.constant 0 : index
    %198 = vector.load %arg11[%c1_312, %c5, %c0_313, %c0_314] : memref<4x6x6x64xf32, #tpu.memory_space<vmem>>, vector<1x1x4x64xf32>
    %199 = vector.shape_cast %198 : vector<1x1x4x64xf32> to vector<4x64xf32>
    %c0_315 = arith.constant 0 : index
    %c5_316 = arith.constant 5 : index
    %c1_317 = arith.constant 1 : index
    %c0_318 = arith.constant 0 : index
    %200 = vector.load %arg11[%c0_315, %c5_316, %c1_317, %c0_318] : memref<4x6x6x64xf32, #tpu.memory_space<vmem>>, vector<1x1x4x64xf32>
    %201 = vector.shape_cast %200 : vector<1x1x4x64xf32> to vector<4x64xf32>
    %c1_319 = arith.constant 1 : index
    %c5_320 = arith.constant 5 : index
    %c1_321 = arith.constant 1 : index
    %c0_322 = arith.constant 0 : index
    %202 = vector.load %arg11[%c1_319, %c5_320, %c1_321, %c0_322] : memref<4x6x6x64xf32, #tpu.memory_space<vmem>>, vector<1x1x4x64xf32>
    %203 = vector.shape_cast %202 : vector<1x1x4x64xf32> to vector<4x64xf32>
    %c0_323 = arith.constant 0 : index
    %c5_324 = arith.constant 5 : index
    %c2_325 = arith.constant 2 : index
    %c0_326 = arith.constant 0 : index
    %204 = vector.load %arg11[%c0_323, %c5_324, %c2_325, %c0_326] : memref<4x6x6x64xf32, #tpu.memory_space<vmem>>, vector<1x1x4x64xf32>
    %205 = vector.shape_cast %204 : vector<1x1x4x64xf32> to vector<4x64xf32>
    %206 = tpu.concatenate %175, %177, %179, %181, %183, %185, %187, %189, %191, %193, %195, %197, %199, %201, %203, %205 in 1 : vector<4x64xf32>, vector<4x64xf32>, vector<4x64xf32>, vector<4x64xf32>, vector<4x64xf32>, vector<4x64xf32>, vector<4x64xf32>, vector<4x64xf32>, vector<4x64xf32>, vector<4x64xf32>, vector<4x64xf32>, vector<4x64xf32>, vector<4x64xf32>, vector<4x64xf32>, vector<4x64xf32>, vector<4x64xf32> -> vector<4x1024xf32>
    %207 = tpu.concatenate %107, %140, %173, %206 in 0 : vector<4x1024xf32>, vector<4x1024xf32>, vector<4x1024xf32>, vector<4x1024xf32> -> vector<16x1024xf32>
    %c0_327 = arith.constant 0 : index
    %c0_328 = arith.constant 0 : index
    %208 = vector.load %arg4[%c0_327, %c0_328] : memref<1024x128xf32, #tpu.memory_space<vmem>>, vector<1024x128xf32>
    %cst_329 = arith.constant dense<0.000000e+00> : vector<16x128xf32>
    %209 = tpu.matmul %207, %208, %cst_329 {dimension_numbers = #tpu.dot_dimension_numbers<[1], [0], [0], [1], [0, 0, 1, 1], [], []>} : vector<16x1024xf32>, vector<1024x128xf32>, vector<16x128xf32> -> vector<16x128xf32>
    %c0_330 = arith.constant 0 : index
    %c0_331 = arith.constant 0 : index
    %210 = vector.load %arg5[%c0_330, %c0_331] : memref<1x128xf32, #tpu.memory_space<vmem>>, vector<1x128xf32>
    %211 = vector.broadcast %210 : vector<1x128xf32> to vector<16x128xf32>
    %212 = arith.addf %209, %211 : vector<16x128xf32>
    %cst_332 = arith.constant 0.000000e+00 : f32
    %213 = vector.broadcast %cst_332 : f32 to vector<16x128xf32>
    %214 = arith.maximumf %212, %213 : vector<16x128xf32>
    %cst_333 = arith.constant 0.000000e+00 : f32
    %215 = vector.broadcast %cst_333 : f32 to vector<6x6x128xf32>
    %c0_334 = arith.constant 0 : index
    %c0_335 = arith.constant 0 : index
    %c0_336 = arith.constant 0 : index
    %216 = vector.load %arg12[%c0_334, %c0_335, %c0_336] : memref<6x6x128xf32, #tpu.memory_space<vmem>>, vector<6x6x128xf32>
    tpu.vector_store %arg12[%c0_334, %c0_335, %c0_336], %215 {strides = array<i32>} : memref<6x6x128xf32, #tpu.memory_space<vmem>>, vector<6x6x128xf32>,
    %217 = vector.extract_strided_slice %214 {offsets = [0, 0], sizes = [4, 128], strides = [1, 1]} : vector<16x128xf32> to vector<4x128xf32>
    %c1_337 = arith.constant 1 : index
    %c1_338 = arith.constant 1 : index
    %c0_339 = arith.constant 0 : index
    %218 = vector.load %arg12[%c1_337, %c1_338, %c0_339] : memref<6x6x128xf32, #tpu.memory_space<vmem>>, vector<1x4x128xf32>
    %219 = vector.shape_cast %218 : vector<1x4x128xf32> to vector<4x128xf32>
    %220 = vector.shape_cast %217 : vector<4x128xf32> to vector<1x4x128xf32>
    tpu.vector_store %arg12[%c1_337, %c1_338, %c0_339], %220 {strides = array<i32>} : memref<6x6x128xf32, #tpu.memory_space<vmem>>, vector<1x4x128xf32>,
    %221 = vector.extract_strided_slice %214 {offsets = [4, 0], sizes = [4, 128], strides = [1, 1]} : vector<16x128xf32> to vector<4x128xf32>
    %c2_340 = arith.constant 2 : index
    %c1_341 = arith.constant 1 : index
    %c0_342 = arith.constant 0 : index
    %222 = vector.load %arg12[%c2_340, %c1_341, %c0_342] : memref<6x6x128xf32, #tpu.memory_space<vmem>>, vector<1x4x128xf32>
    %223 = vector.shape_cast %222 : vector<1x4x128xf32> to vector<4x128xf32>
    %224 = vector.shape_cast %221 : vector<4x128xf32> to vector<1x4x128xf32>
    tpu.vector_store %arg12[%c2_340, %c1_341, %c0_342], %224 {strides = array<i32>} : memref<6x6x128xf32, #tpu.memory_space<vmem>>, vector<1x4x128xf32>,
    %225 = vector.extract_strided_slice %214 {offsets = [8, 0], sizes = [4, 128], strides = [1, 1]} : vector<16x128xf32> to vector<4x128xf32>
    %c3_343 = arith.constant 3 : index
    %c1_344 = arith.constant 1 : index
    %c0_345 = arith.constant 0 : index
    %226 = vector.load %arg12[%c3_343, %c1_344, %c0_345] : memref<6x6x128xf32, #tpu.memory_space<vmem>>, vector<1x4x128xf32>
    %227 = vector.shape_cast %226 : vector<1x4x128xf32> to vector<4x128xf32>
    %228 = vector.shape_cast %225 : vector<4x128xf32> to vector<1x4x128xf32>
    tpu.vector_store %arg12[%c3_343, %c1_344, %c0_345], %228 {strides = array<i32>} : memref<6x6x128xf32, #tpu.memory_space<vmem>>, vector<1x4x128xf32>,
    %229 = vector.extract_strided_slice %214 {offsets = [12, 0], sizes = [4, 128], strides = [1, 1]} : vector<16x128xf32> to vector<4x128xf32>
    %c4_346 = arith.constant 4 : index
    %c1_347 = arith.constant 1 : index
    %c0_348 = arith.constant 0 : index
    %230 = vector.load %arg12[%c4_346, %c1_347, %c0_348] : memref<6x6x128xf32, #tpu.memory_space<vmem>>, vector<1x4x128xf32>
    %231 = vector.shape_cast %230 : vector<1x4x128xf32> to vector<4x128xf32>
    %232 = vector.shape_cast %229 : vector<4x128xf32> to vector<1x4x128xf32>
    tpu.vector_store %arg12[%c4_346, %c1_347, %c0_348], %232 {strides = array<i32>} : memref<6x6x128xf32, #tpu.memory_space<vmem>>, vector<1x4x128xf32>,
    %c0_349 = arith.constant 0 : index
    %c0_350 = arith.constant 0 : index
    %c0_351 = arith.constant 0 : index
    %233 = vector.load %arg12[%c0_349, %c0_350, %c0_351] : memref<6x6x128xf32, #tpu.memory_space<vmem>>, vector<1x5x128xf32>
    %234 = vector.shape_cast %233 : vector<1x5x128xf32> to vector<5x128xf32>
    %c0_352 = arith.constant 0 : index
    %c1_353 = arith.constant 1 : index
    %c0_354 = arith.constant 0 : index
    %235 = vector.load %arg12[%c0_352, %c1_353, %c0_354] : memref<6x6x128xf32, #tpu.memory_space<vmem>>, vector<1x5x128xf32>
    %236 = vector.shape_cast %235 : vector<1x5x128xf32> to vector<5x128xf32>
    %c1_355 = arith.constant 1 : index
    %c0_356 = arith.constant 0 : index
    %c0_357 = arith.constant 0 : index
    %237 = vector.load %arg12[%c1_355, %c0_356, %c0_357] : memref<6x6x128xf32, #tpu.memory_space<vmem>>, vector<1x5x128xf32>
    %238 = vector.shape_cast %237 : vector<1x5x128xf32> to vector<5x128xf32>
    %c1_358 = arith.constant 1 : index
    %c1_359 = arith.constant 1 : index
    %c0_360 = arith.constant 0 : index
    %239 = vector.load %arg12[%c1_358, %c1_359, %c0_360] : memref<6x6x128xf32, #tpu.memory_space<vmem>>, vector<1x5x128xf32>
    %240 = vector.shape_cast %239 : vector<1x5x128xf32> to vector<5x128xf32>
    %241 = tpu.concatenate %234, %236, %238, %240 in 1 : vector<5x128xf32>, vector<5x128xf32>, vector<5x128xf32>, vector<5x128xf32> -> vector<5x512xf32>
    %c1_361 = arith.constant 1 : index
    %c0_362 = arith.constant 0 : index
    %c0_363 = arith.constant 0 : index
    %242 = vector.load %arg12[%c1_361, %c0_362, %c0_363] : memref<6x6x128xf32, #tpu.memory_space<vmem>>, vector<1x5x128xf32>
    %243 = vector.shape_cast %242 : vector<1x5x128xf32> to vector<5x128xf32>
    %c1_364 = arith.constant 1 : index
    %c1_365 = arith.constant 1 : index
    %c0_366 = arith.constant 0 : index
    %244 = vector.load %arg12[%c1_364, %c1_365, %c0_366] : memref<6x6x128xf32, #tpu.memory_space<vmem>>, vector<1x5x128xf32>
    %245 = vector.shape_cast %244 : vector<1x5x128xf32> to vector<5x128xf32>
    %c2_367 = arith.constant 2 : index
    %c0_368 = arith.constant 0 : index
    %c0_369 = arith.constant 0 : index
    %246 = vector.load %arg12[%c2_367, %c0_368, %c0_369] : memref<6x6x128xf32, #tpu.memory_space<vmem>>, vector<1x5x128xf32>
    %247 = vector.shape_cast %246 : vector<1x5x128xf32> to vector<5x128xf32>
    %c2_370 = arith.constant 2 : index
    %c1_371 = arith.constant 1 : index
    %c0_372 = arith.constant 0 : index
    %248 = vector.load %arg12[%c2_370, %c1_371, %c0_372] : memref<6x6x128xf32, #tpu.memory_space<vmem>>, vector<1x5x128xf32>
    %249 = vector.shape_cast %248 : vector<1x5x128xf32> to vector<5x128xf32>
    %250 = tpu.concatenate %243, %245, %247, %249 in 1 : vector<5x128xf32>, vector<5x128xf32>, vector<5x128xf32>, vector<5x128xf32> -> vector<5x512xf32>
    %c2_373 = arith.constant 2 : index
    %c0_374 = arith.constant 0 : index
    %c0_375 = arith.constant 0 : index
    %251 = vector.load %arg12[%c2_373, %c0_374, %c0_375] : memref<6x6x128xf32, #tpu.memory_space<vmem>>, vector<1x5x128xf32>
    %252 = vector.shape_cast %251 : vector<1x5x128xf32> to vector<5x128xf32>
    %c2_376 = arith.constant 2 : index
    %c1_377 = arith.constant 1 : index
    %c0_378 = arith.constant 0 : index
    %253 = vector.load %arg12[%c2_376, %c1_377, %c0_378] : memref<6x6x128xf32, #tpu.memory_space<vmem>>, vector<1x5x128xf32>
    %254 = vector.shape_cast %253 : vector<1x5x128xf32> to vector<5x128xf32>
    %c3_379 = arith.constant 3 : index
    %c0_380 = arith.constant 0 : index
    %c0_381 = arith.constant 0 : index
    %255 = vector.load %arg12[%c3_379, %c0_380, %c0_381] : memref<6x6x128xf32, #tpu.memory_space<vmem>>, vector<1x5x128xf32>
    %256 = vector.shape_cast %255 : vector<1x5x128xf32> to vector<5x128xf32>
    %c3_382 = arith.constant 3 : index
    %c1_383 = arith.constant 1 : index
    %c0_384 = arith.constant 0 : index
    %257 = vector.load %arg12[%c3_382, %c1_383, %c0_384] : memref<6x6x128xf32, #tpu.memory_space<vmem>>, vector<1x5x128xf32>
    %258 = vector.shape_cast %257 : vector<1x5x128xf32> to vector<5x128xf32>
    %259 = tpu.concatenate %252, %254, %256, %258 in 1 : vector<5x128xf32>, vector<5x128xf32>, vector<5x128xf32>, vector<5x128xf32> -> vector<5x512xf32>
    %c3_385 = arith.constant 3 : index
    %c0_386 = arith.constant 0 : index
    %c0_387 = arith.constant 0 : index
    %260 = vector.load %arg12[%c3_385, %c0_386, %c0_387] : memref<6x6x128xf32, #tpu.memory_space<vmem>>, vector<1x5x128xf32>
    %261 = vector.shape_cast %260 : vector<1x5x128xf32> to vector<5x128xf32>
    %c3_388 = arith.constant 3 : index
    %c1_389 = arith.constant 1 : index
    %c0_390 = arith.constant 0 : index
    %262 = vector.load %arg12[%c3_388, %c1_389, %c0_390] : memref<6x6x128xf32, #tpu.memory_space<vmem>>, vector<1x5x128xf32>
    %263 = vector.shape_cast %262 : vector<1x5x128xf32> to vector<5x128xf32>
    %c4_391 = arith.constant 4 : index
    %c0_392 = arith.constant 0 : index
    %c0_393 = arith.constant 0 : index
    %264 = vector.load %arg12[%c4_391, %c0_392, %c0_393] : memref<6x6x128xf32, #tpu.memory_space<vmem>>, vector<1x5x128xf32>
    %265 = vector.shape_cast %264 : vector<1x5x128xf32> to vector<5x128xf32>
    %c4_394 = arith.constant 4 : index
    %c1_395 = arith.constant 1 : index
    %c0_396 = arith.constant 0 : index
    %266 = vector.load %arg12[%c4_394, %c1_395, %c0_396] : memref<6x6x128xf32, #tpu.memory_space<vmem>>, vector<1x5x128xf32>
    %267 = vector.shape_cast %266 : vector<1x5x128xf32> to vector<5x128xf32>
    %268 = tpu.concatenate %261, %263, %265, %267 in 1 : vector<5x128xf32>, vector<5x128xf32>, vector<5x128xf32>, vector<5x128xf32> -> vector<5x512xf32>
    %c4_397 = arith.constant 4 : index
    %c0_398 = arith.constant 0 : index
    %c0_399 = arith.constant 0 : index
    %269 = vector.load %arg12[%c4_397, %c0_398, %c0_399] : memref<6x6x128xf32, #tpu.memory_space<vmem>>, vector<1x5x128xf32>
    %270 = vector.shape_cast %269 : vector<1x5x128xf32> to vector<5x128xf32>
    %c4_400 = arith.constant 4 : index
    %c1_401 = arith.constant 1 : index
    %c0_402 = arith.constant 0 : index
    %271 = vector.load %arg12[%c4_400, %c1_401, %c0_402] : memref<6x6x128xf32, #tpu.memory_space<vmem>>, vector<1x5x128xf32>
    %272 = vector.shape_cast %271 : vector<1x5x128xf32> to vector<5x128xf32>
    %c5_403 = arith.constant 5 : index
    %c0_404 = arith.constant 0 : index
    %c0_405 = arith.constant 0 : index
    %273 = vector.load %arg12[%c5_403, %c0_404, %c0_405] : memref<6x6x128xf32, #tpu.memory_space<vmem>>, vector<1x5x128xf32>
    %274 = vector.shape_cast %273 : vector<1x5x128xf32> to vector<5x128xf32>
    %c5_406 = arith.constant 5 : index
    %c1_407 = arith.constant 1 : index
    %c0_408 = arith.constant 0 : index
    %275 = vector.load %arg12[%c5_406, %c1_407, %c0_408] : memref<6x6x128xf32, #tpu.memory_space<vmem>>, vector<1x5x128xf32>
    %276 = vector.shape_cast %275 : vector<1x5x128xf32> to vector<5x128xf32>
    %277 = tpu.concatenate %270, %272, %274, %276 in 1 : vector<5x128xf32>, vector<5x128xf32>, vector<5x128xf32>, vector<5x128xf32> -> vector<5x512xf32>
    %278 = tpu.concatenate %241, %250, %259, %268, %277 in 0 : vector<5x512xf32>, vector<5x512xf32>, vector<5x512xf32>, vector<5x512xf32>, vector<5x512xf32> -> vector<25x512xf32>
    %c0_409 = arith.constant 0 : index
    %c0_410 = arith.constant 0 : index
    %279 = vector.load %arg6[%c0_409, %c0_410] : memref<512x256xf32, #tpu.memory_space<vmem>>, vector<512x256xf32>
    %cst_411 = arith.constant dense<0.000000e+00> : vector<25x256xf32>
    %280 = tpu.matmul %278, %279, %cst_411 {dimension_numbers = #tpu.dot_dimension_numbers<[1], [0], [0], [1], [0, 0, 1, 1], [], []>} : vector<25x512xf32>, vector<512x256xf32>, vector<25x256xf32> -> vector<25x256xf32>
    %c0_412 = arith.constant 0 : index
    %c0_413 = arith.constant 0 : index
    %281 = vector.load %arg7[%c0_412, %c0_413] : memref<1x256xf32, #tpu.memory_space<vmem>>, vector<1x256xf32>
    %282 = vector.broadcast %281 : vector<1x256xf32> to vector<25x256xf32>
    %283 = arith.addf %280, %282 : vector<25x256xf32>
    %cst_414 = arith.constant 0.000000e+00 : f32
    %284 = vector.broadcast %cst_414 : f32 to vector<25x256xf32>
    %285 = arith.maximumf %283, %284 : vector<25x256xf32>
    %cst_415 = arith.constant 0.000000e+00 : f32
    %286 = vector.broadcast %cst_415 : f32 to vector<4x6x6x64xf32>
    %c0_416 = arith.constant 0 : index
    %c0_417 = arith.constant 0 : index
    %c0_418 = arith.constant 0 : index
    %c0_419 = arith.constant 0 : index
    %287 = vector.load %arg13[%c0_416, %c0_417, %c0_418, %c0_419] : memref<4x6x6x64xf32, #tpu.memory_space<vmem>>, vector<4x6x6x64xf32>
    tpu.vector_store %arg13[%c0_416, %c0_417, %c0_418, %c0_419], %286 {strides = array<i32>} : memref<4x6x6x64xf32, #tpu.memory_space<vmem>>, vector<4x6x6x64xf32>,
    %288 = vector.extract_strided_slice %285 {offsets = [6, 192], sizes = [4, 64], strides = [1, 1]} : vector<25x256xf32> to vector<4x64xf32>
    %c0_420 = arith.constant 0 : index
    %c1_421 = arith.constant 1 : index
    %c1_422 = arith.constant 1 : index
    %c0_423 = arith.constant 0 : index
    %289 = vector.load %arg13[%c0_420, %c1_421, %c1_422, %c0_423] : memref<4x6x6x64xf32, #tpu.memory_space<vmem>>, vector<1x1x4x64xf32>
    %290 = vector.shape_cast %289 : vector<1x1x4x64xf32> to vector<4x64xf32>
    %291 = vector.shape_cast %288 : vector<4x64xf32> to vector<1x1x4x64xf32>
    tpu.vector_store %arg13[%c0_420, %c1_421, %c1_422, %c0_423], %291 {strides = array<i32>} : memref<4x6x6x64xf32, #tpu.memory_space<vmem>>, vector<1x1x4x64xf32>,
    %292 = vector.extract_strided_slice %285 {offsets = [11, 192], sizes = [4, 64], strides = [1, 1]} : vector<25x256xf32> to vector<4x64xf32>
    %c0_424 = arith.constant 0 : index
    %c2_425 = arith.constant 2 : index
    %c1_426 = arith.constant 1 : index
    %c0_427 = arith.constant 0 : index
    %293 = vector.load %arg13[%c0_424, %c2_425, %c1_426, %c0_427] : memref<4x6x6x64xf32, #tpu.memory_space<vmem>>, vector<1x1x4x64xf32>
    %294 = vector.shape_cast %293 : vector<1x1x4x64xf32> to vector<4x64xf32>
    %295 = vector.shape_cast %292 : vector<4x64xf32> to vector<1x1x4x64xf32>
    tpu.vector_store %arg13[%c0_424, %c2_425, %c1_426, %c0_427], %295 {strides = array<i32>} : memref<4x6x6x64xf32, #tpu.memory_space<vmem>>, vector<1x1x4x64xf32>,
    %296 = vector.extract_strided_slice %285 {offsets = [16, 192], sizes = [4, 64], strides = [1, 1]} : vector<25x256xf32> to vector<4x64xf32>
    %c0_428 = arith.constant 0 : index
    %c3_429 = arith.constant 3 : index
    %c1_430 = arith.constant 1 : index
    %c0_431 = arith.constant 0 : index
    %297 = vector.load %arg13[%c0_428, %c3_429, %c1_430, %c0_431] : memref<4x6x6x64xf32, #tpu.memory_space<vmem>>, vector<1x1x4x64xf32>
    %298 = vector.shape_cast %297 : vector<1x1x4x64xf32> to vector<4x64xf32>
    %299 = vector.shape_cast %296 : vector<4x64xf32> to vector<1x1x4x64xf32>
    tpu.vector_store %arg13[%c0_428, %c3_429, %c1_430, %c0_431], %299 {strides = array<i32>} : memref<4x6x6x64xf32, #tpu.memory_space<vmem>>, vector<1x1x4x64xf32>,
    %300 = vector.extract_strided_slice %285 {offsets = [21, 192], sizes = [4, 64], strides = [1, 1]} : vector<25x256xf32> to vector<4x64xf32>
    %c0_432 = arith.constant 0 : index
    %c4_433 = arith.constant 4 : index
    %c1_434 = arith.constant 1 : index
    %c0_435 = arith.constant 0 : index
    %301 = vector.load %arg13[%c0_432, %c4_433, %c1_434, %c0_435] : memref<4x6x6x64xf32, #tpu.memory_space<vmem>>, vector<1x1x4x64xf32>
    %302 = vector.shape_cast %301 : vector<1x1x4x64xf32> to vector<4x64xf32>
    %303 = vector.shape_cast %300 : vector<4x64xf32> to vector<1x1x4x64xf32>
    tpu.vector_store %arg13[%c0_432, %c4_433, %c1_434, %c0_435], %303 {strides = array<i32>} : memref<4x6x6x64xf32, #tpu.memory_space<vmem>>, vector<1x1x4x64xf32>,
    %304 = vector.extract_strided_slice %285 {offsets = [5, 128], sizes = [4, 64], strides = [1, 1]} : vector<25x256xf32> to vector<4x64xf32>
    %c1_436 = arith.constant 1 : index
    %c1_437 = arith.constant 1 : index
    %c0_438 = arith.constant 0 : index
    %c0_439 = arith.constant 0 : index
    %305 = vector.load %arg13[%c1_436, %c1_437, %c0_438, %c0_439] : memref<4x6x6x64xf32, #tpu.memory_space<vmem>>, vector<1x1x4x64xf32>
    %306 = vector.shape_cast %305 : vector<1x1x4x64xf32> to vector<4x64xf32>
    %307 = vector.shape_cast %304 : vector<4x64xf32> to vector<1x1x4x64xf32>
    tpu.vector_store %arg13[%c1_436, %c1_437, %c0_438, %c0_439], %307 {strides = array<i32>} : memref<4x6x6x64xf32, #tpu.memory_space<vmem>>, vector<1x1x4x64xf32>,
    %308 = vector.extract_strided_slice %285 {offsets = [10, 128], sizes = [4, 64], strides = [1, 1]} : vector<25x256xf32> to vector<4x64xf32>
    %c1_440 = arith.constant 1 : index
    %c2_441 = arith.constant 2 : index
    %c0_442 = arith.constant 0 : index
    %c0_443 = arith.constant 0 : index
    %309 = vector.load %arg13[%c1_440, %c2_441, %c0_442, %c0_443] : memref<4x6x6x64xf32, #tpu.memory_space<vmem>>, vector<1x1x4x64xf32>
    %310 = vector.shape_cast %309 : vector<1x1x4x64xf32> to vector<4x64xf32>
    %311 = vector.shape_cast %308 : vector<4x64xf32> to vector<1x1x4x64xf32>
    tpu.vector_store %arg13[%c1_440, %c2_441, %c0_442, %c0_443], %311 {strides = array<i32>} : memref<4x6x6x64xf32, #tpu.memory_space<vmem>>, vector<1x1x4x64xf32>,
    %312 = vector.extract_strided_slice %285 {offsets = [15, 128], sizes = [4, 64], strides = [1, 1]} : vector<25x256xf32> to vector<4x64xf32>
    %c1_444 = arith.constant 1 : index
    %c3_445 = arith.constant 3 : index
    %c0_446 = arith.constant 0 : index
    %c0_447 = arith.constant 0 : index
    %313 = vector.load %arg13[%c1_444, %c3_445, %c0_446, %c0_447] : memref<4x6x6x64xf32, #tpu.memory_space<vmem>>, vector<1x1x4x64xf32>
    %314 = vector.shape_cast %313 : vector<1x1x4x64xf32> to vector<4x64xf32>
    %315 = vector.shape_cast %312 : vector<4x64xf32> to vector<1x1x4x64xf32>
    tpu.vector_store %arg13[%c1_444, %c3_445, %c0_446, %c0_447], %315 {strides = array<i32>} : memref<4x6x6x64xf32, #tpu.memory_space<vmem>>, vector<1x1x4x64xf32>,
    %316 = vector.extract_strided_slice %285 {offsets = [20, 128], sizes = [4, 64], strides = [1, 1]} : vector<25x256xf32> to vector<4x64xf32>
    %c1_448 = arith.constant 1 : index
    %c4_449 = arith.constant 4 : index
    %c0_450 = arith.constant 0 : index
    %c0_451 = arith.constant 0 : index
    %317 = vector.load %arg13[%c1_448, %c4_449, %c0_450, %c0_451] : memref<4x6x6x64xf32, #tpu.memory_space<vmem>>, vector<1x1x4x64xf32>
    %318 = vector.shape_cast %317 : vector<1x1x4x64xf32> to vector<4x64xf32>
    %319 = vector.shape_cast %316 : vector<4x64xf32> to vector<1x1x4x64xf32>
    tpu.vector_store %arg13[%c1_448, %c4_449, %c0_450, %c0_451], %319 {strides = array<i32>} : memref<4x6x6x64xf32, #tpu.memory_space<vmem>>, vector<1x1x4x64xf32>,
    %320 = vector.extract_strided_slice %285 {offsets = [1, 64], sizes = [4, 64], strides = [1, 1]} : vector<25x256xf32> to vector<4x64xf32>
    %c2_452 = arith.constant 2 : index
    %c0_453 = arith.constant 0 : index
    %c1_454 = arith.constant 1 : index
    %c0_455 = arith.constant 0 : index
    %321 = vector.load %arg13[%c2_452, %c0_453, %c1_454, %c0_455] : memref<4x6x6x64xf32, #tpu.memory_space<vmem>>, vector<1x1x4x64xf32>
    %322 = vector.shape_cast %321 : vector<1x1x4x64xf32> to vector<4x64xf32>
    %323 = vector.shape_cast %320 : vector<4x64xf32> to vector<1x1x4x64xf32>
    tpu.vector_store %arg13[%c2_452, %c0_453, %c1_454, %c0_455], %323 {strides = array<i32>} : memref<4x6x6x64xf32, #tpu.memory_space<vmem>>, vector<1x1x4x64xf32>,
    %324 = vector.extract_strided_slice %285 {offsets = [6, 64], sizes = [4, 64], strides = [1, 1]} : vector<25x256xf32> to vector<4x64xf32>
    %c2_456 = arith.constant 2 : index
    %c1_457 = arith.constant 1 : index
    %c1_458 = arith.constant 1 : index
    %c0_459 = arith.constant 0 : index
    %325 = vector.load %arg13[%c2_456, %c1_457, %c1_458, %c0_459] : memref<4x6x6x64xf32, #tpu.memory_space<vmem>>, vector<1x1x4x64xf32>
    %326 = vector.shape_cast %325 : vector<1x1x4x64xf32> to vector<4x64xf32>
    %327 = vector.shape_cast %324 : vector<4x64xf32> to vector<1x1x4x64xf32>
    tpu.vector_store %arg13[%c2_456, %c1_457, %c1_458, %c0_459], %327 {strides = array<i32>} : memref<4x6x6x64xf32, #tpu.memory_space<vmem>>, vector<1x1x4x64xf32>,
    %328 = vector.extract_strided_slice %285 {offsets = [11, 64], sizes = [4, 64], strides = [1, 1]} : vector<25x256xf32> to vector<4x64xf32>
    %c2_460 = arith.constant 2 : index
    %c2_461 = arith.constant 2 : index
    %c1_462 = arith.constant 1 : index
    %c0_463 = arith.constant 0 : index
    %329 = vector.load %arg13[%c2_460, %c2_461, %c1_462, %c0_463] : memref<4x6x6x64xf32, #tpu.memory_space<vmem>>, vector<1x1x4x64xf32>
    %330 = vector.shape_cast %329 : vector<1x1x4x64xf32> to vector<4x64xf32>
    %331 = vector.shape_cast %328 : vector<4x64xf32> to vector<1x1x4x64xf32>
    tpu.vector_store %arg13[%c2_460, %c2_461, %c1_462, %c0_463], %331 {strides = array<i32>} : memref<4x6x6x64xf32, #tpu.memory_space<vmem>>, vector<1x1x4x64xf32>,
    %332 = vector.extract_strided_slice %285 {offsets = [16, 64], sizes = [4, 64], strides = [1, 1]} : vector<25x256xf32> to vector<4x64xf32>
    %c2_464 = arith.constant 2 : index
    %c3_465 = arith.constant 3 : index
    %c1_466 = arith.constant 1 : index
    %c0_467 = arith.constant 0 : index
    %333 = vector.load %arg13[%c2_464, %c3_465, %c1_466, %c0_467] : memref<4x6x6x64xf32, #tpu.memory_space<vmem>>, vector<1x1x4x64xf32>
    %334 = vector.shape_cast %333 : vector<1x1x4x64xf32> to vector<4x64xf32>
    %335 = vector.shape_cast %332 : vector<4x64xf32> to vector<1x1x4x64xf32>
    tpu.vector_store %arg13[%c2_464, %c3_465, %c1_466, %c0_467], %335 {strides = array<i32>} : memref<4x6x6x64xf32, #tpu.memory_space<vmem>>, vector<1x1x4x64xf32>,
    %336 = vector.extract_strided_slice %285 {offsets = [0, 0], sizes = [4, 64], strides = [1, 1]} : vector<25x256xf32> to vector<4x64xf32>
    %c3_468 = arith.constant 3 : index
    %c0_469 = arith.constant 0 : index
    %c0_470 = arith.constant 0 : index
    %c0_471 = arith.constant 0 : index
    %337 = vector.load %arg13[%c3_468, %c0_469, %c0_470, %c0_471] : memref<4x6x6x64xf32, #tpu.memory_space<vmem>>, vector<1x1x4x64xf32>
    %338 = vector.shape_cast %337 : vector<1x1x4x64xf32> to vector<4x64xf32>
    %339 = vector.shape_cast %336 : vector<4x64xf32> to vector<1x1x4x64xf32>
    tpu.vector_store %arg13[%c3_468, %c0_469, %c0_470, %c0_471], %339 {strides = array<i32>} : memref<4x6x6x64xf32, #tpu.memory_space<vmem>>, vector<1x1x4x64xf32>,
    %340 = vector.extract_strided_slice %285 {offsets = [5, 0], sizes = [4, 64], strides = [1, 1]} : vector<25x256xf32> to vector<4x64xf32>
    %c3_472 = arith.constant 3 : index
    %c1_473 = arith.constant 1 : index
    %c0_474 = arith.constant 0 : index
    %c0_475 = arith.constant 0 : index
    %341 = vector.load %arg13[%c3_472, %c1_473, %c0_474, %c0_475] : memref<4x6x6x64xf32, #tpu.memory_space<vmem>>, vector<1x1x4x64xf32>
    %342 = vector.shape_cast %341 : vector<1x1x4x64xf32> to vector<4x64xf32>
    %343 = vector.shape_cast %340 : vector<4x64xf32> to vector<1x1x4x64xf32>
    tpu.vector_store %arg13[%c3_472, %c1_473, %c0_474, %c0_475], %343 {strides = array<i32>} : memref<4x6x6x64xf32, #tpu.memory_space<vmem>>, vector<1x1x4x64xf32>,
    %344 = vector.extract_strided_slice %285 {offsets = [10, 0], sizes = [4, 64], strides = [1, 1]} : vector<25x256xf32> to vector<4x64xf32>
    %c3_476 = arith.constant 3 : index
    %c2_477 = arith.constant 2 : index
    %c0_478 = arith.constant 0 : index
    %c0_479 = arith.constant 0 : index
    %345 = vector.load %arg13[%c3_476, %c2_477, %c0_478, %c0_479] : memref<4x6x6x64xf32, #tpu.memory_space<vmem>>, vector<1x1x4x64xf32>
    %346 = vector.shape_cast %345 : vector<1x1x4x64xf32> to vector<4x64xf32>
    %347 = vector.shape_cast %344 : vector<4x64xf32> to vector<1x1x4x64xf32>
    tpu.vector_store %arg13[%c3_476, %c2_477, %c0_478, %c0_479], %347 {strides = array<i32>} : memref<4x6x6x64xf32, #tpu.memory_space<vmem>>, vector<1x1x4x64xf32>,
    %348 = vector.extract_strided_slice %285 {offsets = [15, 0], sizes = [4, 64], strides = [1, 1]} : vector<25x256xf32> to vector<4x64xf32>
    %c3_480 = arith.constant 3 : index
    %c3_481 = arith.constant 3 : index
    %c0_482 = arith.constant 0 : index
    %c0_483 = arith.constant 0 : index
    %349 = vector.load %arg13[%c3_480, %c3_481, %c0_482, %c0_483] : memref<4x6x6x64xf32, #tpu.memory_space<vmem>>, vector<1x1x4x64xf32>
    %350 = vector.shape_cast %349 : vector<1x1x4x64xf32> to vector<4x64xf32>
    %351 = vector.shape_cast %348 : vector<4x64xf32> to vector<1x1x4x64xf32>
    tpu.vector_store %arg13[%c3_480, %c3_481, %c0_482, %c0_483], %351 {strides = array<i32>} : memref<4x6x6x64xf32, #tpu.memory_space<vmem>>, vector<1x1x4x64xf32>,
    %c0_484 = arith.constant 0 : index
    %c0_485 = arith.constant 0 : index
    %c0_486 = arith.constant 0 : index
    %c0_487 = arith.constant 0 : index
    %352 = vector.load %arg13[%c0_484, %c0_485, %c0_486, %c0_487] : memref<4x6x6x64xf32, #tpu.memory_space<vmem>>, vector<1x1x5x64xf32>
    %353 = vector.shape_cast %352 : vector<1x1x5x64xf32> to vector<5x64xf32>
    %c1_488 = arith.constant 1 : index
    %c0_489 = arith.constant 0 : index
    %c0_490 = arith.constant 0 : index
    %c0_491 = arith.constant 0 : index
    %354 = vector.load %arg13[%c1_488, %c0_489, %c0_490, %c0_491] : memref<4x6x6x64xf32, #tpu.memory_space<vmem>>, vector<1x1x5x64xf32>
    %355 = vector.shape_cast %354 : vector<1x1x5x64xf32> to vector<5x64xf32>
    %c2_492 = arith.constant 2 : index
    %c0_493 = arith.constant 0 : index
    %c0_494 = arith.constant 0 : index
    %c0_495 = arith.constant 0 : index
    %356 = vector.load %arg13[%c2_492, %c0_493, %c0_494, %c0_495] : memref<4x6x6x64xf32, #tpu.memory_space<vmem>>, vector<1x1x5x64xf32>
    %357 = vector.shape_cast %356 : vector<1x1x5x64xf32> to vector<5x64xf32>
    %c3_496 = arith.constant 3 : index
    %c0_497 = arith.constant 0 : index
    %c0_498 = arith.constant 0 : index
    %c0_499 = arith.constant 0 : index
    %358 = vector.load %arg13[%c3_496, %c0_497, %c0_498, %c0_499] : memref<4x6x6x64xf32, #tpu.memory_space<vmem>>, vector<1x1x5x64xf32>
    %359 = vector.shape_cast %358 : vector<1x1x5x64xf32> to vector<5x64xf32>
    %360 = tpu.concatenate %353, %355, %357, %359 in 1 : vector<5x64xf32>, vector<5x64xf32>, vector<5x64xf32>, vector<5x64xf32> -> vector<5x256xf32>
    %c0_500 = arith.constant 0 : index
    %c1_501 = arith.constant 1 : index
    %c0_502 = arith.constant 0 : index
    %c0_503 = arith.constant 0 : index
    %361 = vector.load %arg13[%c0_500, %c1_501, %c0_502, %c0_503] : memref<4x6x6x64xf32, #tpu.memory_space<vmem>>, vector<1x1x5x64xf32>
    %362 = vector.shape_cast %361 : vector<1x1x5x64xf32> to vector<5x64xf32>
    %c1_504 = arith.constant 1 : index
    %c1_505 = arith.constant 1 : index
    %c0_506 = arith.constant 0 : index
    %c0_507 = arith.constant 0 : index
    %363 = vector.load %arg13[%c1_504, %c1_505, %c0_506, %c0_507] : memref<4x6x6x64xf32, #tpu.memory_space<vmem>>, vector<1x1x5x64xf32>
    %364 = vector.shape_cast %363 : vector<1x1x5x64xf32> to vector<5x64xf32>
    %c2_508 = arith.constant 2 : index
    %c1_509 = arith.constant 1 : index
    %c0_510 = arith.constant 0 : index
    %c0_511 = arith.constant 0 : index
    %365 = vector.load %arg13[%c2_508, %c1_509, %c0_510, %c0_511] : memref<4x6x6x64xf32, #tpu.memory_space<vmem>>, vector<1x1x5x64xf32>
    %366 = vector.shape_cast %365 : vector<1x1x5x64xf32> to vector<5x64xf32>
    %c3_512 = arith.constant 3 : index
    %c1_513 = arith.constant 1 : index
    %c0_514 = arith.constant 0 : index
    %c0_515 = arith.constant 0 : index
    %367 = vector.load %arg13[%c3_512, %c1_513, %c0_514, %c0_515] : memref<4x6x6x64xf32, #tpu.memory_space<vmem>>, vector<1x1x5x64xf32>
    %368 = vector.shape_cast %367 : vector<1x1x5x64xf32> to vector<5x64xf32>
    %369 = tpu.concatenate %362, %364, %366, %368 in 1 : vector<5x64xf32>, vector<5x64xf32>, vector<5x64xf32>, vector<5x64xf32> -> vector<5x256xf32>
    %c0_516 = arith.constant 0 : index
    %c2_517 = arith.constant 2 : index
    %c0_518 = arith.constant 0 : index
    %c0_519 = arith.constant 0 : index
    %370 = vector.load %arg13[%c0_516, %c2_517, %c0_518, %c0_519] : memref<4x6x6x64xf32, #tpu.memory_space<vmem>>, vector<1x1x5x64xf32>
    %371 = vector.shape_cast %370 : vector<1x1x5x64xf32> to vector<5x64xf32>
    %c1_520 = arith.constant 1 : index
    %c2_521 = arith.constant 2 : index
    %c0_522 = arith.constant 0 : index
    %c0_523 = arith.constant 0 : index
    %372 = vector.load %arg13[%c1_520, %c2_521, %c0_522, %c0_523] : memref<4x6x6x64xf32, #tpu.memory_space<vmem>>, vector<1x1x5x64xf32>
    %373 = vector.shape_cast %372 : vector<1x1x5x64xf32> to vector<5x64xf32>
    %c2_524 = arith.constant 2 : index
    %c2_525 = arith.constant 2 : index
    %c0_526 = arith.constant 0 : index
    %c0_527 = arith.constant 0 : index
    %374 = vector.load %arg13[%c2_524, %c2_525, %c0_526, %c0_527] : memref<4x6x6x64xf32, #tpu.memory_space<vmem>>, vector<1x1x5x64xf32>
    %375 = vector.shape_cast %374 : vector<1x1x5x64xf32> to vector<5x64xf32>
    %c3_528 = arith.constant 3 : index
    %c2_529 = arith.constant 2 : index
    %c0_530 = arith.constant 0 : index
    %c0_531 = arith.constant 0 : index
    %376 = vector.load %arg13[%c3_528, %c2_529, %c0_530, %c0_531] : memref<4x6x6x64xf32, #tpu.memory_space<vmem>>, vector<1x1x5x64xf32>
    %377 = vector.shape_cast %376 : vector<1x1x5x64xf32> to vector<5x64xf32>
    %378 = tpu.concatenate %371, %373, %375, %377 in 1 : vector<5x64xf32>, vector<5x64xf32>, vector<5x64xf32>, vector<5x64xf32> -> vector<5x256xf32>
    %c0_532 = arith.constant 0 : index
    %c3_533 = arith.constant 3 : index
    %c0_534 = arith.constant 0 : index
    %c0_535 = arith.constant 0 : index
    %379 = vector.load %arg13[%c0_532, %c3_533, %c0_534, %c0_535] : memref<4x6x6x64xf32, #tpu.memory_space<vmem>>, vector<1x1x5x64xf32>
    %380 = vector.shape_cast %379 : vector<1x1x5x64xf32> to vector<5x64xf32>
    %c1_536 = arith.constant 1 : index
    %c3_537 = arith.constant 3 : index
    %c0_538 = arith.constant 0 : index
    %c0_539 = arith.constant 0 : index
    %381 = vector.load %arg13[%c1_536, %c3_537, %c0_538, %c0_539] : memref<4x6x6x64xf32, #tpu.memory_space<vmem>>, vector<1x1x5x64xf32>
    %382 = vector.shape_cast %381 : vector<1x1x5x64xf32> to vector<5x64xf32>
    %c2_540 = arith.constant 2 : index
    %c3_541 = arith.constant 3 : index
    %c0_542 = arith.constant 0 : index
    %c0_543 = arith.constant 0 : index
    %383 = vector.load %arg13[%c2_540, %c3_541, %c0_542, %c0_543] : memref<4x6x6x64xf32, #tpu.memory_space<vmem>>, vector<1x1x5x64xf32>
    %384 = vector.shape_cast %383 : vector<1x1x5x64xf32> to vector<5x64xf32>
    %c3_544 = arith.constant 3 : index
    %c3_545 = arith.constant 3 : index
    %c0_546 = arith.constant 0 : index
    %c0_547 = arith.constant 0 : index
    %385 = vector.load %arg13[%c3_544, %c3_545, %c0_546, %c0_547] : memref<4x6x6x64xf32, #tpu.memory_space<vmem>>, vector<1x1x5x64xf32>
    %386 = vector.shape_cast %385 : vector<1x1x5x64xf32> to vector<5x64xf32>
    %387 = tpu.concatenate %380, %382, %384, %386 in 1 : vector<5x64xf32>, vector<5x64xf32>, vector<5x64xf32>, vector<5x64xf32> -> vector<5x256xf32>
    %c0_548 = arith.constant 0 : index
    %c4_549 = arith.constant 4 : index
    %c0_550 = arith.constant 0 : index
    %c0_551 = arith.constant 0 : index
    %388 = vector.load %arg13[%c0_548, %c4_549, %c0_550, %c0_551] : memref<4x6x6x64xf32, #tpu.memory_space<vmem>>, vector<1x1x5x64xf32>
    %389 = vector.shape_cast %388 : vector<1x1x5x64xf32> to vector<5x64xf32>
    %c1_552 = arith.constant 1 : index
    %c4_553 = arith.constant 4 : index
    %c0_554 = arith.constant 0 : index
    %c0_555 = arith.constant 0 : index
    %390 = vector.load %arg13[%c1_552, %c4_553, %c0_554, %c0_555] : memref<4x6x6x64xf32, #tpu.memory_space<vmem>>, vector<1x1x5x64xf32>
    %391 = vector.shape_cast %390 : vector<1x1x5x64xf32> to vector<5x64xf32>
    %c2_556 = arith.constant 2 : index
    %c4_557 = arith.constant 4 : index
    %c0_558 = arith.constant 0 : index
    %c0_559 = arith.constant 0 : index
    %392 = vector.load %arg13[%c2_556, %c4_557, %c0_558, %c0_559] : memref<4x6x6x64xf32, #tpu.memory_space<vmem>>, vector<1x1x5x64xf32>
    %393 = vector.shape_cast %392 : vector<1x1x5x64xf32> to vector<5x64xf32>
    %c3_560 = arith.constant 3 : index
    %c4_561 = arith.constant 4 : index
    %c0_562 = arith.constant 0 : index
    %c0_563 = arith.constant 0 : index
    %394 = vector.load %arg13[%c3_560, %c4_561, %c0_562, %c0_563] : memref<4x6x6x64xf32, #tpu.memory_space<vmem>>, vector<1x1x5x64xf32>
    %395 = vector.shape_cast %394 : vector<1x1x5x64xf32> to vector<5x64xf32>
    %396 = tpu.concatenate %389, %391, %393, %395 in 1 : vector<5x64xf32>, vector<5x64xf32>, vector<5x64xf32>, vector<5x64xf32> -> vector<5x256xf32>
    %c1_564 = arith.constant 1 : index
    %c0_565 = arith.constant 0 : index
    %c0_566 = arith.constant 0 : index
    %c0_567 = arith.constant 0 : index
    %397 = vector.load %arg13[%c1_564, %c0_565, %c0_566, %c0_567] : memref<4x6x6x64xf32, #tpu.memory_space<vmem>>, vector<1x1x5x64xf32>
    %398 = vector.shape_cast %397 : vector<1x1x5x64xf32> to vector<5x64xf32>
    %c0_568 = arith.constant 0 : index
    %c0_569 = arith.constant 0 : index
    %c1_570 = arith.constant 1 : index
    %c0_571 = arith.constant 0 : index
    %399 = vector.load %arg13[%c0_568, %c0_569, %c1_570, %c0_571] : memref<4x6x6x64xf32, #tpu.memory_space<vmem>>, vector<1x1x5x64xf32>
    %400 = vector.shape_cast %399 : vector<1x1x5x64xf32> to vector<5x64xf32>
    %c3_572 = arith.constant 3 : index
    %c0_573 = arith.constant 0 : index
    %c0_574 = arith.constant 0 : index
    %c0_575 = arith.constant 0 : index
    %401 = vector.load %arg13[%c3_572, %c0_573, %c0_574, %c0_575] : memref<4x6x6x64xf32, #tpu.memory_space<vmem>>, vector<1x1x5x64xf32>
    %402 = vector.shape_cast %401 : vector<1x1x5x64xf32> to vector<5x64xf32>
    %c2_576 = arith.constant 2 : index
    %c0_577 = arith.constant 0 : index
    %c1_578 = arith.constant 1 : index
    %c0_579 = arith.constant 0 : index
    %403 = vector.load %arg13[%c2_576, %c0_577, %c1_578, %c0_579] : memref<4x6x6x64xf32, #tpu.memory_space<vmem>>, vector<1x1x5x64xf32>
    %404 = vector.shape_cast %403 : vector<1x1x5x64xf32> to vector<5x64xf32>
    %405 = tpu.concatenate %398, %400, %402, %404 in 1 : vector<5x64xf32>, vector<5x64xf32>, vector<5x64xf32>, vector<5x64xf32> -> vector<5x256xf32>
    %c1_580 = arith.constant 1 : index
    %c1_581 = arith.constant 1 : index
    %c0_582 = arith.constant 0 : index
    %c0_583 = arith.constant 0 : index
    %406 = vector.load %arg13[%c1_580, %c1_581, %c0_582, %c0_583] : memref<4x6x6x64xf32, #tpu.memory_space<vmem>>, vector<1x1x5x64xf32>
    %407 = vector.shape_cast %406 : vector<1x1x5x64xf32> to vector<5x64xf32>
    %c0_584 = arith.constant 0 : index
    %c1_585 = arith.constant 1 : index
    %c1_586 = arith.constant 1 : index
    %c0_587 = arith.constant 0 : index
    %408 = vector.load %arg13[%c0_584, %c1_585, %c1_586, %c0_587] : memref<4x6x6x64xf32, #tpu.memory_space<vmem>>, vector<1x1x5x64xf32>
    %409 = vector.shape_cast %408 : vector<1x1x5x64xf32> to vector<5x64xf32>
    %c3_588 = arith.constant 3 : index
    %c1_589 = arith.constant 1 : index
    %c0_590 = arith.constant 0 : index
    %c0_591 = arith.constant 0 : index
    %410 = vector.load %arg13[%c3_588, %c1_589, %c0_590, %c0_591] : memref<4x6x6x64xf32, #tpu.memory_space<vmem>>, vector<1x1x5x64xf32>
    %411 = vector.shape_cast %410 : vector<1x1x5x64xf32> to vector<5x64xf32>
    %c2_592 = arith.constant 2 : index
    %c1_593 = arith.constant 1 : index
    %c1_594 = arith.constant 1 : index
    %c0_595 = arith.constant 0 : index
    %412 = vector.load %arg13[%c2_592, %c1_593, %c1_594, %c0_595] : memref<4x6x6x64xf32, #tpu.memory_space<vmem>>, vector<1x1x5x64xf32>
    %413 = vector.shape_cast %412 : vector<1x1x5x64xf32> to vector<5x64xf32>
    %414 = tpu.concatenate %407, %409, %411, %413 in 1 : vector<5x64xf32>, vector<5x64xf32>, vector<5x64xf32>, vector<5x64xf32> -> vector<5x256xf32>
    %c1_596 = arith.constant 1 : index
    %c2_597 = arith.constant 2 : index
    %c0_598 = arith.constant 0 : index
    %c0_599 = arith.constant 0 : index
    %415 = vector.load %arg13[%c1_596, %c2_597, %c0_598, %c0_599] : memref<4x6x6x64xf32, #tpu.memory_space<vmem>>, vector<1x1x5x64xf32>
    %416 = vector.shape_cast %415 : vector<1x1x5x64xf32> to vector<5x64xf32>
    %c0_600 = arith.constant 0 : index
    %c2_601 = arith.constant 2 : index
    %c1_602 = arith.constant 1 : index
    %c0_603 = arith.constant 0 : index
    %417 = vector.load %arg13[%c0_600, %c2_601, %c1_602, %c0_603] : memref<4x6x6x64xf32, #tpu.memory_space<vmem>>, vector<1x1x5x64xf32>
    %418 = vector.shape_cast %417 : vector<1x1x5x64xf32> to vector<5x64xf32>
    %c3_604 = arith.constant 3 : index
    %c2_605 = arith.constant 2 : index
    %c0_606 = arith.constant 0 : index
    %c0_607 = arith.constant 0 : index
    %419 = vector.load %arg13[%c3_604, %c2_605, %c0_606, %c0_607] : memref<4x6x6x64xf32, #tpu.memory_space<vmem>>, vector<1x1x5x64xf32>
    %420 = vector.shape_cast %419 : vector<1x1x5x64xf32> to vector<5x64xf32>
    %c2_608 = arith.constant 2 : index
    %c2_609 = arith.constant 2 : index
    %c1_610 = arith.constant 1 : index
    %c0_611 = arith.constant 0 : index
    %421 = vector.load %arg13[%c2_608, %c2_609, %c1_610, %c0_611] : memref<4x6x6x64xf32, #tpu.memory_space<vmem>>, vector<1x1x5x64xf32>
    %422 = vector.shape_cast %421 : vector<1x1x5x64xf32> to vector<5x64xf32>
    %423 = tpu.concatenate %416, %418, %420, %422 in 1 : vector<5x64xf32>, vector<5x64xf32>, vector<5x64xf32>, vector<5x64xf32> -> vector<5x256xf32>
    %c1_612 = arith.constant 1 : index
    %c3_613 = arith.constant 3 : index
    %c0_614 = arith.constant 0 : index
    %c0_615 = arith.constant 0 : index
    %424 = vector.load %arg13[%c1_612, %c3_613, %c0_614, %c0_615] : memref<4x6x6x64xf32, #tpu.memory_space<vmem>>, vector<1x1x5x64xf32>
    %425 = vector.shape_cast %424 : vector<1x1x5x64xf32> to vector<5x64xf32>
    %c0_616 = arith.constant 0 : index
    %c3_617 = arith.constant 3 : index
    %c1_618 = arith.constant 1 : index
    %c0_619 = arith.constant 0 : index
    %426 = vector.load %arg13[%c0_616, %c3_617, %c1_618, %c0_619] : memref<4x6x6x64xf32, #tpu.memory_space<vmem>>, vector<1x1x5x64xf32>
    %427 = vector.shape_cast %426 : vector<1x1x5x64xf32> to vector<5x64xf32>
    %c3_620 = arith.constant 3 : index
    %c3_621 = arith.constant 3 : index
    %c0_622 = arith.constant 0 : index
    %c0_623 = arith.constant 0 : index
    %428 = vector.load %arg13[%c3_620, %c3_621, %c0_622, %c0_623] : memref<4x6x6x64xf32, #tpu.memory_space<vmem>>, vector<1x1x5x64xf32>
    %429 = vector.shape_cast %428 : vector<1x1x5x64xf32> to vector<5x64xf32>
    %c2_624 = arith.constant 2 : index
    %c3_625 = arith.constant 3 : index
    %c1_626 = arith.constant 1 : index
    %c0_627 = arith.constant 0 : index
    %430 = vector.load %arg13[%c2_624, %c3_625, %c1_626, %c0_627] : memref<4x6x6x64xf32, #tpu.memory_space<vmem>>, vector<1x1x5x64xf32>
    %431 = vector.shape_cast %430 : vector<1x1x5x64xf32> to vector<5x64xf32>
    %432 = tpu.concatenate %425, %427, %429, %431 in 1 : vector<5x64xf32>, vector<5x64xf32>, vector<5x64xf32>, vector<5x64xf32> -> vector<5x256xf32>
    %c1_628 = arith.constant 1 : index
    %c4_629 = arith.constant 4 : index
    %c0_630 = arith.constant 0 : index
    %c0_631 = arith.constant 0 : index
    %433 = vector.load %arg13[%c1_628, %c4_629, %c0_630, %c0_631] : memref<4x6x6x64xf32, #tpu.memory_space<vmem>>, vector<1x1x5x64xf32>
    %434 = vector.shape_cast %433 : vector<1x1x5x64xf32> to vector<5x64xf32>
    %c0_632 = arith.constant 0 : index
    %c4_633 = arith.constant 4 : index
    %c1_634 = arith.constant 1 : index
    %c0_635 = arith.constant 0 : index
    %435 = vector.load %arg13[%c0_632, %c4_633, %c1_634, %c0_635] : memref<4x6x6x64xf32, #tpu.memory_space<vmem>>, vector<1x1x5x64xf32>
    %436 = vector.shape_cast %435 : vector<1x1x5x64xf32> to vector<5x64xf32>
    %c3_636 = arith.constant 3 : index
    %c4_637 = arith.constant 4 : index
    %c0_638 = arith.constant 0 : index
    %c0_639 = arith.constant 0 : index
    %437 = vector.load %arg13[%c3_636, %c4_637, %c0_638, %c0_639] : memref<4x6x6x64xf32, #tpu.memory_space<vmem>>, vector<1x1x5x64xf32>
    %438 = vector.shape_cast %437 : vector<1x1x5x64xf32> to vector<5x64xf32>
    %c2_640 = arith.constant 2 : index
    %c4_641 = arith.constant 4 : index
    %c1_642 = arith.constant 1 : index
    %c0_643 = arith.constant 0 : index
    %439 = vector.load %arg13[%c2_640, %c4_641, %c1_642, %c0_643] : memref<4x6x6x64xf32, #tpu.memory_space<vmem>>, vector<1x1x5x64xf32>
    %440 = vector.shape_cast %439 : vector<1x1x5x64xf32> to vector<5x64xf32>
    %441 = tpu.concatenate %434, %436, %438, %440 in 1 : vector<5x64xf32>, vector<5x64xf32>, vector<5x64xf32>, vector<5x64xf32> -> vector<5x256xf32>
    %c2_644 = arith.constant 2 : index
    %c0_645 = arith.constant 0 : index
    %c0_646 = arith.constant 0 : index
    %c0_647 = arith.constant 0 : index
    %442 = vector.load %arg13[%c2_644, %c0_645, %c0_646, %c0_647] : memref<4x6x6x64xf32, #tpu.memory_space<vmem>>, vector<1x1x5x64xf32>
    %443 = vector.shape_cast %442 : vector<1x1x5x64xf32> to vector<5x64xf32>
    %c3_648 = arith.constant 3 : index
    %c0_649 = arith.constant 0 : index
    %c0_650 = arith.constant 0 : index
    %c0_651 = arith.constant 0 : index
    %444 = vector.load %arg13[%c3_648, %c0_649, %c0_650, %c0_651] : memref<4x6x6x64xf32, #tpu.memory_space<vmem>>, vector<1x1x5x64xf32>
    %445 = vector.shape_cast %444 : vector<1x1x5x64xf32> to vector<5x64xf32>
    %c0_652 = arith.constant 0 : index
    %c1_653 = arith.constant 1 : index
    %c0_654 = arith.constant 0 : index
    %c0_655 = arith.constant 0 : index
    %446 = vector.load %arg13[%c0_652, %c1_653, %c0_654, %c0_655] : memref<4x6x6x64xf32, #tpu.memory_space<vmem>>, vector<1x1x5x64xf32>
    %447 = vector.shape_cast %446 : vector<1x1x5x64xf32> to vector<5x64xf32>
    %c1_656 = arith.constant 1 : index
    %c1_657 = arith.constant 1 : index
    %c0_658 = arith.constant 0 : index
    %c0_659 = arith.constant 0 : index
    %448 = vector.load %arg13[%c1_656, %c1_657, %c0_658, %c0_659] : memref<4x6x6x64xf32, #tpu.memory_space<vmem>>, vector<1x1x5x64xf32>
    %449 = vector.shape_cast %448 : vector<1x1x5x64xf32> to vector<5x64xf32>
    %450 = tpu.concatenate %443, %445, %447, %449 in 1 : vector<5x64xf32>, vector<5x64xf32>, vector<5x64xf32>, vector<5x64xf32> -> vector<5x256xf32>
    %c2_660 = arith.constant 2 : index
    %c1_661 = arith.constant 1 : index
    %c0_662 = arith.constant 0 : index
    %c0_663 = arith.constant 0 : index
    %451 = vector.load %arg13[%c2_660, %c1_661, %c0_662, %c0_663] : memref<4x6x6x64xf32, #tpu.memory_space<vmem>>, vector<1x1x5x64xf32>
    %452 = vector.shape_cast %451 : vector<1x1x5x64xf32> to vector<5x64xf32>
    %c3_664 = arith.constant 3 : index
    %c1_665 = arith.constant 1 : index
    %c0_666 = arith.constant 0 : index
    %c0_667 = arith.constant 0 : index
    %453 = vector.load %arg13[%c3_664, %c1_665, %c0_666, %c0_667] : memref<4x6x6x64xf32, #tpu.memory_space<vmem>>, vector<1x1x5x64xf32>
    %454 = vector.shape_cast %453 : vector<1x1x5x64xf32> to vector<5x64xf32>
    %c0_668 = arith.constant 0 : index
    %c2_669 = arith.constant 2 : index
    %c0_670 = arith.constant 0 : index
    %c0_671 = arith.constant 0 : index
    %455 = vector.load %arg13[%c0_668, %c2_669, %c0_670, %c0_671] : memref<4x6x6x64xf32, #tpu.memory_space<vmem>>, vector<1x1x5x64xf32>
    %456 = vector.shape_cast %455 : vector<1x1x5x64xf32> to vector<5x64xf32>
    %c1_672 = arith.constant 1 : index
    %c2_673 = arith.constant 2 : index
    %c0_674 = arith.constant 0 : index
    %c0_675 = arith.constant 0 : index
    %457 = vector.load %arg13[%c1_672, %c2_673, %c0_674, %c0_675] : memref<4x6x6x64xf32, #tpu.memory_space<vmem>>, vector<1x1x5x64xf32>
    %458 = vector.shape_cast %457 : vector<1x1x5x64xf32> to vector<5x64xf32>
    %459 = tpu.concatenate %452, %454, %456, %458 in 1 : vector<5x64xf32>, vector<5x64xf32>, vector<5x64xf32>, vector<5x64xf32> -> vector<5x256xf32>
    %c2_676 = arith.constant 2 : index
    %c2_677 = arith.constant 2 : index
    %c0_678 = arith.constant 0 : index
    %c0_679 = arith.constant 0 : index
    %460 = vector.load %arg13[%c2_676, %c2_677, %c0_678, %c0_679] : memref<4x6x6x64xf32, #tpu.memory_space<vmem>>, vector<1x1x5x64xf32>
    %461 = vector.shape_cast %460 : vector<1x1x5x64xf32> to vector<5x64xf32>
    %c3_680 = arith.constant 3 : index
    %c2_681 = arith.constant 2 : index
    %c0_682 = arith.constant 0 : index
    %c0_683 = arith.constant 0 : index
    %462 = vector.load %arg13[%c3_680, %c2_681, %c0_682, %c0_683] : memref<4x6x6x64xf32, #tpu.memory_space<vmem>>, vector<1x1x5x64xf32>
    %463 = vector.shape_cast %462 : vector<1x1x5x64xf32> to vector<5x64xf32>
    %c0_684 = arith.constant 0 : index
    %c3_685 = arith.constant 3 : index
    %c0_686 = arith.constant 0 : index
    %c0_687 = arith.constant 0 : index
    %464 = vector.load %arg13[%c0_684, %c3_685, %c0_686, %c0_687] : memref<4x6x6x64xf32, #tpu.memory_space<vmem>>, vector<1x1x5x64xf32>
    %465 = vector.shape_cast %464 : vector<1x1x5x64xf32> to vector<5x64xf32>
    %c1_688 = arith.constant 1 : index
    %c3_689 = arith.constant 3 : index
    %c0_690 = arith.constant 0 : index
    %c0_691 = arith.constant 0 : index
    %466 = vector.load %arg13[%c1_688, %c3_689, %c0_690, %c0_691] : memref<4x6x6x64xf32, #tpu.memory_space<vmem>>, vector<1x1x5x64xf32>
    %467 = vector.shape_cast %466 : vector<1x1x5x64xf32> to vector<5x64xf32>
    %468 = tpu.concatenate %461, %463, %465, %467 in 1 : vector<5x64xf32>, vector<5x64xf32>, vector<5x64xf32>, vector<5x64xf32> -> vector<5x256xf32>
    %c2_692 = arith.constant 2 : index
    %c3_693 = arith.constant 3 : index
    %c0_694 = arith.constant 0 : index
    %c0_695 = arith.constant 0 : index
    %469 = vector.load %arg13[%c2_692, %c3_693, %c0_694, %c0_695] : memref<4x6x6x64xf32, #tpu.memory_space<vmem>>, vector<1x1x5x64xf32>
    %470 = vector.shape_cast %469 : vector<1x1x5x64xf32> to vector<5x64xf32>
    %c3_696 = arith.constant 3 : index
    %c3_697 = arith.constant 3 : index
    %c0_698 = arith.constant 0 : index
    %c0_699 = arith.constant 0 : index
    %471 = vector.load %arg13[%c3_696, %c3_697, %c0_698, %c0_699] : memref<4x6x6x64xf32, #tpu.memory_space<vmem>>, vector<1x1x5x64xf32>
    %472 = vector.shape_cast %471 : vector<1x1x5x64xf32> to vector<5x64xf32>
    %c0_700 = arith.constant 0 : index
    %c4_701 = arith.constant 4 : index
    %c0_702 = arith.constant 0 : index
    %c0_703 = arith.constant 0 : index
    %473 = vector.load %arg13[%c0_700, %c4_701, %c0_702, %c0_703] : memref<4x6x6x64xf32, #tpu.memory_space<vmem>>, vector<1x1x5x64xf32>
    %474 = vector.shape_cast %473 : vector<1x1x5x64xf32> to vector<5x64xf32>
    %c1_704 = arith.constant 1 : index
    %c4_705 = arith.constant 4 : index
    %c0_706 = arith.constant 0 : index
    %c0_707 = arith.constant 0 : index
    %475 = vector.load %arg13[%c1_704, %c4_705, %c0_706, %c0_707] : memref<4x6x6x64xf32, #tpu.memory_space<vmem>>, vector<1x1x5x64xf32>
    %476 = vector.shape_cast %475 : vector<1x1x5x64xf32> to vector<5x64xf32>
    %477 = tpu.concatenate %470, %472, %474, %476 in 1 : vector<5x64xf32>, vector<5x64xf32>, vector<5x64xf32>, vector<5x64xf32> -> vector<5x256xf32>
    %c2_708 = arith.constant 2 : index
    %c4_709 = arith.constant 4 : index
    %c0_710 = arith.constant 0 : index
    %c0_711 = arith.constant 0 : index
    %478 = vector.load %arg13[%c2_708, %c4_709, %c0_710, %c0_711] : memref<4x6x6x64xf32, #tpu.memory_space<vmem>>, vector<1x1x5x64xf32>
    %479 = vector.shape_cast %478 : vector<1x1x5x64xf32> to vector<5x64xf32>
    %c3_712 = arith.constant 3 : index
    %c4_713 = arith.constant 4 : index
    %c0_714 = arith.constant 0 : index
    %c0_715 = arith.constant 0 : index
    %480 = vector.load %arg13[%c3_712, %c4_713, %c0_714, %c0_715] : memref<4x6x6x64xf32, #tpu.memory_space<vmem>>, vector<1x1x5x64xf32>
    %481 = vector.shape_cast %480 : vector<1x1x5x64xf32> to vector<5x64xf32>
    %c0_716 = arith.constant 0 : index
    %c5_717 = arith.constant 5 : index
    %c0_718 = arith.constant 0 : index
    %c0_719 = arith.constant 0 : index
    %482 = vector.load %arg13[%c0_716, %c5_717, %c0_718, %c0_719] : memref<4x6x6x64xf32, #tpu.memory_space<vmem>>, vector<1x1x5x64xf32>
    %483 = vector.shape_cast %482 : vector<1x1x5x64xf32> to vector<5x64xf32>
    %c1_720 = arith.constant 1 : index
    %c5_721 = arith.constant 5 : index
    %c0_722 = arith.constant 0 : index
    %c0_723 = arith.constant 0 : index
    %484 = vector.load %arg13[%c1_720, %c5_721, %c0_722, %c0_723] : memref<4x6x6x64xf32, #tpu.memory_space<vmem>>, vector<1x1x5x64xf32>
    %485 = vector.shape_cast %484 : vector<1x1x5x64xf32> to vector<5x64xf32>
    %486 = tpu.concatenate %479, %481, %483, %485 in 1 : vector<5x64xf32>, vector<5x64xf32>, vector<5x64xf32>, vector<5x64xf32> -> vector<5x256xf32>
    %c3_724 = arith.constant 3 : index
    %c0_725 = arith.constant 0 : index
    %c0_726 = arith.constant 0 : index
    %c0_727 = arith.constant 0 : index
    %487 = vector.load %arg13[%c3_724, %c0_725, %c0_726, %c0_727] : memref<4x6x6x64xf32, #tpu.memory_space<vmem>>, vector<1x1x5x64xf32>
    %488 = vector.shape_cast %487 : vector<1x1x5x64xf32> to vector<5x64xf32>
    %c2_728 = arith.constant 2 : index
    %c0_729 = arith.constant 0 : index
    %c1_730 = arith.constant 1 : index
    %c0_731 = arith.constant 0 : index
    %489 = vector.load %arg13[%c2_728, %c0_729, %c1_730, %c0_731] : memref<4x6x6x64xf32, #tpu.memory_space<vmem>>, vector<1x1x5x64xf32>
    %490 = vector.shape_cast %489 : vector<1x1x5x64xf32> to vector<5x64xf32>
    %c1_732 = arith.constant 1 : index
    %c1_733 = arith.constant 1 : index
    %c0_734 = arith.constant 0 : index
    %c0_735 = arith.constant 0 : index
    %491 = vector.load %arg13[%c1_732, %c1_733, %c0_734, %c0_735] : memref<4x6x6x64xf32, #tpu.memory_space<vmem>>, vector<1x1x5x64xf32>
    %492 = vector.shape_cast %491 : vector<1x1x5x64xf32> to vector<5x64xf32>
    %c0_736 = arith.constant 0 : index
    %c1_737 = arith.constant 1 : index
    %c1_738 = arith.constant 1 : index
    %c0_739 = arith.constant 0 : index
    %493 = vector.load %arg13[%c0_736, %c1_737, %c1_738, %c0_739] : memref<4x6x6x64xf32, #tpu.memory_space<vmem>>, vector<1x1x5x64xf32>
    %494 = vector.shape_cast %493 : vector<1x1x5x64xf32> to vector<5x64xf32>
    %495 = tpu.concatenate %488, %490, %492, %494 in 1 : vector<5x64xf32>, vector<5x64xf32>, vector<5x64xf32>, vector<5x64xf32> -> vector<5x256xf32>
    %c3_740 = arith.constant 3 : index
    %c1_741 = arith.constant 1 : index
    %c0_742 = arith.constant 0 : index
    %c0_743 = arith.constant 0 : index
    %496 = vector.load %arg13[%c3_740, %c1_741, %c0_742, %c0_743] : memref<4x6x6x64xf32, #tpu.memory_space<vmem>>, vector<1x1x5x64xf32>
    %497 = vector.shape_cast %496 : vector<1x1x5x64xf32> to vector<5x64xf32>
    %c2_744 = arith.constant 2 : index
    %c1_745 = arith.constant 1 : index
    %c1_746 = arith.constant 1 : index
    %c0_747 = arith.constant 0 : index
    %498 = vector.load %arg13[%c2_744, %c1_745, %c1_746, %c0_747] : memref<4x6x6x64xf32, #tpu.memory_space<vmem>>, vector<1x1x5x64xf32>
    %499 = vector.shape_cast %498 : vector<1x1x5x64xf32> to vector<5x64xf32>
    %c1_748 = arith.constant 1 : index
    %c2_749 = arith.constant 2 : index
    %c0_750 = arith.constant 0 : index
    %c0_751 = arith.constant 0 : index
    %500 = vector.load %arg13[%c1_748, %c2_749, %c0_750, %c0_751] : memref<4x6x6x64xf32, #tpu.memory_space<vmem>>, vector<1x1x5x64xf32>
    %501 = vector.shape_cast %500 : vector<1x1x5x64xf32> to vector<5x64xf32>
    %c0_752 = arith.constant 0 : index
    %c2_753 = arith.constant 2 : index
    %c1_754 = arith.constant 1 : index
    %c0_755 = arith.constant 0 : index
    %502 = vector.load %arg13[%c0_752, %c2_753, %c1_754, %c0_755] : memref<4x6x6x64xf32, #tpu.memory_space<vmem>>, vector<1x1x5x64xf32>
    %503 = vector.shape_cast %502 : vector<1x1x5x64xf32> to vector<5x64xf32>
    %504 = tpu.concatenate %497, %499, %501, %503 in 1 : vector<5x64xf32>, vector<5x64xf32>, vector<5x64xf32>, vector<5x64xf32> -> vector<5x256xf32>
    %c3_756 = arith.constant 3 : index
    %c2_757 = arith.constant 2 : index
    %c0_758 = arith.constant 0 : index
    %c0_759 = arith.constant 0 : index
    %505 = vector.load %arg13[%c3_756, %c2_757, %c0_758, %c0_759] : memref<4x6x6x64xf32, #tpu.memory_space<vmem>>, vector<1x1x5x64xf32>
    %506 = vector.shape_cast %505 : vector<1x1x5x64xf32> to vector<5x64xf32>
    %c2_760 = arith.constant 2 : index
    %c2_761 = arith.constant 2 : index
    %c1_762 = arith.constant 1 : index
    %c0_763 = arith.constant 0 : index
    %507 = vector.load %arg13[%c2_760, %c2_761, %c1_762, %c0_763] : memref<4x6x6x64xf32, #tpu.memory_space<vmem>>, vector<1x1x5x64xf32>
    %508 = vector.shape_cast %507 : vector<1x1x5x64xf32> to vector<5x64xf32>
    %c1_764 = arith.constant 1 : index
    %c3_765 = arith.constant 3 : index
    %c0_766 = arith.constant 0 : index
    %c0_767 = arith.constant 0 : index
    %509 = vector.load %arg13[%c1_764, %c3_765, %c0_766, %c0_767] : memref<4x6x6x64xf32, #tpu.memory_space<vmem>>, vector<1x1x5x64xf32>
    %510 = vector.shape_cast %509 : vector<1x1x5x64xf32> to vector<5x64xf32>
    %c0_768 = arith.constant 0 : index
    %c3_769 = arith.constant 3 : index
    %c1_770 = arith.constant 1 : index
    %c0_771 = arith.constant 0 : index
    %511 = vector.load %arg13[%c0_768, %c3_769, %c1_770, %c0_771] : memref<4x6x6x64xf32, #tpu.memory_space<vmem>>, vector<1x1x5x64xf32>
    %512 = vector.shape_cast %511 : vector<1x1x5x64xf32> to vector<5x64xf32>
    %513 = tpu.concatenate %506, %508, %510, %512 in 1 : vector<5x64xf32>, vector<5x64xf32>, vector<5x64xf32>, vector<5x64xf32> -> vector<5x256xf32>
    %c3_772 = arith.constant 3 : index
    %c3_773 = arith.constant 3 : index
    %c0_774 = arith.constant 0 : index
    %c0_775 = arith.constant 0 : index
    %514 = vector.load %arg13[%c3_772, %c3_773, %c0_774, %c0_775] : memref<4x6x6x64xf32, #tpu.memory_space<vmem>>, vector<1x1x5x64xf32>
    %515 = vector.shape_cast %514 : vector<1x1x5x64xf32> to vector<5x64xf32>
    %c2_776 = arith.constant 2 : index
    %c3_777 = arith.constant 3 : index
    %c1_778 = arith.constant 1 : index
    %c0_779 = arith.constant 0 : index
    %516 = vector.load %arg13[%c2_776, %c3_777, %c1_778, %c0_779] : memref<4x6x6x64xf32, #tpu.memory_space<vmem>>, vector<1x1x5x64xf32>
    %517 = vector.shape_cast %516 : vector<1x1x5x64xf32> to vector<5x64xf32>
    %c1_780 = arith.constant 1 : index
    %c4_781 = arith.constant 4 : index
    %c0_782 = arith.constant 0 : index
    %c0_783 = arith.constant 0 : index
    %518 = vector.load %arg13[%c1_780, %c4_781, %c0_782, %c0_783] : memref<4x6x6x64xf32, #tpu.memory_space<vmem>>, vector<1x1x5x64xf32>
    %519 = vector.shape_cast %518 : vector<1x1x5x64xf32> to vector<5x64xf32>
    %c0_784 = arith.constant 0 : index
    %c4_785 = arith.constant 4 : index
    %c1_786 = arith.constant 1 : index
    %c0_787 = arith.constant 0 : index
    %520 = vector.load %arg13[%c0_784, %c4_785, %c1_786, %c0_787] : memref<4x6x6x64xf32, #tpu.memory_space<vmem>>, vector<1x1x5x64xf32>
    %521 = vector.shape_cast %520 : vector<1x1x5x64xf32> to vector<5x64xf32>
    %522 = tpu.concatenate %515, %517, %519, %521 in 1 : vector<5x64xf32>, vector<5x64xf32>, vector<5x64xf32>, vector<5x64xf32> -> vector<5x256xf32>
    %c3_788 = arith.constant 3 : index
    %c4_789 = arith.constant 4 : index
    %c0_790 = arith.constant 0 : index
    %c0_791 = arith.constant 0 : index
    %523 = vector.load %arg13[%c3_788, %c4_789, %c0_790, %c0_791] : memref<4x6x6x64xf32, #tpu.memory_space<vmem>>, vector<1x1x5x64xf32>
    %524 = vector.shape_cast %523 : vector<1x1x5x64xf32> to vector<5x64xf32>
    %c2_792 = arith.constant 2 : index
    %c4_793 = arith.constant 4 : index
    %c1_794 = arith.constant 1 : index
    %c0_795 = arith.constant 0 : index
    %525 = vector.load %arg13[%c2_792, %c4_793, %c1_794, %c0_795] : memref<4x6x6x64xf32, #tpu.memory_space<vmem>>, vector<1x1x5x64xf32>
    %526 = vector.shape_cast %525 : vector<1x1x5x64xf32> to vector<5x64xf32>
    %c1_796 = arith.constant 1 : index
    %c5_797 = arith.constant 5 : index
    %c0_798 = arith.constant 0 : index
    %c0_799 = arith.constant 0 : index
    %527 = vector.load %arg13[%c1_796, %c5_797, %c0_798, %c0_799] : memref<4x6x6x64xf32, #tpu.memory_space<vmem>>, vector<1x1x5x64xf32>
    %528 = vector.shape_cast %527 : vector<1x1x5x64xf32> to vector<5x64xf32>
    %c0_800 = arith.constant 0 : index
    %c5_801 = arith.constant 5 : index
    %c1_802 = arith.constant 1 : index
    %c0_803 = arith.constant 0 : index
    %529 = vector.load %arg13[%c0_800, %c5_801, %c1_802, %c0_803] : memref<4x6x6x64xf32, #tpu.memory_space<vmem>>, vector<1x1x5x64xf32>
    %530 = vector.shape_cast %529 : vector<1x1x5x64xf32> to vector<5x64xf32>
    %531 = tpu.concatenate %524, %526, %528, %530 in 1 : vector<5x64xf32>, vector<5x64xf32>, vector<5x64xf32>, vector<5x64xf32> -> vector<5x256xf32>
    %532 = tpu.concatenate %360, %369, %378, %387, %396, %405, %414, %423, %432, %441, %450, %459, %468, %477, %486, %495 in 0 : vector<5x256xf32>, vector<5x256xf32>, vector<5x256xf32>, vector<5x256xf32>, vector<5x256xf32>, vector<5x256xf32>, vector<5x256xf32>, vector<5x256xf32>, vector<5x256xf32>, vector<5x256xf32>, vector<5x256xf32>, vector<5x256xf32>, vector<5x256xf32>, vector<5x256xf32>, vector<5x256xf32>, vector<5x256xf32> -> vector<80x256xf32>
    %533 = tpu.concatenate %504, %513, %522, %531 in 0 : vector<5x256xf32>, vector<5x256xf32>, vector<5x256xf32>, vector<5x256xf32> -> vector<20x256xf32>
    %534 = tpu.concatenate %532, %533 in 0 : vector<80x256xf32>, vector<20x256xf32> -> vector<100x256xf32>
    %c0_804 = arith.constant 0 : index
    %c0_805 = arith.constant 0 : index
    %535 = vector.load %arg8[%c0_804, %c0_805] : memref<256x12xf32, #tpu.memory_space<vmem>>, vector<256x12xf32>
    %cst_806 = arith.constant dense<0.000000e+00> : vector<100x12xf32>
    %536 = tpu.matmul %534, %535, %cst_806 {dimension_numbers = #tpu.dot_dimension_numbers<[1], [0], [0], [1], [0, 0, 1, 1], [], []>} : vector<100x256xf32>, vector<256x12xf32>, vector<100x12xf32> -> vector<100x12xf32>
    %c0_807 = arith.constant 0 : index
    %c0_808 = arith.constant 0 : index
    %537 = vector.load %arg9[%c0_807, %c0_808] : memref<1x12xf32, #tpu.memory_space<vmem>>, vector<1x12xf32>
    %538 = vector.broadcast %537 : vector<1x12xf32> to vector<100x12xf32>
    %539 = arith.addf %536, %538 : vector<100x12xf32>
    %540 = math.tanh %539 : vector<100x12xf32>
    %c0_809 = arith.constant 0 : index
    %c0_810 = arith.constant 0 : index
    %c0_811 = arith.constant 0 : index
    %541 = vector.load %arg10[%c0_809, %c0_810, %c0_811] : memref<1x100x12xf32, #tpu.memory_space<vmem>>, vector<1x100x12xf32>
    %542 = vector.shape_cast %541 : vector<1x100x12xf32> to vector<100x12xf32>
    %543 = vector.shape_cast %540 : vector<100x12xf32> to vector<1x100x12xf32>
    tpu.vector_store %arg10[%c0_809, %c0_810, %c0_811], %543 {strides = array<i32>} : memref<1x100x12xf32, #tpu.memory_space<vmem>>, vector<1x100x12xf32>,
    return
  }
  func.func @transform_0(%arg0: i32) -> (i32, i32, i32) {
    %c0_i32 = arith.constant 0 : i32
    %c0_i32_0 = arith.constant 0 : i32
    %c0_i32_1 = arith.constant 0 : i32
    return %arg0, %c0_i32, %c0_i32_0 : i32, i32, i32
  }
  func.func @transform_1(%arg0: i32) -> (i32, i32) {
    %c0_i32 = arith.constant 0 : i32
    %c0_i32_0 = arith.constant 0 : i32
    %c0_i32_1 = arith.constant 0 : i32
    return %c0_i32, %c0_i32_0 : i32, i32
  }
  func.func @transform_2(%arg0: i32) -> (i32, i32) {
    %c0_i32 = arith.constant 0 : i32
    %c0_i32_0 = arith.constant 0 : i32
    %c0_i32_1 = arith.constant 0 : i32
    return %c0_i32, %c0_i32_0 : i32, i32
  }
  func.func @transform_3(%arg0: i32) -> (i32, i32) {
    %c0_i32 = arith.constant 0 : i32
    %c0_i32_0 = arith.constant 0 : i32
    %c0_i32_1 = arith.constant 0 : i32
    return %c0_i32, %c0_i32_0 : i32, i32
  }
  func.func @transform_4(%arg0: i32) -> (i32, i32) {
    %c0_i32 = arith.constant 0 : i32
    %c0_i32_0 = arith.constant 0 : i32
    %c0_i32_1 = arith.constant 0 : i32
    return %c0_i32, %c0_i32_0 : i32, i32
  }
  func.func @transform_5(%arg0: i32) -> (i32, i32) {
    %c0_i32 = arith.constant 0 : i32
    %c0_i32_0 = arith.constant 0 : i32
    %c0_i32_1 = arith.constant 0 : i32
    return %c0_i32, %c0_i32_0 : i32, i32
  }
  func.func @transform_6(%arg0: i32) -> (i32, i32) {
    %c0_i32 = arith.constant 0 : i32
    %c0_i32_0 = arith.constant 0 : i32
    %c0_i32_1 = arith.constant 0 : i32
    return %c0_i32, %c0_i32_0 : i32, i32
  }
  func.func @transform_7(%arg0: i32) -> (i32, i32) {
    %c0_i32 = arith.constant 0 : i32
    %c0_i32_0 = arith.constant 0 : i32
    %c0_i32_1 = arith.constant 0 : i32
    return %c0_i32, %c0_i32_0 : i32, i32
  }
  func.func @transform_8(%arg0: i32) -> (i32, i32) {
    %c0_i32 = arith.constant 0 : i32
    %c0_i32_0 = arith.constant 0 : i32
    %c0_i32_1 = arith.constant 0 : i32
    return %c0_i32, %c0_i32_0 : i32, i32
  }
  func.func @transform_9(%arg0: i32) -> (i32, i32, i32) {
    %c0_i32 = arith.constant 0 : i32
    %c0_i32_0 = arith.constant 0 : i32
    %c0_i32_1 = arith.constant 0 : i32
    return %arg0, %c0_i32, %c0_i32_0 : i32, i32, i32
  }
}

</mosaic_0001>

<llo_original>
// kernel: tile.13
$region0: #{tile.13}
  #allocation0 [shape = 's32[1]{0}', space=sflag, size = 0x4, scoped, tag = 'scoped memory for tile.13']
  %s0 = inlined_call_operand.vmem [shape: f32[64], index: 0, kind: input, shape index: {}]
  %s1 = inlined_call_operand.vmem [shape: f32[4,64], index: 1, kind: output, shape index: {}]
  // Predicated region
  $region2: #{tile.13} parent=0 // pred_check
    _
  $region3: #{tile.13} parent=0 // pred_check_branch
    %3 = sbr.rel (0) target = $region5
  $region4: #{tile.13} parent=0 // pred_region
    _
  $region5: #{tile.13} parent=0 // pred_fallthru
    _
  %v4 = vld [vmem:[%s0] ss:$0 sm:$0xff]
  %5 = vst [vmem:[%s1] sm:$0xf] %v4

// kernel: tile.18
$region0: #{tile.18}
  %s0 = inlined_call_operand.vmem [shape: f32[4,64], index: 0, kind: input, shape index: {}]
  %s1 = inlined_call_operand.vmem [shape: f32[1,256], index: 1, kind: output, shape index: {}]
  $region1: #{tile.18} parent=0
    #allocation0 [shape = 'u8[8192]{0}', space=vmem, size = 0x2000, scoped, tag = 'scoped mem for output reshape']
    #allocation1 [shape = 'u8[4096]{0}', space=vmem, size = 0x1000, scoped, tag = 'scoped mem for input reshape']
    %s3 = sshll.u32 1, 4
    %s4 = ssub.s32 %s3, 1
    %v5 = vld [vmem:[%s0] sm:%s4]
    %6 = vst [vmem:[#allocation1] sm:%s4] %v5
    %s7 = smov 3
    %v8 = vld [vmem:[#allocation1] ss:$2 sm:%s7]
    %vm9 = vcmask 523264
    %10 = vst.msk [vmem:[#allocation0] ss:$8 sm:$0x3] %vm9, %v8
    %s11 = scalar_lea.vmem [#allocation1], 1
    %s12 = smov 3
    %v13 = vld [vmem:[%s11] ss:$2 sm:%s12]
    %14 = vrot.lane.b32.xlu0 %v13, 64
    %v15 = vpop.permute.xlu0 %14
    %vm16 = vcmask 1048064
    %17 = vst.msk [vmem:[#allocation0] ss:$8 sm:$0x3] %vm16, %v15
    %s19 = sshll.u32 1, 1
    %s20 = ssub.s32 %s19, 1
    %v22 = vld [vmem:[#allocation0] sm:%s20]
    %s23 = sshll.u32 1, 1
    %s24 = ssub.s32 %s23, 1
    %25 = vst [vmem:[%s1] sm:%s24] %v22
    %s26 = scalar_lea.vmem [#allocation0], 8
    %v27 = vld [vmem:[%s26] sm:%s20]
    %s28 = sshll.u32 1, 1
    %s29 = ssub.s32 %s28, 1
    %s30 = scalar_lea.vmem %s1, 1
    %31 = vst [vmem:[%s30] sm:%s29] %v27

// kernel: tile.17
$region0: #{tile.17}
  #allocation0 [shape = 's32[1]{0}', space=sflag, size = 0x4, scoped, tag = 'scoped memory for tile.17']
  %s0 = inlined_call_operand.vmem [shape: f32[3], index: 0, kind: input, shape index: {}]
  %s1 = inlined_call_operand.vmem [shape: f32[4,3], index: 1, kind: output, shape index: {}]
  // Predicated region
  $region2: #{tile.17} parent=0 // pred_check
    _
  $region3: #{tile.17} parent=0 // pred_check_branch
    %3 = sbr.rel (0) target = $region5
  $region4: #{tile.17} parent=0 // pred_region
    _
  $region5: #{tile.17} parent=0 // pred_fallthru
    _
  %v4 = vld [vmem:[%s0] ss:$0 sm:$0xff]
  %5 = vst [vmem:[%s1] sm:$0xf] %v4

// kernel: tile.19
$region0: #{tile.19}
  %s0 = inlined_call_operand.vmem [shape: f32[4,3], index: 0, kind: input, shape index: {}]
  %s1 = inlined_call_operand.vmem [shape: f32[1,12], index: 1, kind: output, shape index: {}]
  $region1: #{tile.19} parent=0
    #allocation0 [shape = 'u8[4096]{0}', space=vmem, size = 0x1000, scoped, tag = 'scoped mem for output reshape']
    #allocation1 [shape = 'u8[4096]{0}', space=vmem, size = 0x1000, scoped, tag = 'scoped mem for input reshape']
    %s3 = sshll.u32 1, 4
    %s4 = ssub.s32 %s3, 1
    %v5 = vld [vmem:[%s0] sm:%s4]
    %6 = vst [vmem:[#allocation1] sm:%s4] %v5
    %v7 = vld [vmem:[#allocation1] sm:$0x1]
    %vm8 = vcmask 23552
    %9 = vst.msk [vmem:[#allocation0] sm:$0x1] %vm8, %v7
    %s10 = scalar_lea.vmem [#allocation1], 3
    %v11 = vld [vmem:[%s10] sm:$0x1]
    %12 = vrot.lane.b32.xlu0 %v11, 9
    %v13 = vpop.permute.xlu0 %12
    %vm14 = vcmask 97352
    %15 = vst.msk [vmem:[#allocation0] sm:$0x1] %vm14, %v13
    %s16 = scalar_lea.vmem [#allocation1], 2
    %v17 = vld [vmem:[%s16] sm:$0x1]
    %18 = vrot.lane.b32.xlu0 %v17, 6
    %v19 = vpop.permute.xlu0 %18
    %vm20 = vcmask 72752
    %21 = vst.msk [vmem:[#allocation0] sm:$0x1] %vm20, %v19
    %s22 = scalar_lea.vmem [#allocation1], 1
    %v23 = vld [vmem:[%s22] sm:$0x1]
    %24 = vrot.lane.b32.xlu0 %v23, 3
    %v25 = vpop.permute.xlu0 %24
    %vm26 = vcmask 48152
    %27 = vst.msk [vmem:[#allocation0] sm:$0x1] %vm26, %v25
    %s29 = sshll.u32 1, 1
    %s30 = ssub.s32 %s29, 1
    %v32 = vld [vmem:[#allocation0] sm:%s30]
    %s33 = sshll.u32 1, 1
    %s34 = ssub.s32 %s33, 1
    %35 = vst [vmem:[%s1] sm:%s34] %v32

// kernel: cyclegan_forward.1
$region0: #{cyclegan_forward.1}
  #allocation0 [shape = 'u32[]', space=smem, size = 0x4, offset = 0x4, fixed_abs, tag = 'smem constant byte address 0x4 - core index']
  #allocation1 [shape = 'u32[144,128]{1,0:T(1,128)}', space=vmem, size = 0x12000, scoped, tag = 'internal scratch']
  #allocation2 [shape = 'f32[4,6,6,64]{3,2,1,0:T(8,128)}', space=vmem, size = 0x18000, scoped, tag = 'scratch operand']
  #allocation3 [shape = 'f32[6,6,128]{2,1,0:T(8,128)}', space=vmem, size = 0x6000, scoped, tag = 'scratch operand']
  #allocation4 [shape = 'f32[4,6,6,64]{3,2,1,0:T(8,128)}', space=vmem, size = 0x18000, scoped, tag = 'scratch operand']
  %s0 = inlined_call_operand.vmem [shape: f32[2,64,128], index: 0, kind: input, shape index: {}]
  %s1 = inlined_call_operand.vmem [shape: f32[128,64], index: 1, kind: input, shape index: {}]
  %s2 = inlined_call_operand.vmem [shape: f32[1,64], index: 2, kind: input, shape index: {}]
  %s3 = inlined_call_operand.vmem [shape: f32[1024,128], index: 3, kind: input, shape index: {}]
  %s4 = inlined_call_operand.vmem [shape: f32[1,128], index: 4, kind: input, shape index: {}]
  %s5 = inlined_call_operand.vmem [shape: f32[512,256], index: 5, kind: input, shape index: {}]
  %s6 = inlined_call_operand.vmem [shape: f32[1,256], index: 6, kind: input, shape index: {}]
  %s7 = inlined_call_operand.vmem [shape: f32[256,12], index: 7, kind: input, shape index: {}]
  %s8 = inlined_call_operand.vmem [shape: f32[1,12], index: 8, kind: input, shape index: {}]
  %s9 = inlined_call_operand.vmem [shape: f32[2,100,12], index: 9, kind: output, shape index: {}]
  %s10 = sld [smem:[#allocation0]]
  $region69: #{cyclegan_forward.1} parent=0
    _
  %s12 = ssub.s32 1, %s10
  %s13 = scalar_select 0, %s12, %s10
  loop: start=0, step=1, limit=4
  $region2: #{cyclegan_forward.1} parent=0 // loop_pre_header
    _
  $region3: #{cyclegan_forward.1} parent=0 // loop_header
    %s15 = sphi 0, %s19
    %p16 = scmp.ge.s32.totalorder %s15, 4
    %s25 = sphi 0, %s27
    %s28 = sphi 0, %s25
    %s29 = sphi 0, %s28
    %s45 = sphi 0, %s29
    %s49 = sphi 0, %s49
    %s51 = sphi 0, %s49
    %s52 = sphi 0, %s51
    %s66 = sphi 0, %s52
    %s70 = sphi 0, %s70
    %s72 = sphi 0, %s70
    %s73 = sphi 0, %s72
    %s87 = sphi 0, %s73
    %s91 = sphi 0, %s91
    %s93 = sphi 0, %s91
    %s94 = sphi 0, %s93
    %s108 = sphi 0, %s94
    %s112 = sphi 0, %s112
    %s114 = sphi 0, %s112
    %s115 = sphi 0, %s114
    %s129 = sphi 0, %s115
    %s133 = sphi 0, %s133
    %s135 = sphi 0, %s133
    %s136 = sphi 0, %s135
    %s150 = sphi 0, %s136
    %s154 = sphi 0, %s154
    %s156 = sphi 0, %s154
    %s157 = sphi 0, %s156
    %s171 = sphi 0, %s157
    %s175 = sphi 0, %s175
    %s177 = sphi 0, %s175
    %s178 = sphi 0, %s177
    %s192 = sphi 0, %s178
    %s196 = sphi 0, %s196
    %s198 = sphi 0, %s196
    %s199 = sphi 0, %s198
    %s213 = sphi 0, %s199
    %s219 = sphi 0, %s221
    %s222 = sphi 0, %s219
    %s223 = sphi 0, %s222
    %s239 = sphi 0, %s223
  $region4: #{cyclegan_forward.1} parent=0 // loop_header_branch
    %18 = sbr.rel (%p16) target = $region8
  $region5: #{cyclegan_forward.1} parent=0 // loop_body
    %s20 = ssub.s32 %s15, 1
    %s21 = ssub.s32 %s15, 2
    %s22 = sadd.s32 %s15, 1
    %s23 = ssub.s32 %s15, %s22
    %p24 = scmp.eq.s32.totalorder %s23, 0
    %s26 = sadd.s32 %s25, 1
    %s27 = scalar_select %p24, %s25, %s26
    %p30 = pneg %p24
    %p31 = scmp.eq.s32.totalorder %s15, 1
    %p32 = por %p30, %p31
    %p33 = scmp.ne.s32.totalorder %s25, %s28
    %p34 = scmp.eq.s32.totalorder %s15, 0
    %p35 = por %p33, %p34
    %p36 = scmp.ne.s32.totalorder %s25, %s28
    %p37 = scmp.eq.s32.totalorder %s20, 1
    %p38 = por %p36, %p37
    %p39 = scmp.ne.s32.totalorder %s28, %s29
    %p40 = scmp.eq.s32.totalorder %s20, 0
    %p41 = por %p39, %p40
    %p42 = scmp.ne.s32.totalorder %s28, %s29
    %p43 = scmp.eq.s32.totalorder %s21, 1
    %p44 = por %p42, %p43
    %p46 = scmp.ne.s32.totalorder %s29, %s45
    %p47 = scmp.eq.s32.totalorder %s21, 0
    %p48 = por %p46, %p47
    %s50 = sadd.s32 %s49, 1
    %p53 = scmp.eq.s32.totalorder %s15, 1
    %p54 = scmp.ne.s32.totalorder %s49, %s51
    %p55 = scmp.eq.s32.totalorder %s15, 0
    %p56 = por %p54, %p55
    %p57 = scmp.ne.s32.totalorder %s49, %s51
    %p58 = scmp.eq.s32.totalorder %s20, 1
    %p59 = por %p57, %p58
    %p60 = scmp.ne.s32.totalorder %s51, %s52
    %p61 = scmp.eq.s32.totalorder %s20, 0
    %p62 = por %p60, %p61
    %p63 = scmp.ne.s32.totalorder %s51, %s52
    %p64 = scmp.eq.s32.totalorder %s21, 1
    %p65 = por %p63, %p64
    %p67 = scmp.ne.s32.totalorder %s52, %s66
    %p68 = scmp.eq.s32.totalorder %s21, 0
    %p69 = por %p67, %p68
    %s71 = sadd.s32 %s70, 1
    %p74 = scmp.eq.s32.totalorder %s15, 1
    %p75 = scmp.ne.s32.totalorder %s70, %s72
    %p76 = scmp.eq.s32.totalorder %s15, 0
    %p77 = por %p75, %p76
    %p78 = scmp.ne.s32.totalorder %s70, %s72
    %p79 = scmp.eq.s32.totalorder %s20, 1
    %p80 = por %p78, %p79
    %p81 = scmp.ne.s32.totalorder %s72, %s73
    %p82 = scmp.eq.s32.totalorder %s20, 0
    %p83 = por %p81, %p82
    %p84 = scmp.ne.s32.totalorder %s72, %s73
    %p85 = scmp.eq.s32.totalorder %s21, 1
    %p86 = por %p84, %p85
    %p88 = scmp.ne.s32.totalorder %s73, %s87
    %p89 = scmp.eq.s32.totalorder %s21, 0
    %p90 = por %p88, %p89
    %s92 = sadd.s32 %s91, 1
    %p95 = scmp.eq.s32.totalorder %s15, 1
    %p96 = scmp.ne.s32.totalorder %s91, %s93
    %p97 = scmp.eq.s32.totalorder %s15, 0
    %p98 = por %p96, %p97
    %p99 = scmp.ne.s32.totalorder %s91, %s93
    %p100 = scmp.eq.s32.totalorder %s20, 1
    %p101 = por %p99, %p100
    %p102 = scmp.ne.s32.totalorder %s93, %s94
    %p103 = scmp.eq.s32.totalorder %s20, 0
    %p104 = por %p102, %p103
    %p105 = scmp.ne.s32.totalorder %s93, %s94
    %p106 = scmp.eq.s32.totalorder %s21, 1
    %p107 = por %p105, %p106
    %p109 = scmp.ne.s32.totalorder %s94, %s108
    %p110 = scmp.eq.s32.totalorder %s21, 0
    %p111 = por %p109, %p110
    %s113 = sadd.s32 %s112, 1
    %p116 = scmp.eq.s32.totalorder %s15, 1
    %p117 = scmp.ne.s32.totalorder %s112, %s114
    %p118 = scmp.eq.s32.totalorder %s15, 0
    %p119 = por %p117, %p118
    %p120 = scmp.ne.s32.totalorder %s112, %s114
    %p121 = scmp.eq.s32.totalorder %s20, 1
    %p122 = por %p120, %p121
    %p123 = scmp.ne.s32.totalorder %s114, %s115
    %p124 = scmp.eq.s32.totalorder %s20, 0
    %p125 = por %p123, %p124
    %p126 = scmp.ne.s32.totalorder %s114, %s115
    %p127 = scmp.eq.s32.totalorder %s21, 1
    %p128 = por %p126, %p127
    %p130 = scmp.ne.s32.totalorder %s115, %s129
    %p131 = scmp.eq.s32.totalorder %s21, 0
    %p132 = por %p130, %p131
    %s134 = sadd.s32 %s133, 1
    %p137 = scmp.eq.s32.totalorder %s15, 1
    %p138 = scmp.ne.s32.totalorder %s133, %s135
    %p139 = scmp.eq.s32.totalorder %s15, 0
    %p140 = por %p138, %p139
    %p141 = scmp.ne.s32.totalorder %s133, %s135
    %p142 = scmp.eq.s32.totalorder %s20, 1
    %p143 = por %p141, %p142
    %p144 = scmp.ne.s32.totalorder %s135, %s136
    %p145 = scmp.eq.s32.totalorder %s20, 0
    %p146 = por %p144, %p145
    %p147 = scmp.ne.s32.totalorder %s135, %s136
    %p148 = scmp.eq.s32.totalorder %s21, 1
    %p149 = por %p147, %p148
    %p151 = scmp.ne.s32.totalorder %s136, %s150
    %p152 = scmp.eq.s32.totalorder %s21, 0
    %p153 = por %p151, %p152
    %s155 = sadd.s32 %s154, 1
    %p158 = scmp.eq.s32.totalorder %s15, 1
    %p159 = scmp.ne.s32.totalorder %s154, %s156
    %p160 = scmp.eq.s32.totalorder %s15, 0
    %p161 = por %p159, %p160
    %p162 = scmp.ne.s32.totalorder %s154, %s156
    %p163 = scmp.eq.s32.totalorder %s20, 1
    %p164 = por %p162, %p163
    %p165 = scmp.ne.s32.totalorder %s156, %s157
    %p166 = scmp.eq.s32.totalorder %s20, 0
    %p167 = por %p165, %p166
    %p168 = scmp.ne.s32.totalorder %s156, %s157
    %p169 = scmp.eq.s32.totalorder %s21, 1
    %p170 = por %p168, %p169
    %p172 = scmp.ne.s32.totalorder %s157, %s171
    %p173 = scmp.eq.s32.totalorder %s21, 0
    %p174 = por %p172, %p173
    %s176 = sadd.s32 %s175, 1
    %p179 = scmp.eq.s32.totalorder %s15, 1
    %p180 = scmp.ne.s32.totalorder %s175, %s177
    %p181 = scmp.eq.s32.totalorder %s15, 0
    %p182 = por %p180, %p181
    %p183 = scmp.ne.s32.totalorder %s175, %s177
    %p184 = scmp.eq.s32.totalorder %s20, 1
    %p185 = por %p183, %p184
    %p186 = scmp.ne.s32.totalorder %s177, %s178
    %p187 = scmp.eq.s32.totalorder %s20, 0
    %p188 = por %p186, %p187
    %p189 = scmp.ne.s32.totalorder %s177, %s178
    %p190 = scmp.eq.s32.totalorder %s21, 1
    %p191 = por %p189, %p190
    %p193 = scmp.ne.s32.totalorder %s178, %s192
    %p194 = scmp.eq.s32.totalorder %s21, 0
    %p195 = por %p193, %p194
    %s197 = sadd.s32 %s196, 1
    %p200 = scmp.eq.s32.totalorder %s15, 1
    %p201 = scmp.ne.s32.totalorder %s196, %s198
    %p202 = scmp.eq.s32.totalorder %s15, 0
    %p203 = por %p201, %p202
    %p204 = scmp.ne.s32.totalorder %s196, %s198
    %p205 = scmp.eq.s32.totalorder %s20, 1
    %p206 = por %p204, %p205
    %p207 = scmp.ne.s32.totalorder %s198, %s199
    %p208 = scmp.eq.s32.totalorder %s20, 0
    %p209 = por %p207, %p208
    %p210 = scmp.ne.s32.totalorder %s198, %s199
    %p211 = scmp.eq.s32.totalorder %s21, 1
    %p212 = por %p210, %p211
    %p214 = scmp.ne.s32.totalorder %s199, %s213
    %p215 = scmp.eq.s32.totalorder %s21, 0
    %p216 = por %p214, %p215
    %s217 = ssub.s32 %s15, %s22
    %p218 = scmp.eq.s32.totalorder %s217, 0
    %s220 = sadd.s32 %s219, 1
    %s221 = scalar_select %p218, %s219, %s220
    %p224 = pneg %p218
    %p225 = scmp.eq.s32.totalorder %s15, 1
    %p226 = por %p224, %p225
    %p227 = scmp.ne.s32.totalorder %s219, %s222
    %p228 = scmp.eq.s32.totalorder %s15, 0
    %p229 = por %p227, %p228
    %p230 = scmp.ne.s32.totalorder %s219, %s222
    %p231 = scmp.eq.s32.totalorder %s20, 1
    %p232 = por %p230, %p231
    %p233 = scmp.ne.s32.totalorder %s222, %s223
    %p234 = scmp.eq.s32.totalorder %s20, 0
    %p235 = por %p233, %p234
    %p236 = scmp.ne.s32.totalorder %s222, %s223
    %p237 = scmp.eq.s32.totalorder %s21, 1
    %p238 = por %p236, %p237
    %p240 = scmp.ne.s32.totalorder %s223, %s239
    %p241 = scmp.eq.s32.totalorder %s21, 0
    %p242 = por %p240, %p241
    %p243 = scmp.le.s32.totalorder 1, %s15
    %p244 = scmp.lt.s32.totalorder %s15, 3
    %p245 = pnand %p243, %p244
    %p246 = pneg %p245
    // Predicated region
    $region9: #{cyclegan_forward.1} parent=5 // pred_check
      _
    $region10: #{cyclegan_forward.1} parent=5 // pred_check_branch
      %248 = sbr.rel (%p245) target = $region12
    $region11: #{cyclegan_forward.1} parent=5 // pred_region
      %s249 = ssub.s32 %s15, 1
      // Predicated region
      $region13: #{cyclegan_forward.1} parent=11 // pred_check
        %p250 = pneg %p62
      $region14: #{cyclegan_forward.1} parent=11 // pred_check_branch
        %252 = sbr.rel (%p250) target = $region16
      $region15: #{cyclegan_forward.1} parent=11 // pred_region
        _
      $region16: #{cyclegan_forward.1} parent=11 // pred_fallthru
        _
      // Predicated region
      $region17: #{cyclegan_forward.1} parent=11 // pred_check
        %p253 = pneg %p83
      $region18: #{cyclegan_forward.1} parent=11 // pred_check_branch
        %255 = sbr.rel (%p253) target = $region20
      $region19: #{cyclegan_forward.1} parent=11 // pred_region
        _
      $region20: #{cyclegan_forward.1} parent=11 // pred_fallthru
        _
      // Predicated region
      $region21: #{cyclegan_forward.1} parent=11 // pred_check
        %p256 = pneg %p104
      $region22: #{cyclegan_forward.1} parent=11 // pred_check_branch
        %258 = sbr.rel (%p256) target = $region24
      $region23: #{cyclegan_forward.1} parent=11 // pred_region
        _
      $region24: #{cyclegan_forward.1} parent=11 // pred_fallthru
        _
      // Predicated region
      $region25: #{cyclegan_forward.1} parent=11 // pred_check
        %p259 = pneg %p125
      $region26: #{cyclegan_forward.1} parent=11 // pred_check_branch
        %261 = sbr.rel (%p259) target = $region28
      $region27: #{cyclegan_forward.1} parent=11 // pred_region
        _
      $region28: #{cyclegan_forward.1} parent=11 // pred_fallthru
        _
      // Predicated region
      $region29: #{cyclegan_forward.1} parent=11 // pred_check
        %p262 = pneg %p146
      $region30: #{cyclegan_forward.1} parent=11 // pred_check_branch
        %264 = sbr.rel (%p262) target = $region32
      $region31: #{cyclegan_forward.1} parent=11 // pred_region
        _
      $region32: #{cyclegan_forward.1} parent=11 // pred_fallthru
        _
      // Predicated region
      $region33: #{cyclegan_forward.1} parent=11 // pred_check
        %p265 = pneg %p167
      $region34: #{cyclegan_forward.1} parent=11 // pred_check_branch
        %267 = sbr.rel (%p265) target = $region36
      $region35: #{cyclegan_forward.1} parent=11 // pred_region
        _
      $region36: #{cyclegan_forward.1} parent=11 // pred_fallthru
        _
      // Predicated region
      $region37: #{cyclegan_forward.1} parent=11 // pred_check
        %p268 = pneg %p188
      $region38: #{cyclegan_forward.1} parent=11 // pred_check_branch
        %270 = sbr.rel (%p268) target = $region40
      $region39: #{cyclegan_forward.1} parent=11 // pred_region
        _
      $region40: #{cyclegan_forward.1} parent=11 // pred_fallthru
        _
      // Predicated region
      $region41: #{cyclegan_forward.1} parent=11 // pred_check
        %p271 = pneg %p209
      $region42: #{cyclegan_forward.1} parent=11 // pred_check_branch
        %273 = sbr.rel (%p271) target = $region44
      $region43: #{cyclegan_forward.1} parent=11 // pred_region
        _
      $region44: #{cyclegan_forward.1} parent=11 // pred_fallthru
        _
    $region12: #{cyclegan_forward.1} parent=5 // pred_fallthru
      _
    %p274 = scmp.lt.s32.totalorder %s15, 2
    // Predicated region
    $region45: #{cyclegan_forward.1} parent=5 // pred_check
      %p275 = pneg %p274
    $region46: #{cyclegan_forward.1} parent=5 // pred_check_branch
      %277 = sbr.rel (%p275) target = $region48
    $region47: #{cyclegan_forward.1} parent=5 // pred_region
      // Predicated region
      $region49: #{cyclegan_forward.1} parent=47 // pred_check
        %p278 = pneg %p35
      $region50: #{cyclegan_forward.1} parent=47 // pred_check_branch
        %280 = sbr.rel (%p278) target = $region52
      $region51: #{cyclegan_forward.1} parent=47 // pred_region
        %p281 = scmp.lt.s32.totalorder %s15, 1
        %s282 = scalar_select %p281, %s15, 1
        %s283 = smul.addr %s282, 8
        %s284 = smul.addr %s283, 8
        %s285 = scalar_lea.vmem %s0, %s284
      $region52: #{cyclegan_forward.1} parent=47 // pred_fallthru
        _
    $region48: #{cyclegan_forward.1} parent=5 // pred_fallthru
      _
    %p286 = scmp.le.s32.totalorder 1, %s15
    %p287 = scmp.lt.s32.totalorder %s15, 3
    %p288 = pnand %p286, %p287
    %p289 = pneg %p288
    // Predicated region
    $region53: #{cyclegan_forward.1} parent=5 // pred_check
      _
    $region54: #{cyclegan_forward.1} parent=5 // pred_check_branch
      %291 = sbr.rel (%p288) target = $region56
    $region55: #{cyclegan_forward.1} parent=5 // pred_region
      %s292 = ssub.s32 %s15, 1
      %p293 = scmp.lt.s32.totalorder %s20, 1
      %s294 = scalar_select %p293, %s20, 1
      %s295 = smul.addr %s294, 8
      %s296 = smul.addr %s295, 8
      %s297 = scalar_lea.vmem %s0, %s296
      %p298 = pneg %p41
      %p299 = pneg %p38
      %p300 = pneg %p62
      %p301 = pneg %p59
      %p302 = pneg %p83
      %p303 = pneg %p80
      %p304 = pneg %p104
      %p305 = pneg %p101
      %p306 = pneg %p125
      %p307 = pneg %p122
      %p308 = pneg %p146
      %p309 = pneg %p143
      %p310 = pneg %p167
      %p311 = pneg %p164
      %p312 = pneg %p188
      %p313 = pneg %p185
      %p314 = pneg %p209
      %p315 = pneg %p206
      %p316 = pneg %p235
      %p317 = pneg %p232
      %p318 = scmp.lt.s32.totalorder %s20, 1
      %s319 = scalar_select %p318, %s20, 1
      %s320 = smul.addr %s319, 13
      %s321 = smul.addr %s320, 8
      %s322 = scalar_lea.vmem %s9, %s321
      %p323 = scmp.lt.s32.totalorder %s20, 1
      %s324 = scalar_select %p323, %s20, 1
      %s325 = smul.addr %s324, 8
      %s326 = smul.addr %s325, 8
      %s327 = scalar_lea.vmem %s0, %s326
      %p328 = scmp.lt.s32.totalorder %s20, 1
      %s329 = scalar_select %p328, %s20, 1
      %s330 = smul.addr %s329, 13
      %s331 = smul.addr %s330, 8
      %s332 = scalar_lea.vmem %s9, %s331
      %v333 = vld [vmem:[%s327] sm:$0xff]
      %v334 = vld [vmem:[%s327 + $0x8] sm:$0xff]
      %v335 = vld [vmem:[%s327 + $0x10] sm:$0xff]
      %v336 = vld [vmem:[%s327 + $0x18] sm:$0xff]
      %v337 = vld [vmem:[%s327 + $0x20] sm:$0xff]
      %v338 = vld [vmem:[%s327 + $0x28] sm:$0xff]
      %v339 = vld [vmem:[%s327 + $0x30] sm:$0xff]
      %v340 = vld [vmem:[%s327 + $0x38] sm:$0xff]
      %v341 = vld [vmem:[%s1] sm:$0xff]
      %v342 = vld [vmem:[%s1 + $0x8] sm:$0xff]
      %v343 = vld [vmem:[%s1 + $0x10] sm:$0xff]
      %v344 = vld [vmem:[%s1 + $0x18] sm:$0xff]
      %v345 = vld [vmem:[%s1 + $0x20] sm:$0xff]
      %v346 = vld [vmem:[%s1 + $0x28] sm:$0xff]
      %v347 = vld [vmem:[%s1 + $0x30] sm:$0xff]
      %v348 = vld [vmem:[%s1 + $0x38] sm:$0xff]
      %v349 = vld [vmem:[%s1 + $0x40] sm:$0xff]
      %v350 = vld [vmem:[%s1 + $0x48] sm:$0xff]
      %v351 = vld [vmem:[%s1 + $0x50] sm:$0xff]
      %v352 = vld [vmem:[%s1 + $0x58] sm:$0xff]
      %v353 = vld [vmem:[%s1 + $0x60] sm:$0xff]
      %v354 = vld [vmem:[%s1 + $0x68] sm:$0xff]
      %v355 = vld [vmem:[%s1 + $0x70] sm:$0xff]
      %v356 = vld [vmem:[%s1 + $0x78] sm:$0xff]
      %v357 = vld [vmem:[%s2] sm:$0x1]
      %v359 = vlaneseq
      %v360 = vshrl.u32 %v359, 7
      %v361 = vsub.s32 0, %v360
      %v362 = vrot.slane %v357, %v361
      %364 = vmatprep.subr.mxu0 0.0
      %365 = vmatpush1.msra.mxu0 %v356
      %366 = vmatprep.subr.mxu0 0.0
      %367 = vmatpush1.msra.mxu0 %v355
      %368 = vmatprep.subr.mxu0 0.0
      %369 = vmatpush1.msra.mxu0 %v354
      %370 = vmatprep.subr.mxu0 0.0
      %371 = vmatpush1.msra.mxu0 %v353
      %372 = vmatprep.subr.mxu0 0.0
      %373 = vmatpush1.msra.mxu0 %v352
      %374 = vmatprep.subr.mxu0 0.0
      %375 = vmatpush1.msra.mxu0 %v351
      %376 = vmatprep.subr.mxu0 0.0
      %377 = vmatpush1.msra.mxu0 %v350
      %378 = vmatprep.subr.mxu0 0.0
      %379 = vmatpush1.msra.mxu0 %v349
      %380 = vmatprep.subr.mxu0 0.0
      %381 = vmatpush1.msra.mxu0 %v348
      %382 = vmatprep.subr.mxu0 0.0
      %383 = vmatpush1.msra.mxu0 %v347
      %384 = vmatprep.subr.mxu0 0.0
      %385 = vmatpush1.msra.mxu0 %v346
      %386 = vmatprep.subr.mxu0 0.0
      %387 = vmatpush1.msra.mxu0 %v345
      %388 = vmatprep.subr.mxu0 0.0
      %389 = vmatpush1.msra.mxu0 %v344
      %390 = vmatprep.subr.mxu0 0.0
      %391 = vmatpush1.msra.mxu0 %v343
      %392 = vmatprep.subr.mxu0 0.0
      %393 = vmatpush1.msra.mxu0 %v342
      %394 = vmatprep.subr.mxu0 0.0
      %395 = vmatpush1.msra.mxu0 %v341
      %396 = vmatprep.subr.mxu0 0.0
      %397 = vmatpush2.msra.mxu0 0.0
      %398 = vmatprep.subr.mxu0 0.0
      %399 = vmatpush2.msra.mxu0 0.0
      %400 = vmatprep.subr.mxu0 0.0
      %401 = vmatpush2.msra.mxu0 0.0
      %402 = vmatprep.subr.mxu0 0.0
      %403 = vmatpush2.msra.mxu0 0.0
      %404 = vmatprep.subr.mxu0 0.0
      %405 = vmatpush2.msra.mxu0 0.0
      %406 = vmatprep.subr.mxu0 0.0
      %407 = vmatpush2.msra.mxu0 0.0
      %408 = vmatprep.subr.mxu0 0.0
      %409 = vmatpush2.msra.mxu0 0.0
      %410 = vmatprep.subr.mxu0 0.0
      %411 = vmatpush2.msra.mxu0 0.0
      %412 = vmatprep.subr.mxu0 0.0
      %413 = vmatpush2.msra.mxu0 0.0
      %414 = vmatprep.subr.mxu0 0.0
      %415 = vmatpush2.msra.mxu0 0.0
      %416 = vmatprep.subr.mxu0 0.0
      %417 = vmatpush2.msra.mxu0 0.0
      %418 = vmatprep.subr.mxu0 0.0
      %419 = vmatpush2.msra.mxu0 0.0
      %420 = vmatprep.subr.mxu0 0.0
      %421 = vmatpush2.msra.mxu0 0.0
      %422 = vmatprep.subr.mxu0 0.0
      %423 = vmatpush2.msra.mxu0 0.0
      %424 = vmatprep.subr.mxu0 0.0
      %425 = vmatpush2.msra.mxu0 0.0
      %426 = vmatprep.subr.mxu0 0.0
      %427 = vmatpush2.msra.mxu0 0.0
      %428 = vmatprep.mubr.f32.mxu0 0.0
      %429 = vmatmul.mubr.f32.gmra.mxu0 %v333
      %v430 = vpop.f32.mrf.mxu0
      %v431 = vadd.f32 %v362, %v430
      %v432 = vpop.f32.mrf.mxu0
      %433 = vmatprep.mubr.f32.mxu0 0.0
      %434 = vmatmul.mubr.f32.gmra.mxu0 %v334
      %v435 = vpop.f32.mrf.mxu0
      %v436 = vadd.f32 %v362, %v435
      %v437 = vpop.f32.mrf.mxu0
      %438 = vmatprep.mubr.f32.mxu0 0.0
      %439 = vmatmul.mubr.f32.gmra.mxu0 %v335
      %v440 = vpop.f32.mrf.mxu0
      %v441 = vadd.f32 %v362, %v440
      %v442 = vpop.f32.mrf.mxu0
      %443 = vmatprep.mubr.f32.mxu0 0.0
      %444 = vmatmul.mubr.f32.gmra.mxu0 %v336
      %v445 = vpop.f32.mrf.mxu0
      %v446 = vadd.f32 %v362, %v445
      %v447 = vpop.f32.mrf.mxu0
      %448 = vmatprep.mubr.f32.mxu0 0.0
      %449 = vmatmul.mubr.f32.gmra.mxu0 %v337
      %v450 = vpop.f32.mrf.mxu0
      %v451 = vadd.f32 %v362, %v450
      %v452 = vpop.f32.mrf.mxu0
      %453 = vmatprep.mubr.f32.mxu0 0.0
      %454 = vmatmul.mubr.f32.gmra.mxu0 %v338
      %v455 = vpop.f32.mrf.mxu0
      %v456 = vadd.f32 %v362, %v455
      %v457 = vpop.f32.mrf.mxu0
      %458 = vmatprep.mubr.f32.mxu0 0.0
      %459 = vmatmul.mubr.f32.gmra.mxu0 %v339
      %v460 = vpop.f32.mrf.mxu0
      %v461 = vadd.f32 %v362, %v460
      %v462 = vpop.f32.mrf.mxu0
      %463 = vmatprep.mubr.f32.mxu0 0.0
      %464 = vmatmul.mubr.f32.gmra.mxu0 %v340
      %v465 = vpop.f32.mrf.mxu0
      %v466 = vadd.f32 %v362, %v465
      %v467 = vpop.f32.mrf.mxu0
      %468 = vdwg.mxu0
      %v469 = vmax.f32 %v431, 0.0
      %v470 = vmax.f32 %v436, 0.0
      %v471 = vmax.f32 %v441, 0.0
      %v472 = vmax.f32 %v446, 0.0
      %v473 = vmax.f32 %v451, 0.0
      %v474 = vmax.f32 %v456, 0.0
      %v475 = vmax.f32 %v461, 0.0
      %v476 = vmax.f32 %v466, 0.0
      %vm477 = vcmask 521216
      %478 = vst.msk [vmem:[#allocation2] sm:$0x3f] %vm477, 0.0
      %479 = vst.msk [vmem:[#allocation2 + $0x8] sm:$0x3f] %vm477, 0.0
      %480 = vst.msk [vmem:[#allocation2 + $0x10] sm:$0x3f] %vm477, 0.0
      %481 = vst.msk [vmem:[#allocation2 + $0x18] sm:$0x3f] %vm477, 0.0
      %482 = vst.msk [vmem:[#allocation2 + $0x20] sm:$0x3f] %vm477, 0.0
      %483 = vst.msk [vmem:[#allocation2 + $0x28] sm:$0x3f] %vm477, 0.0
      %484 = vst.msk [vmem:[#allocation2 + $0x30] sm:$0x3f] %vm477, 0.0
      %485 = vst.msk [vmem:[#allocation2 + $0x38] sm:$0x3f] %vm477, 0.0
      %486 = vst.msk [vmem:[#allocation2 + $0x40] sm:$0x3f] %vm477, 0.0
      %487 = vst.msk [vmem:[#allocation2 + $0x48] sm:$0x3f] %vm477, 0.0
      %488 = vst.msk [vmem:[#allocation2 + $0x50] sm:$0x3f] %vm477, 0.0
      %489 = vst.msk [vmem:[#allocation2 + $0x58] sm:$0x3f] %vm477, 0.0
      %490 = vst.msk [vmem:[#allocation2 + $0x60] sm:$0x3f] %vm477, 0.0
      %491 = vst.msk [vmem:[#allocation2 + $0x68] sm:$0x3f] %vm477, 0.0
      %492 = vst.msk [vmem:[#allocation2 + $0x70] sm:$0x3f] %vm477, 0.0
      %493 = vst.msk [vmem:[#allocation2 + $0x78] sm:$0x3f] %vm477, 0.0
      %494 = vst.msk [vmem:[#allocation2 + $0x80] sm:$0x3f] %vm477, 0.0
      %495 = vst.msk [vmem:[#allocation2 + $0x88] sm:$0x3f] %vm477, 0.0
      %496 = vst.msk [vmem:[#allocation2 + $0x90] sm:$0x3f] %vm477, 0.0
      %497 = vst.msk [vmem:[#allocation2 + $0x98] sm:$0x3f] %vm477, 0.0
      %498 = vst.msk [vmem:[#allocation2 + $0xa0] sm:$0x3f] %vm477, 0.0
      %499 = vst.msk [vmem:[#allocation2 + $0xa8] sm:$0x3f] %vm477, 0.0
      %500 = vst.msk [vmem:[#allocation2 + $0xb0] sm:$0x3f] %vm477, 0.0
      %501 = vst.msk [vmem:[#allocation2 + $0xb8] sm:$0x3f] %vm477, 0.0
      %s502 = scalar_lea.vmem [#allocation2], 8
      %vm503 = vcmask 519168
      %504 = vst.msk [vmem:[%s502 + $0x1] sm:$0xf] %vm503, %v469
      %s505 = scalar_lea.vmem [#allocation2], 16
      %vm506 = vcmask 523268
      %507 = vst.msk [vmem:[%s505 - $0x3] sm:$0xf0] %vm506, %v469
      %s508 = scalar_lea.vmem [#allocation2], 24
      %509 = vst.msk [vmem:[%s508 + $0x1] sm:$0xf] %vm503, %v470
      %s510 = scalar_lea.vmem [#allocation2], 32
      %511 = vst.msk [vmem:[%s510 - $0x3] sm:$0xf0] %vm506, %v470
      %s512 = scalar_lea.vmem [#allocation2], 56
      %513 = vst.msk [vmem:[%s512 + $0x1] sm:$0xf] %vm503, %v471
      %s514 = scalar_lea.vmem [#allocation2], 64
      %515 = vst.msk [vmem:[%s514 - $0x3] sm:$0xf0] %vm506, %v471
      %s516 = scalar_lea.vmem [#allocation2], 72
      %517 = vst.msk [vmem:[%s516 + $0x1] sm:$0xf] %vm503, %v472
      %s518 = scalar_lea.vmem [#allocation2], 80
      %519 = vst.msk [vmem:[%s518 - $0x3] sm:$0xf0] %vm506, %v472
      %s520 = scalar_lea.vmem [#allocation2], 104
      %521 = vst.msk [vmem:[%s520 + $0x1] sm:$0xf] %vm503, %v473
      %s522 = scalar_lea.vmem [#allocation2], 112
      %523 = vst.msk [vmem:[%s522 - $0x3] sm:$0xf0] %vm506, %v473
      %s524 = scalar_lea.vmem [#allocation2], 120
      %525 = vst.msk [vmem:[%s524 + $0x1] sm:$0xf] %vm503, %v474
      %s526 = scalar_lea.vmem [#allocation2], 128
      %527 = vst.msk [vmem:[%s526 - $0x3] sm:$0xf0] %vm506, %v474
      %s528 = scalar_lea.vmem [#allocation2], 152
      %529 = vst.msk [vmem:[%s528 + $0x1] sm:$0xf] %vm503, %v475
      %s530 = scalar_lea.vmem [#allocation2], 160
      %531 = vst.msk [vmem:[%s530 - $0x3] sm:$0xf0] %vm506, %v475
      %s532 = scalar_lea.vmem [#allocation2], 168
      %533 = vst.msk [vmem:[%s532 + $0x1] sm:$0xf] %vm503, %v476
      %s534 = scalar_lea.vmem [#allocation2], 176
      %535 = vst.msk [vmem:[%s534 - $0x3] sm:$0xf0] %vm506, %v476
      %s536 = scalar_lea.vmem [#allocation2], 144
      %v537 = vld [vmem:[%s536] sm:$0xf]
      %s538 = scalar_lea.vmem [#allocation2], 96
      %v539 = vld [vmem:[%s538 + $0x1] sm:$0xf]
      %v540 = vld [vmem:[%s536 + $0x1] sm:$0xf]
      %v541 = vld [vmem:[%s538 + $0x2] sm:$0xf]
      %v542 = vld [vmem:[%s512] sm:$0xf]
      %v543 = vld [vmem:[%s502 + $0x1] sm:$0xf]
      %v544 = vld [vmem:[%s512 + $0x1] sm:$0xf]
      %v545 = vld [vmem:[%s502 + $0x2] sm:$0xf]
      %v546 = vld [vmem:[%s528] sm:$0xf]
      %v547 = vld [vmem:[%s520 + $0x1] sm:$0xf]
      %v548 = vld [vmem:[%s528 + $0x1] sm:$0xf]
      %v549 = vld [vmem:[%s520 + $0x2] sm:$0xf]
      %v550 = vld [vmem:[%s514] sm:$0xf]
      %v551 = vld [vmem:[%s505 + $0x1] sm:$0xf]
      %v552 = vld [vmem:[%s514 + $0x1] sm:$0xf]
      %v553 = vld [vmem:[%s505 + $0x2] sm:$0xf]
      %555 = vrot.lane.b32.xlu0 %v539, 64
      %v556 = vpop.permute.xlu0 %555
      %559 = vrot.lane.b32.xlu0 %v541, 64
      %v560 = vpop.permute.xlu0 %559
      %563 = vrot.lane.b32.xlu0 %v543, 64
      %v564 = vpop.permute.xlu0 %563
      %567 = vrot.lane.b32.xlu0 %v545, 64
      %v568 = vpop.permute.xlu0 %567
      %571 = vrot.lane.b32.xlu0 %v547, 64
      %v572 = vpop.permute.xlu0 %571
      %575 = vrot.lane.b32.xlu0 %v549, 64
      %v576 = vpop.permute.xlu0 %575
      %579 = vrot.lane.b32.xlu0 %v551, 64
      %v580 = vpop.permute.xlu0 %579
      %583 = vrot.lane.b32.xlu0 %v553, 64
      %v584 = vpop.permute.xlu0 %583
      %vm586 = vcmask 523264
      %v587 = vsel %vm586, %v537, %v556
      %v588 = vsel %vm586, %v540, %v560
      %v589 = vsel %vm586, %v542, %v564
      %v590 = vsel %vm586, %v544, %v568
      %v591 = vsel %vm586, %v546, %v572
      %v592 = vsel %vm586, %v548, %v576
      %v593 = vsel %vm586, %v550, %v580
      %v594 = vsel %vm586, %v552, %v584
      %v595 = vld [vmem:[%s530] sm:$0xf]
      %v596 = vld [vmem:[%s522 + $0x1] sm:$0xf]
      %v597 = vld [vmem:[%s530 + $0x1] sm:$0xf]
      %v598 = vld [vmem:[%s522 + $0x2] sm:$0xf]
      %v599 = vld [vmem:[%s516] sm:$0xf]
      %v600 = vld [vmem:[%s508 + $0x1] sm:$0xf]
      %v601 = vld [vmem:[%s516 + $0x1] sm:$0xf]
      %v602 = vld [vmem:[%s508 + $0x2] sm:$0xf]
      %604 = vrot.lane.b32.xlu0 %v596, 64
      %v605 = vpop.permute.xlu0 %604
      %608 = vrot.lane.b32.xlu0 %v598, 64
      %v609 = vpop.permute.xlu0 %608
      %612 = vrot.lane.b32.xlu0 %v600, 64
      %v613 = vpop.permute.xlu0 %612
      %616 = vrot.lane.b32.xlu0 %v602, 64
      %v617 = vpop.permute.xlu0 %616
      %v619 = vsel %vm586, %v595, %v605
      %v620 = vsel %vm586, %v597, %v609
      %v621 = vsel %vm586, %v599, %v613
      %v622 = vsel %vm586, %v601, %v617
      %v623 = vld [vmem:[%s532] sm:$0xf]
      %v624 = vld [vmem:[%s524 + $0x1] sm:$0xf]
      %v625 = vld [vmem:[%s532 + $0x1] sm:$0xf]
      %v626 = vld [vmem:[%s524 + $0x2] sm:$0xf]
      %v627 = vld [vmem:[%s518] sm:$0xf]
      %v628 = vld [vmem:[%s510 + $0x1] sm:$0xf]
      %v629 = vld [vmem:[%s518 + $0x1] sm:$0xf]
      %v630 = vld [vmem:[%s510 + $0x2] sm:$0xf]
      %632 = vrot.lane.b32.xlu0 %v624, 64
      %v633 = vpop.permute.xlu0 %632
      %636 = vrot.lane.b32.xlu0 %v626, 64
      %v637 = vpop.permute.xlu0 %636
      %640 = vrot.lane.b32.xlu0 %v628, 64
      %v641 = vpop.permute.xlu0 %640
      %644 = vrot.lane.b32.xlu0 %v630, 64
      %v645 = vpop.permute.xlu0 %644
      %v647 = vsel %vm586, %v623, %v633
      %v648 = vsel %vm586, %v625, %v637
      %v649 = vsel %vm586, %v627, %v641
      %v650 = vsel %vm586, %v629, %v645
      %v651 = vld [vmem:[%s534] sm:$0xf]
      %v652 = vld [vmem:[%s526 + $0x1] sm:$0xf]
      %v653 = vld [vmem:[%s534 + $0x1] sm:$0xf]
      %v654 = vld [vmem:[%s526 + $0x2] sm:$0xf]
      %s655 = scalar_lea.vmem [#allocation2], 88
      %v656 = vld [vmem:[%s655] sm:$0xf]
      %s657 = scalar_lea.vmem [#allocation2], 40
      %v658 = vld [vmem:[%s657 + $0x1] sm:$0xf]
      %v659 = vld [vmem:[%s655 + $0x1] sm:$0xf]
      %v660 = vld [vmem:[%s657 + $0x2] sm:$0xf]
      %662 = vrot.lane.b32.xlu0 %v652, 64
      %v663 = vpop.permute.xlu0 %662
      %666 = vrot.lane.b32.xlu0 %v654, 64
      %v667 = vpop.permute.xlu0 %666
      %670 = vrot.lane.b32.xlu0 %v658, 64
      %v671 = vpop.permute.xlu0 %670
      %674 = vrot.lane.b32.xlu0 %v660, 64
      %v675 = vpop.permute.xlu0 %674
      %v677 = vsel %vm586, %v651, %v663
      %v678 = vsel %vm586, %v653, %v667
      %v679 = vsel %vm586, %v656, %v671
      %v680 = vsel %vm586, %v659, %v675
      %v689 = vrot.slane %v591, 4
      %v690 = vrot.slane %v592, 4
      %v691 = vrot.slane %v593, 4
      %v692 = vrot.slane %v594, 4
      %v693 = vrot.slane %v619, 4
      %v694 = vrot.slane %v620, 4
      %v695 = vrot.slane %v621, 4
      %v696 = vrot.slane %v622, 4
      %v713 = vrot.slane %v647, 4
      %v714 = vrot.slane %v648, 4
      %v715 = vrot.slane %v649, 4
      %v716 = vrot.slane %v650, 4
      %v717 = vrot.slane %v677, 4
      %v718 = vrot.slane %v678, 4
      %v719 = vrot.slane %v679, 4
      %v720 = vrot.slane %v680, 4
      %vm729 = vcmask 1043456
      %v730 = vsel %vm729, %v587, %v689
      %v731 = vsel %vm729, %v588, %v690
      %v732 = vsel %vm729, %v589, %v691
      %v733 = vsel %vm729, %v590, %v692
      %v734 = vsel %vm729, %v591, %v693
      %v735 = vsel %vm729, %v592, %v694
      %v736 = vsel %vm729, %v593, %v695
      %v737 = vsel %vm729, %v594, %v696
      %v738 = vsel %vm729, %v619, %v713
      %v739 = vsel %vm729, %v620, %v714
      %v740 = vsel %vm729, %v621, %v715
      %v741 = vsel %vm729, %v622, %v716
      %v742 = vsel %vm729, %v647, %v717
      %v743 = vsel %vm729, %v648, %v718
      %v744 = vsel %vm729, %v649, %v719
      %v745 = vsel %vm729, %v650, %v720
      %v746 = vld [vmem:[%s3] sm:$0xff]
      %v747 = vld [vmem:[%s3 + $0x8] sm:$0xff]
      %v748 = vld [vmem:[%s3 + $0x10] sm:$0xff]
      %v749 = vld [vmem:[%s3 + $0x18] sm:$0xff]
      %v750 = vld [vmem:[%s3 + $0x20] sm:$0xff]
      %v751 = vld [vmem:[%s3 + $0x28] sm:$0xff]
      %v752 = vld [vmem:[%s3 + $0x30] sm:$0xff]
      %v753 = vld [vmem:[%s3 + $0x38] sm:$0xff]
      %v754 = vld [vmem:[%s3 + $0x40] sm:$0xff]
      %v755 = vld [vmem:[%s3 + $0x48] sm:$0xff]
      %v756 = vld [vmem:[%s3 + $0x50] sm:$0xff]
      %v757 = vld [vmem:[%s3 + $0x58] sm:$0xff]
      %v758 = vld [vmem:[%s3 + $0x60] sm:$0xff]
      %v759 = vld [vmem:[%s3 + $0x68] sm:$0xff]
      %v760 = vld [vmem:[%s3 + $0x70] sm:$0xff]
      %v761 = vld [vmem:[%s3 + $0x78] sm:$0xff]
      %v762 = vld [vmem:[%s3 + $0x80] sm:$0xff]
      %v763 = vld [vmem:[%s3 + $0x88] sm:$0xff]
      %v764 = vld [vmem:[%s3 + $0x90] sm:$0xff]
      %v765 = vld [vmem:[%s3 + $0x98] sm:$0xff]
      %v766 = vld [vmem:[%s3 + $0xa0] sm:$0xff]
      %v767 = vld [vmem:[%s3 + $0xa8] sm:$0xff]
      %v768 = vld [vmem:[%s3 + $0xb0] sm:$0xff]
      %v769 = vld [vmem:[%s3 + $0xb8] sm:$0xff]
      %v770 = vld [vmem:[%s3 + $0xc0] sm:$0xff]
      %v771 = vld [vmem:[%s3 + $0xc8] sm:$0xff]
      %v772 = vld [vmem:[%s3 + $0xd0] sm:$0xff]
      %v773 = vld [vmem:[%s3 + $0xd8] sm:$0xff]
      %v774 = vld [vmem:[%s3 + $0xe0] sm:$0xff]
      %v775 = vld [vmem:[%s3 + $0xe8] sm:$0xff]
      %v776 = vld [vmem:[%s3 + $0xf0] sm:$0xff]
      %v777 = vld [vmem:[%s3 + $0xf8] sm:$0xff]
      %v778 = vld [vmem:[%s3 + $0x100] sm:$0xff]
      %v779 = vld [vmem:[%s3 + $0x108] sm:$0xff]
      %v780 = vld [vmem:[%s3 + $0x110] sm:$0xff]
      %v781 = vld [vmem:[%s3 + $0x118] sm:$0xff]
      %v782 = vld [vmem:[%s3 + $0x120] sm:$0xff]
      %v783 = vld [vmem:[%s3 + $0x128] sm:$0xff]
      %v784 = vld [vmem:[%s3 + $0x130] sm:$0xff]
      %v785 = vld [vmem:[%s3 + $0x138] sm:$0xff]
      %v786 = vld [vmem:[%s3 + $0x140] sm:$0xff]
      %v787 = vld [vmem:[%s3 + $0x148] sm:$0xff]
      %v788 = vld [vmem:[%s3 + $0x150] sm:$0xff]
      %v789 = vld [vmem:[%s3 + $0x158] sm:$0xff]
      %v790 = vld [vmem:[%s3 + $0x160] sm:$0xff]
      %v791 = vld [vmem:[%s3 + $0x168] sm:$0xff]
      %v792 = vld [vmem:[%s3 + $0x170] sm:$0xff]
      %v793 = vld [vmem:[%s3 + $0x178] sm:$0xff]
      %v794 = vld [vmem:[%s3 + $0x180] sm:$0xff]
      %v795 = vld [vmem:[%s3 + $0x188] sm:$0xff]
      %v796 = vld [vmem:[%s3 + $0x190] sm:$0xff]
      %v797 = vld [vmem:[%s3 + $0x198] sm:$0xff]
      %v798 = vld [vmem:[%s3 + $0x1a0] sm:$0xff]
      %v799 = vld [vmem:[%s3 + $0x1a8] sm:$0xff]
      %v800 = vld [vmem:[%s3 + $0x1b0] sm:$0xff]
      %v801 = vld [vmem:[%s3 + $0x1b8] sm:$0xff]
      %v802 = vld [vmem:[%s3 + $0x1c0] sm:$0xff]
      %v803 = vld [vmem:[%s3 + $0x1c8] sm:$0xff]
      %v804 = vld [vmem:[%s3 + $0x1d0] sm:$0xff]
      %v805 = vld [vmem:[%s3 + $0x1d8] sm:$0xff]
      %v806 = vld [vmem:[%s3 + $0x1e0] sm:$0xff]
      %v807 = vld [vmem:[%s3 + $0x1e8] sm:$0xff]
      %v808 = vld [vmem:[%s3 + $0x1f0] sm:$0xff]
      %v809 = vld [vmem:[%s3 + $0x1f8] sm:$0xff]
      %v810 = vld [vmem:[%s3 + $0x200] sm:$0xff]
      %v811 = vld [vmem:[%s3 + $0x208] sm:$0xff]
      %v812 = vld [vmem:[%s3 + $0x210] sm:$0xff]
      %v813 = vld [vmem:[%s3 + $0x218] sm:$0xff]
      %v814 = vld [vmem:[%s3 + $0x220] sm:$0xff]
      %v815 = vld [vmem:[%s3 + $0x228] sm:$0xff]
      %v816 = vld [vmem:[%s3 + $0x230] sm:$0xff]
      %v817 = vld [vmem:[%s3 + $0x238] sm:$0xff]
      %v818 = vld [vmem:[%s3 + $0x240] sm:$0xff]
      %v819 = vld [vmem:[%s3 + $0x248] sm:$0xff]
      %v820 = vld [vmem:[%s3 + $0x250] sm:$0xff]
      %v821 = vld [vmem:[%s3 + $0x258] sm:$0xff]
      %v822 = vld [vmem:[%s3 + $0x260] sm:$0xff]
      %v823 = vld [vmem:[%s3 + $0x268] sm:$0xff]
      %v824 = vld [vmem:[%s3 + $0x270] sm:$0xff]
      %v825 = vld [vmem:[%s3 + $0x278] sm:$0xff]
      %v826 = vld [vmem:[%s3 + $0x280] sm:$0xff]
      %v827 = vld [vmem:[%s3 + $0x288] sm:$0xff]
      %v828 = vld [vmem:[%s3 + $0x290] sm:$0xff]
      %v829 = vld [vmem:[%s3 + $0x298] sm:$0xff]
      %v830 = vld [vmem:[%s3 + $0x2a0] sm:$0xff]
      %v831 = vld [vmem:[%s3 + $0x2a8] sm:$0xff]
      %v832 = vld [vmem:[%s3 + $0x2b0] sm:$0xff]
      %v833 = vld [vmem:[%s3 + $0x2b8] sm:$0xff]
      %v834 = vld [vmem:[%s3 + $0x2c0] sm:$0xff]
      %v835 = vld [vmem:[%s3 + $0x2c8] sm:$0xff]
      %v836 = vld [vmem:[%s3 + $0x2d0] sm:$0xff]
      %v837 = vld [vmem:[%s3 + $0x2d8] sm:$0xff]
      %v838 = vld [vmem:[%s3 + $0x2e0] sm:$0xff]
      %v839 = vld [vmem:[%s3 + $0x2e8] sm:$0xff]
      %v840 = vld [vmem:[%s3 + $0x2f0] sm:$0xff]
      %v841 = vld [vmem:[%s3 + $0x2f8] sm:$0xff]
      %v842 = vld [vmem:[%s3 + $0x300] sm:$0xff]
      %v843 = vld [vmem:[%s3 + $0x308] sm:$0xff]
      %v844 = vld [vmem:[%s3 + $0x310] sm:$0xff]
      %v845 = vld [vmem:[%s3 + $0x318] sm:$0xff]
      %v846 = vld [vmem:[%s3 + $0x320] sm:$0xff]
      %v847 = vld [vmem:[%s3 + $0x328] sm:$0xff]
      %v848 = vld [vmem:[%s3 + $0x330] sm:$0xff]
      %v849 = vld [vmem:[%s3 + $0x338] sm:$0xff]
      %v850 = vld [vmem:[%s3 + $0x340] sm:$0xff]
      %v851 = vld [vmem:[%s3 + $0x348] sm:$0xff]
      %v852 = vld [vmem:[%s3 + $0x350] sm:$0xff]
      %v853 = vld [vmem:[%s3 + $0x358] sm:$0xff]
      %v854 = vld [vmem:[%s3 + $0x360] sm:$0xff]
      %v855 = vld [vmem:[%s3 + $0x368] sm:$0xff]
      %v856 = vld [vmem:[%s3 + $0x370] sm:$0xff]
      %v857 = vld [vmem:[%s3 + $0x378] sm:$0xff]
      %v858 = vld [vmem:[%s3 + $0x380] sm:$0xff]
      %v859 = vld [vmem:[%s3 + $0x388] sm:$0xff]
      %v860 = vld [vmem:[%s3 + $0x390] sm:$0xff]
      %v861 = vld [vmem:[%s3 + $0x398] sm:$0xff]
      %v862 = vld [vmem:[%s3 + $0x3a0] sm:$0xff]
      %v863 = vld [vmem:[%s3 + $0x3a8] sm:$0xff]
      %v864 = vld [vmem:[%s3 + $0x3b0] sm:$0xff]
      %v865 = vld [vmem:[%s3 + $0x3b8] sm:$0xff]
      %v866 = vld [vmem:[%s3 + $0x3c0] sm:$0xff]
      %v867 = vld [vmem:[%s3 + $0x3c8] sm:$0xff]
      %v868 = vld [vmem:[%s3 + $0x3d0] sm:$0xff]
      %v869 = vld [vmem:[%s3 + $0x3d8] sm:$0xff]
      %v870 = vld [vmem:[%s3 + $0x3e0] sm:$0xff]
      %v871 = vld [vmem:[%s3 + $0x3e8] sm:$0xff]
      %v872 = vld [vmem:[%s3 + $0x3f0] sm:$0xff]
      %v873 = vld [vmem:[%s3 + $0x3f8] sm:$0xff]
      %v874 = vld [vmem:[%s4] sm:$0x1]
      %v876 = vlaneseq
      %v877 = vshrl.u32 %v876, 7
      %v878 = vsub.s32 0, %v877
      %v879 = vrot.slane %v874, %v878
      %881 = vmatprep.subr.mxu0 0.0
      %882 = vmatpush1.msra.mxu0 %v761
      %883 = vmatprep.subr.mxu0 0.0
      %884 = vmatpush1.msra.mxu0 %v760
      %885 = vmatprep.subr.mxu0 0.0
      %886 = vmatpush1.msra.mxu0 %v759
      %887 = vmatprep.subr.mxu0 0.0
      %888 = vmatpush1.msra.mxu0 %v758
      %889 = vmatprep.subr.mxu0 0.0
      %890 = vmatpush1.msra.mxu0 %v757
      %891 = vmatprep.subr.mxu0 0.0
      %892 = vmatpush1.msra.mxu0 %v756
      %893 = vmatprep.subr.mxu0 0.0
      %894 = vmatpush1.msra.mxu0 %v755
      %895 = vmatprep.subr.mxu0 0.0
      %896 = vmatpush1.msra.mxu0 %v754
      %897 = vmatprep.subr.mxu0 0.0
      %898 = vmatpush1.msra.mxu0 %v753
      %899 = vmatprep.subr.mxu0 0.0
      %900 = vmatpush1.msra.mxu0 %v752
      %901 = vmatprep.subr.mxu0 0.0
      %902 = vmatpush1.msra.mxu0 %v751
      %903 = vmatprep.subr.mxu0 0.0
      %904 = vmatpush1.msra.mxu0 %v750
      %905 = vmatprep.subr.mxu0 0.0
      %906 = vmatpush1.msra.mxu0 %v749
      %907 = vmatprep.subr.mxu0 0.0
      %908 = vmatpush1.msra.mxu0 %v748
      %909 = vmatprep.subr.mxu0 0.0
      %910 = vmatpush1.msra.mxu0 %v747
      %911 = vmatprep.subr.mxu0 0.0
      %912 = vmatpush1.msra.mxu0 %v746
      %913 = vmatprep.subr.mxu0 0.0
      %914 = vmatpush2.msra.mxu0 %v777
      %915 = vmatprep.subr.mxu0 0.0
      %916 = vmatpush2.msra.mxu0 %v776
      %917 = vmatprep.subr.mxu0 0.0
      %918 = vmatpush2.msra.mxu0 %v775
      %919 = vmatprep.subr.mxu0 0.0
      %920 = vmatpush2.msra.mxu0 %v774
      %921 = vmatprep.subr.mxu0 0.0
      %922 = vmatpush2.msra.mxu0 %v773
      %923 = vmatprep.subr.mxu0 0.0
      %924 = vmatpush2.msra.mxu0 %v772
      %925 = vmatprep.subr.mxu0 0.0
      %926 = vmatpush2.msra.mxu0 %v771
      %927 = vmatprep.subr.mxu0 0.0
      %928 = vmatpush2.msra.mxu0 %v770
      %929 = vmatprep.subr.mxu0 0.0
      %930 = vmatpush2.msra.mxu0 %v769
      %931 = vmatprep.subr.mxu0 0.0
      %932 = vmatpush2.msra.mxu0 %v768
      %933 = vmatprep.subr.mxu0 0.0
      %934 = vmatpush2.msra.mxu0 %v767
      %935 = vmatprep.subr.mxu0 0.0
      %936 = vmatpush2.msra.mxu0 %v766
      %937 = vmatprep.subr.mxu0 0.0
      %938 = vmatpush2.msra.mxu0 %v765
      %939 = vmatprep.subr.mxu0 0.0
      %940 = vmatpush2.msra.mxu0 %v764
      %941 = vmatprep.subr.mxu0 0.0
      %942 = vmatpush2.msra.mxu0 %v763
      %943 = vmatprep.subr.mxu0 0.0
      %944 = vmatpush2.msra.mxu0 %v762
      %945 = vmatprep.mubr.f32.mxu0 %v731
      %946 = vmatmul.mubr.f32.gmra.mxu0 %v730
      %v947 = vpop.f32.mrf.mxu0
      %v948 = vadd.f32 %v879, %v947
      %v949 = vpop.f32.mrf.mxu0
      %950 = vmatprep.mubr.f32.mxu0 %v739
      %951 = vmatmul.mubr.f32.gmra.mxu0 %v738
      %v952 = vpop.f32.mrf.mxu0
      %v953 = vadd.f32 %v879, %v952
      %v954 = vpop.f32.mrf.mxu0
      %955 = vdwg.mxu0
      %956 = vmatprep.subr.mxu0 0.0
      %957 = vmatpush1.msra.mxu0 %v793
      %958 = vmatprep.subr.mxu0 0.0
      %959 = vmatpush1.msra.mxu0 %v792
      %960 = vmatprep.subr.mxu0 0.0
      %961 = vmatpush1.msra.mxu0 %v791
      %962 = vmatprep.subr.mxu0 0.0
      %963 = vmatpush1.msra.mxu0 %v790
      %964 = vmatprep.subr.mxu0 0.0
      %965 = vmatpush1.msra.mxu0 %v789
      %966 = vmatprep.subr.mxu0 0.0
      %967 = vmatpush1.msra.mxu0 %v788
      %968 = vmatprep.subr.mxu0 0.0
      %969 = vmatpush1.msra.mxu0 %v787
      %970 = vmatprep.subr.mxu0 0.0
      %971 = vmatpush1.msra.mxu0 %v786
      %972 = vmatprep.subr.mxu0 0.0
      %973 = vmatpush1.msra.mxu0 %v785
      %974 = vmatprep.subr.mxu0 0.0
      %975 = vmatpush1.msra.mxu0 %v784
      %976 = vmatprep.subr.mxu0 0.0
      %977 = vmatpush1.msra.mxu0 %v783
      %978 = vmatprep.subr.mxu0 0.0
      %979 = vmatpush1.msra.mxu0 %v782
      %980 = vmatprep.subr.mxu0 0.0
      %981 = vmatpush1.msra.mxu0 %v781
      %982 = vmatprep.subr.mxu0 0.0
      %983 = vmatpush1.msra.mxu0 %v780
      %984 = vmatprep.subr.mxu0 0.0
      %985 = vmatpush1.msra.mxu0 %v779
      %986 = vmatprep.subr.mxu0 0.0
      %987 = vmatpush1.msra.mxu0 %v778
      %988 = vmatprep.subr.mxu0 0.0
      %989 = vmatpush2.msra.mxu0 %v809
      %990 = vmatprep.subr.mxu0 0.0
      %991 = vmatpush2.msra.mxu0 %v808
      %992 = vmatprep.subr.mxu0 0.0
      %993 = vmatpush2.msra.mxu0 %v807
      %994 = vmatprep.subr.mxu0 0.0
      %995 = vmatpush2.msra.mxu0 %v806
      %996 = vmatprep.subr.mxu0 0.0
      %997 = vmatpush2.msra.mxu0 %v805
      %998 = vmatprep.subr.mxu0 0.0
      %999 = vmatpush2.msra.mxu0 %v804
      %1000 = vmatprep.subr.mxu0 0.0
      %1001 = vmatpush2.msra.mxu0 %v803
      %1002 = vmatprep.subr.mxu0 0.0
      %1003 = vmatpush2.msra.mxu0 %v802
      %1004 = vmatprep.subr.mxu0 0.0
      %1005 = vmatpush2.msra.mxu0 %v801
      %1006 = vmatprep.subr.mxu0 0.0
      %1007 = vmatpush2.msra.mxu0 %v800
      %1008 = vmatprep.subr.mxu0 0.0
      %1009 = vmatpush2.msra.mxu0 %v799
      %1010 = vmatprep.subr.mxu0 0.0
      %1011 = vmatpush2.msra.mxu0 %v798
      %1012 = vmatprep.subr.mxu0 0.0
      %1013 = vmatpush2.msra.mxu0 %v797
      %1014 = vmatprep.subr.mxu0 0.0
      %1015 = vmatpush2.msra.mxu0 %v796
      %1016 = vmatprep.subr.mxu0 0.0
      %1017 = vmatpush2.msra.mxu0 %v795
      %1018 = vmatprep.subr.mxu0 0.0
      %1019 = vmatpush2.msra.mxu0 %v794
      %1020 = vmatprep.mubr.f32.mxu0 %v733
      %1021 = vmatmul.mubr.f32.gmra.mxu0 %v732
      %v1022 = vpop.f32.mrf.mxu0
      %v1023 = vadd.f32 %v948, %v1022
      %v1024 = vpop.f32.mrf.mxu0
      %1025 = vmatprep.mubr.f32.mxu0 %v741
      %1026 = vmatmul.mubr.f32.gmra.mxu0 %v740
      %v1027 = vpop.f32.mrf.mxu0
      %v1028 = vadd.f32 %v953, %v1027
      %v1029 = vpop.f32.mrf.mxu0
      %1030 = vdwg.mxu0
      %1031 = vmatprep.subr.mxu0 0.0
      %1032 = vmatpush1.msra.mxu0 %v825
      %1033 = vmatprep.subr.mxu0 0.0
      %1034 = vmatpush1.msra.mxu0 %v824
      %1035 = vmatprep.subr.mxu0 0.0
      %1036 = vmatpush1.msra.mxu0 %v823
      %1037 = vmatprep.subr.mxu0 0.0
      %1038 = vmatpush1.msra.mxu0 %v822
      %1039 = vmatprep.subr.mxu0 0.0
      %1040 = vmatpush1.msra.mxu0 %v821
      %1041 = vmatprep.subr.mxu0 0.0
      %1042 = vmatpush1.msra.mxu0 %v820
      %1043 = vmatprep.subr.mxu0 0.0
      %1044 = vmatpush1.msra.mxu0 %v819
      %1045 = vmatprep.subr.mxu0 0.0
      %1046 = vmatpush1.msra.mxu0 %v818
      %1047 = vmatprep.subr.mxu0 0.0
      %1048 = vmatpush1.msra.mxu0 %v817
      %1049 = vmatprep.subr.mxu0 0.0
      %1050 = vmatpush1.msra.mxu0 %v816
      %1051 = vmatprep.subr.mxu0 0.0
      %1052 = vmatpush1.msra.mxu0 %v815
      %1053 = vmatprep.subr.mxu0 0.0
      %1054 = vmatpush1.msra.mxu0 %v814
      %1055 = vmatprep.subr.mxu0 0.0
      %1056 = vmatpush1.msra.mxu0 %v813
      %1057 = vmatprep.subr.mxu0 0.0
      %1058 = vmatpush1.msra.mxu0 %v812
      %1059 = vmatprep.subr.mxu0 0.0
      %1060 = vmatpush1.msra.mxu0 %v811
      %1061 = vmatprep.subr.mxu0 0.0
      %1062 = vmatpush1.msra.mxu0 %v810
      %1063 = vmatprep.subr.mxu0 0.0
      %1064 = vmatpush2.msra.mxu0 %v841
      %1065 = vmatprep.subr.mxu0 0.0
      %1066 = vmatpush2.msra.mxu0 %v840
      %1067 = vmatprep.subr.mxu0 0.0
      %1068 = vmatpush2.msra.mxu0 %v839
      %1069 = vmatprep.subr.mxu0 0.0
      %1070 = vmatpush2.msra.mxu0 %v838
      %1071 = vmatprep.subr.mxu0 0.0
      %1072 = vmatpush2.msra.mxu0 %v837
      %1073 = vmatprep.subr.mxu0 0.0
      %1074 = vmatpush2.msra.mxu0 %v836
      %1075 = vmatprep.subr.mxu0 0.0
      %1076 = vmatpush2.msra.mxu0 %v835
      %1077 = vmatprep.subr.mxu0 0.0
      %1078 = vmatpush2.msra.mxu0 %v834
      %1079 = vmatprep.subr.mxu0 0.0
      %1080 = vmatpush2.msra.mxu0 %v833
      %1081 = vmatprep.subr.mxu0 0.0
      %1082 = vmatpush2.msra.mxu0 %v832
      %1083 = vmatprep.subr.mxu0 0.0
      %1084 = vmatpush2.msra.mxu0 %v831
      %1085 = vmatprep.subr.mxu0 0.0
      %1086 = vmatpush2.msra.mxu0 %v830
      %1087 = vmatprep.subr.mxu0 0.0
      %1088 = vmatpush2.msra.mxu0 %v829
      %1089 = vmatprep.subr.mxu0 0.0
      %1090 = vmatpush2.msra.mxu0 %v828
      %1091 = vmatprep.subr.mxu0 0.0
      %1092 = vmatpush2.msra.mxu0 %v827
      %1093 = vmatprep.subr.mxu0 0.0
      %1094 = vmatpush2.msra.mxu0 %v826
      %1095 = vmatprep.mubr.f32.mxu0 %v735
      %1096 = vmatmul.mubr.f32.gmra.mxu0 %v734
      %v1097 = vpop.f32.mrf.mxu0
      %v1098 = vadd.f32 %v1023, %v1097
      %v1099 = vpop.f32.mrf.mxu0
      %1100 = vmatprep.mubr.f32.mxu0 %v743
      %1101 = vmatmul.mubr.f32.gmra.mxu0 %v742
      %v1102 = vpop.f32.mrf.mxu0
      %v1103 = vadd.f32 %v1028, %v1102
      %v1104 = vpop.f32.mrf.mxu0
      %1105 = vdwg.mxu0
      %1106 = vmatprep.subr.mxu0 0.0
      %1107 = vmatpush1.msra.mxu0 %v857
      %1108 = vmatprep.subr.mxu0 0.0
      %1109 = vmatpush1.msra.mxu0 %v856
      %1110 = vmatprep.subr.mxu0 0.0
      %1111 = vmatpush1.msra.mxu0 %v855
      %1112 = vmatprep.subr.mxu0 0.0
      %1113 = vmatpush1.msra.mxu0 %v854
      %1114 = vmatprep.subr.mxu0 0.0
      %1115 = vmatpush1.msra.mxu0 %v853
      %1116 = vmatprep.subr.mxu0 0.0
      %1117 = vmatpush1.msra.mxu0 %v852
      %1118 = vmatprep.subr.mxu0 0.0
      %1119 = vmatpush1.msra.mxu0 %v851
      %1120 = vmatprep.subr.mxu0 0.0
      %1121 = vmatpush1.msra.mxu0 %v850
      %1122 = vmatprep.subr.mxu0 0.0
      %1123 = vmatpush1.msra.mxu0 %v849
      %1124 = vmatprep.subr.mxu0 0.0
      %1125 = vmatpush1.msra.mxu0 %v848
      %1126 = vmatprep.subr.mxu0 0.0
      %1127 = vmatpush1.msra.mxu0 %v847
      %1128 = vmatprep.subr.mxu0 0.0
      %1129 = vmatpush1.msra.mxu0 %v846
      %1130 = vmatprep.subr.mxu0 0.0
      %1131 = vmatpush1.msra.mxu0 %v845
      %1132 = vmatprep.subr.mxu0 0.0
      %1133 = vmatpush1.msra.mxu0 %v844
      %1134 = vmatprep.subr.mxu0 0.0
      %1135 = vmatpush1.msra.mxu0 %v843
      %1136 = vmatprep.subr.mxu0 0.0
      %1137 = vmatpush1.msra.mxu0 %v842
      %1138 = vmatprep.subr.mxu0 0.0
      %1139 = vmatpush2.msra.mxu0 %v873
      %1140 = vmatprep.subr.mxu0 0.0
      %1141 = vmatpush2.msra.mxu0 %v872
      %1142 = vmatprep.subr.mxu0 0.0
      %1143 = vmatpush2.msra.mxu0 %v871
      %1144 = vmatprep.subr.mxu0 0.0
      %1145 = vmatpush2.msra.mxu0 %v870
      %1146 = vmatprep.subr.mxu0 0.0
      %1147 = vmatpush2.msra.mxu0 %v869
      %1148 = vmatprep.subr.mxu0 0.0
      %1149 = vmatpush2.msra.mxu0 %v868
      %1150 = vmatprep.subr.mxu0 0.0
      %1151 = vmatpush2.msra.mxu0 %v867
      %1152 = vmatprep.subr.mxu0 0.0
      %1153 = vmatpush2.msra.mxu0 %v866
      %1154 = vmatprep.subr.mxu0 0.0
      %1155 = vmatpush2.msra.mxu0 %v865
      %1156 = vmatprep.subr.mxu0 0.0
      %1157 = vmatpush2.msra.mxu0 %v864
      %1158 = vmatprep.subr.mxu0 0.0
      %1159 = vmatpush2.msra.mxu0 %v863
      %1160 = vmatprep.subr.mxu0 0.0
      %1161 = vmatpush2.msra.mxu0 %v862
      %1162 = vmatprep.subr.mxu0 0.0
      %1163 = vmatpush2.msra.mxu0 %v861
      %1164 = vmatprep.subr.mxu0 0.0
      %1165 = vmatpush2.msra.mxu0 %v860
      %1166 = vmatprep.subr.mxu0 0.0
      %1167 = vmatpush2.msra.mxu0 %v859
      %1168 = vmatprep.subr.mxu0 0.0
      %1169 = vmatpush2.msra.mxu0 %v858
      %1170 = vmatprep.mubr.f32.mxu0 %v737
      %1171 = vmatmul.mubr.f32.gmra.mxu0 %v736
      %v1172 = vpop.f32.mrf.mxu0
      %v1173 = vadd.f32 %v1098, %v1172
      %v1174 = vpop.f32.mrf.mxu0
      %1175 = vmatprep.mubr.f32.mxu0 %v745
      %1176 = vmatmul.mubr.f32.gmra.mxu0 %v744
      %v1177 = vpop.f32.mrf.mxu0
      %v1178 = vadd.f32 %v1103, %v1177
      %v1179 = vpop.f32.mrf.mxu0
      %1180 = vdwg.mxu0
      %v1181 = vmax.f32 %v1173, 0.0
      %v1182 = vmax.f32 %v1178, 0.0
      %1183 = vst [vmem:[#allocation3] sm:$0x3f] 0.0
      %1184 = vst [vmem:[#allocation3 + $0x8] sm:$0x3f] 0.0
      %1185 = vst [vmem:[#allocation3 + $0x10] sm:$0x3f] 0.0
      %1186 = vst [vmem:[#allocation3 + $0x18] sm:$0x3f] 0.0
      %1187 = vst [vmem:[#allocation3 + $0x20] sm:$0x3f] 0.0
      %1188 = vst [vmem:[#allocation3 + $0x28] sm:$0x3f] 0.0
      %s1189 = scalar_lea.vmem [#allocation3], 8
      %1190 = vst [vmem:[%s1189 + $0x1] sm:$0xf] %v1181
      %s1191 = scalar_lea.vmem [#allocation3], 16
      %1192 = vst [vmem:[%s1191 - $0x3] sm:$0xf0] %v1181
      %s1193 = scalar_lea.vmem [#allocation3], 24
      %1194 = vst [vmem:[%s1193 + $0x1] sm:$0xf] %v1182
      %s1195 = scalar_lea.vmem [#allocation3], 32
      %1196 = vst [vmem:[%s1195 - $0x3] sm:$0xf0] %v1182
      %v1197 = vld [vmem:[#allocation3] sm:$0x1f]
      %v1198 = vld [vmem:[#allocation3 + $0x1] sm:$0x1f]
      %v1199 = vld [vmem:[%s1189] sm:$0x1f]
      %v1200 = vld [vmem:[%s1189 + $0x1] sm:$0x1f]
      %v1201 = vld [vmem:[%s1191] sm:$0x1f]
      %v1202 = vld [vmem:[%s1191 + $0x1] sm:$0x1f]
      %v1203 = vld [vmem:[%s1193] sm:$0x1f]
      %v1204 = vld [vmem:[%s1193 + $0x1] sm:$0x1f]
      %v1205 = vld [vmem:[%s1195] sm:$0x1f]
      %v1206 = vld [vmem:[%s1195 + $0x1] sm:$0x1f]
      %s1207 = scalar_lea.vmem [#allocation3], 40
      %v1208 = vld [vmem:[%s1207] sm:$0x1f]
      %v1209 = vld [vmem:[%s1207 + $0x1] sm:$0x1f]
      %v1214 = vrot.slane %v1199, 3
      %v1215 = vrot.slane %v1200, 3
      %v1216 = vrot.slane %v1201, 3
      %v1217 = vrot.slane %v1202, 3
      %v1224 = vrot.slane %v1201, 6
      %v1225 = vrot.slane %v1202, 6
      %v1226 = vrot.slane %v1203, 6
      %v1227 = vrot.slane %v1204, 6
      %v1234 = vrot.slane %v1203, 1
      %v1235 = vrot.slane %v1204, 1
      %v1236 = vrot.slane %v1205, 1
      %v1237 = vrot.slane %v1206, 1
      %v1244 = vrot.slane %v1205, 4
      %v1245 = vrot.slane %v1206, 4
      %v1246 = vrot.slane %v1208, 4
      %v1247 = vrot.slane %v1209, 4
      %vm1252 = vcmask 1044480
      %v1253 = vsel %vm1252, %v1197, %v1214
      %v1254 = vsel %vm1252, %v1198, %v1215
      %v1255 = vsel %vm1252, %v1199, %v1216
      %v1256 = vsel %vm1252, %v1200, %v1217
      %vm1257 = vcmask 1041408
      %v1258 = vsel %vm1257, %v1214, %v1224
      %v1259 = vsel %vm1257, %v1215, %v1225
      %v1260 = vsel %vm1257, %v1216, %v1226
      %v1261 = vsel %vm1257, %v1217, %v1227
      %vm1262 = vcmask 1046528
      %v1263 = vsel %vm1262, %v1258, %v1234
      %v1264 = vsel %vm1262, %v1259, %v1235
      %v1265 = vsel %vm1262, %v1260, %v1236
      %v1266 = vsel %vm1262, %v1261, %v1237
      %v1267 = vsel %vm729, %v1234, %v1244
      %v1268 = vsel %vm729, %v1235, %v1245
      %v1269 = vsel %vm729, %v1236, %v1246
      %v1270 = vsel %vm729, %v1237, %v1247
      %v1271 = vld [vmem:[%s5] sm:$0xff]
      %v1272 = vld [vmem:[%s5 + $0x8] sm:$0xff]
      %v1273 = vld [vmem:[%s5 + $0x10] sm:$0xff]
      %v1274 = vld [vmem:[%s5 + $0x18] sm:$0xff]
      %v1275 = vld [vmem:[%s5 + $0x20] sm:$0xff]
      %v1276 = vld [vmem:[%s5 + $0x28] sm:$0xff]
      %v1277 = vld [vmem:[%s5 + $0x30] sm:$0xff]
      %v1278 = vld [vmem:[%s5 + $0x38] sm:$0xff]
      %v1279 = vld [vmem:[%s5 + $0x40] sm:$0xff]
      %v1280 = vld [vmem:[%s5 + $0x48] sm:$0xff]
      %v1281 = vld [vmem:[%s5 + $0x50] sm:$0xff]
      %v1282 = vld [vmem:[%s5 + $0x58] sm:$0xff]
      %v1283 = vld [vmem:[%s5 + $0x60] sm:$0xff]
      %v1284 = vld [vmem:[%s5 + $0x68] sm:$0xff]
      %v1285 = vld [vmem:[%s5 + $0x70] sm:$0xff]
      %v1286 = vld [vmem:[%s5 + $0x78] sm:$0xff]
      %v1287 = vld [vmem:[%s5 + $0x80] sm:$0xff]
      %v1288 = vld [vmem:[%s5 + $0x88] sm:$0xff]
      %v1289 = vld [vmem:[%s5 + $0x90] sm:$0xff]
      %v1290 = vld [vmem:[%s5 + $0x98] sm:$0xff]
      %v1291 = vld [vmem:[%s5 + $0xa0] sm:$0xff]
      %v1292 = vld [vmem:[%s5 + $0xa8] sm:$0xff]
      %v1293 = vld [vmem:[%s5 + $0xb0] sm:$0xff]
      %v1294 = vld [vmem:[%s5 + $0xb8] sm:$0xff]
      %v1295 = vld [vmem:[%s5 + $0xc0] sm:$0xff]
      %v1296 = vld [vmem:[%s5 + $0xc8] sm:$0xff]
      %v1297 = vld [vmem:[%s5 + $0xd0] sm:$0xff]
      %v1298 = vld [vmem:[%s5 + $0xd8] sm:$0xff]
      %v1299 = vld [vmem:[%s5 + $0xe0] sm:$0xff]
      %v1300 = vld [vmem:[%s5 + $0xe8] sm:$0xff]
      %v1301 = vld [vmem:[%s5 + $0xf0] sm:$0xff]
      %v1302 = vld [vmem:[%s5 + $0xf8] sm:$0xff]
      %v1303 = vld [vmem:[%s5 + $0x100] sm:$0xff]
      %v1304 = vld [vmem:[%s5 + $0x108] sm:$0xff]
      %v1305 = vld [vmem:[%s5 + $0x110] sm:$0xff]
      %v1306 = vld [vmem:[%s5 + $0x118] sm:$0xff]
      %v1307 = vld [vmem:[%s5 + $0x120] sm:$0xff]
      %v1308 = vld [vmem:[%s5 + $0x128] sm:$0xff]
      %v1309 = vld [vmem:[%s5 + $0x130] sm:$0xff]
      %v1310 = vld [vmem:[%s5 + $0x138] sm:$0xff]
      %v1311 = vld [vmem:[%s5 + $0x140] sm:$0xff]
      %v1312 = vld [vmem:[%s5 + $0x148] sm:$0xff]
      %v1313 = vld [vmem:[%s5 + $0x150] sm:$0xff]
      %v1314 = vld [vmem:[%s5 + $0x158] sm:$0xff]
      %v1315 = vld [vmem:[%s5 + $0x160] sm:$0xff]
      %v1316 = vld [vmem:[%s5 + $0x168] sm:$0xff]
      %v1317 = vld [vmem:[%s5 + $0x170] sm:$0xff]
      %v1318 = vld [vmem:[%s5 + $0x178] sm:$0xff]
      %v1319 = vld [vmem:[%s5 + $0x180] sm:$0xff]
      %v1320 = vld [vmem:[%s5 + $0x188] sm:$0xff]
      %v1321 = vld [vmem:[%s5 + $0x190] sm:$0xff]
      %v1322 = vld [vmem:[%s5 + $0x198] sm:$0xff]
      %v1323 = vld [vmem:[%s5 + $0x1a0] sm:$0xff]
      %v1324 = vld [vmem:[%s5 + $0x1a8] sm:$0xff]
      %v1325 = vld [vmem:[%s5 + $0x1b0] sm:$0xff]
      %v1326 = vld [vmem:[%s5 + $0x1b8] sm:$0xff]
      %v1327 = vld [vmem:[%s5 + $0x1c0] sm:$0xff]
      %v1328 = vld [vmem:[%s5 + $0x1c8] sm:$0xff]
      %v1329 = vld [vmem:[%s5 + $0x1d0] sm:$0xff]
      %v1330 = vld [vmem:[%s5 + $0x1d8] sm:$0xff]
      %v1331 = vld [vmem:[%s5 + $0x1e0] sm:$0xff]
      %v1332 = vld [vmem:[%s5 + $0x1e8] sm:$0xff]
      %v1333 = vld [vmem:[%s5 + $0x1f0] sm:$0xff]
      %v1334 = vld [vmem:[%s5 + $0x1f8] sm:$0xff]
      %v1335 = vld [vmem:[%s5 + $0x200] sm:$0xff]
      %v1336 = vld [vmem:[%s5 + $0x208] sm:$0xff]
      %v1337 = vld [vmem:[%s5 + $0x210] sm:$0xff]
      %v1338 = vld [vmem:[%s5 + $0x218] sm:$0xff]
      %v1339 = vld [vmem:[%s5 + $0x220] sm:$0xff]
      %v1340 = vld [vmem:[%s5 + $0x228] sm:$0xff]
      %v1341 = vld [vmem:[%s5 + $0x230] sm:$0xff]
      %v1342 = vld [vmem:[%s5 + $0x238] sm:$0xff]
      %v1343 = vld [vmem:[%s5 + $0x240] sm:$0xff]
      %v1344 = vld [vmem:[%s5 + $0x248] sm:$0xff]
      %v1345 = vld [vmem:[%s5 + $0x250] sm:$0xff]
      %v1346 = vld [vmem:[%s5 + $0x258] sm:$0xff]
      %v1347 = vld [vmem:[%s5 + $0x260] sm:$0xff]
      %v1348 = vld [vmem:[%s5 + $0x268] sm:$0xff]
      %v1349 = vld [vmem:[%s5 + $0x270] sm:$0xff]
      %v1350 = vld [vmem:[%s5 + $0x278] sm:$0xff]
      %v1351 = vld [vmem:[%s5 + $0x280] sm:$0xff]
      %v1352 = vld [vmem:[%s5 + $0x288] sm:$0xff]
      %v1353 = vld [vmem:[%s5 + $0x290] sm:$0xff]
      %v1354 = vld [vmem:[%s5 + $0x298] sm:$0xff]
      %v1355 = vld [vmem:[%s5 + $0x2a0] sm:$0xff]
      %v1356 = vld [vmem:[%s5 + $0x2a8] sm:$0xff]
      %v1357 = vld [vmem:[%s5 + $0x2b0] sm:$0xff]
      %v1358 = vld [vmem:[%s5 + $0x2b8] sm:$0xff]
      %v1359 = vld [vmem:[%s5 + $0x2c0] sm:$0xff]
      %v1360 = vld [vmem:[%s5 + $0x2c8] sm:$0xff]
      %v1361 = vld [vmem:[%s5 + $0x2d0] sm:$0xff]
      %v1362 = vld [vmem:[%s5 + $0x2d8] sm:$0xff]
      %v1363 = vld [vmem:[%s5 + $0x2e0] sm:$0xff]
      %v1364 = vld [vmem:[%s5 + $0x2e8] sm:$0xff]
      %v1365 = vld [vmem:[%s5 + $0x2f0] sm:$0xff]
      %v1366 = vld [vmem:[%s5 + $0x2f8] sm:$0xff]
      %v1367 = vld [vmem:[%s5 + $0x300] sm:$0xff]
      %v1368 = vld [vmem:[%s5 + $0x308] sm:$0xff]
      %v1369 = vld [vmem:[%s5 + $0x310] sm:$0xff]
      %v1370 = vld [vmem:[%s5 + $0x318] sm:$0xff]
      %v1371 = vld [vmem:[%s5 + $0x320] sm:$0xff]
      %v1372 = vld [vmem:[%s5 + $0x328] sm:$0xff]
      %v1373 = vld [vmem:[%s5 + $0x330] sm:$0xff]
      %v1374 = vld [vmem:[%s5 + $0x338] sm:$0xff]
      %v1375 = vld [vmem:[%s5 + $0x340] sm:$0xff]
      %v1376 = vld [vmem:[%s5 + $0x348] sm:$0xff]
      %v1377 = vld [vmem:[%s5 + $0x350] sm:$0xff]
      %v1378 = vld [vmem:[%s5 + $0x358] sm:$0xff]
      %v1379 = vld [vmem:[%s5 + $0x360] sm:$0xff]
      %v1380 = vld [vmem:[%s5 + $0x368] sm:$0xff]
      %v1381 = vld [vmem:[%s5 + $0x370] sm:$0xff]
      %v1382 = vld [vmem:[%s5 + $0x378] sm:$0xff]
      %v1383 = vld [vmem:[%s5 + $0x380] sm:$0xff]
      %v1384 = vld [vmem:[%s5 + $0x388] sm:$0xff]
      %v1385 = vld [vmem:[%s5 + $0x390] sm:$0xff]
      %v1386 = vld [vmem:[%s5 + $0x398] sm:$0xff]
      %v1387 = vld [vmem:[%s5 + $0x3a0] sm:$0xff]
      %v1388 = vld [vmem:[%s5 + $0x3a8] sm:$0xff]
      %v1389 = vld [vmem:[%s5 + $0x3b0] sm:$0xff]
      %v1390 = vld [vmem:[%s5 + $0x3b8] sm:$0xff]
      %v1391 = vld [vmem:[%s5 + $0x3c0] sm:$0xff]
      %v1392 = vld [vmem:[%s5 + $0x3c8] sm:$0xff]
      %v1393 = vld [vmem:[%s5 + $0x3d0] sm:$0xff]
      %v1394 = vld [vmem:[%s5 + $0x3d8] sm:$0xff]
      %v1395 = vld [vmem:[%s5 + $0x3e0] sm:$0xff]
      %v1396 = vld [vmem:[%s5 + $0x3e8] sm:$0xff]
      %v1397 = vld [vmem:[%s5 + $0x3f0] sm:$0xff]
      %v1398 = vld [vmem:[%s5 + $0x3f8] sm:$0xff]
      %v1399 = vld [vmem:[%s6] sm:$0x3]
      %v1401 = vlaneseq
      %v1402 = vshrl.u32 %v1401, 7
      %v1403 = vsub.s32 0, %v1402
      %v1404 = vrot.slane %v1399, %v1403
      %v1405 = vlaneseq
      %v1406 = vshrl.u32 %v1405, 7
      %v1407 = vsub.s32 1, %v1406
      %v1408 = vrot.slane %v1399, %v1407
      %1411 = vmatprep.subr.mxu0 %v1302
      %1412 = vmatpush1.msra.mxu0 %v1301
      %1413 = vmatprep.subr.mxu0 %v1300
      %1414 = vmatpush1.msra.mxu0 %v1299
      %1415 = vmatprep.subr.mxu0 %v1298
      %1416 = vmatpush1.msra.mxu0 %v1297
      %1417 = vmatprep.subr.mxu0 %v1296
      %1418 = vmatpush1.msra.mxu0 %v1295
      %1419 = vmatprep.subr.mxu0 %v1294
      %1420 = vmatpush1.msra.mxu0 %v1293
      %1421 = vmatprep.subr.mxu0 %v1292
      %1422 = vmatpush1.msra.mxu0 %v1291
      %1423 = vmatprep.subr.mxu0 %v1290
      %1424 = vmatpush1.msra.mxu0 %v1289
      %1425 = vmatprep.subr.mxu0 %v1288
      %1426 = vmatpush1.msra.mxu0 %v1287
      %1427 = vmatprep.subr.mxu0 %v1286
      %1428 = vmatpush1.msra.mxu0 %v1285
      %1429 = vmatprep.subr.mxu0 %v1284
      %1430 = vmatpush1.msra.mxu0 %v1283
      %1431 = vmatprep.subr.mxu0 %v1282
      %1432 = vmatpush1.msra.mxu0 %v1281
      %1433 = vmatprep.subr.mxu0 %v1280
      %1434 = vmatpush1.msra.mxu0 %v1279
      %1435 = vmatprep.subr.mxu0 %v1278
      %1436 = vmatpush1.msra.mxu0 %v1277
      %1437 = vmatprep.subr.mxu0 %v1276
      %1438 = vmatpush1.msra.mxu0 %v1275
      %1439 = vmatprep.subr.mxu0 %v1274
      %1440 = vmatpush1.msra.mxu0 %v1273
      %1441 = vmatprep.subr.mxu0 %v1272
      %1442 = vmatpush1.msra.mxu0 %v1271
      %1443 = vmatprep.subr.mxu0 %v1334
      %1444 = vmatpush2.msra.mxu0 %v1333
      %1445 = vmatprep.subr.mxu0 %v1332
      %1446 = vmatpush2.msra.mxu0 %v1331
      %1447 = vmatprep.subr.mxu0 %v1330
      %1448 = vmatpush2.msra.mxu0 %v1329
      %1449 = vmatprep.subr.mxu0 %v1328
      %1450 = vmatpush2.msra.mxu0 %v1327
      %1451 = vmatprep.subr.mxu0 %v1326
      %1452 = vmatpush2.msra.mxu0 %v1325
      %1453 = vmatprep.subr.mxu0 %v1324
      %1454 = vmatpush2.msra.mxu0 %v1323
      %1455 = vmatprep.subr.mxu0 %v1322
      %1456 = vmatpush2.msra.mxu0 %v1321
      %1457 = vmatprep.subr.mxu0 %v1320
      %1458 = vmatpush2.msra.mxu0 %v1319
      %1459 = vmatprep.subr.mxu0 %v1318
      %1460 = vmatpush2.msra.mxu0 %v1317
      %1461 = vmatprep.subr.mxu0 %v1316
      %1462 = vmatpush2.msra.mxu0 %v1315
      %1463 = vmatprep.subr.mxu0 %v1314
      %1464 = vmatpush2.msra.mxu0 %v1313
      %1465 = vmatprep.subr.mxu0 %v1312
      %1466 = vmatpush2.msra.mxu0 %v1311
      %1467 = vmatprep.subr.mxu0 %v1310
      %1468 = vmatpush2.msra.mxu0 %v1309
      %1469 = vmatprep.subr.mxu0 %v1308
      %1470 = vmatpush2.msra.mxu0 %v1307
      %1471 = vmatprep.subr.mxu0 %v1306
      %1472 = vmatpush2.msra.mxu0 %v1305
      %1473 = vmatprep.subr.mxu0 %v1304
      %1474 = vmatpush2.msra.mxu0 %v1303
      %1475 = vmatprep.mubr.f32.mxu0 %v1254
      %1476 = vmatmul.mubr.f32.gmra.mxu0 %v1253
      %v1477 = vpop.f32.mrf.mxu0
      %v1478 = vadd.f32 %v1404, %v1477
      %v1479 = vpop.f32.mrf.mxu0
      %v1480 = vadd.f32 %v1408, %v1479
      %1481 = vmatprep.mubr.f32.mxu0 %v1264
      %1482 = vmatmul.mubr.f32.gmra.mxu0 %v1263
      %v1483 = vpop.f32.mrf.mxu0
      %v1484 = vadd.f32 %v1404, %v1483
      %v1485 = vpop.f32.mrf.mxu0
      %v1486 = vadd.f32 %v1408, %v1485
      %1487 = vmatprep.mubr.f32.mxu0 %v1268
      %1488 = vmatmul.mubr.f32.gmra.mxu0 %v1267
      %v1489 = vpop.f32.mrf.mxu0
      %v1490 = vadd.f32 %v1404, %v1489
      %v1491 = vpop.f32.mrf.mxu0
      %v1492 = vadd.f32 %v1408, %v1491
      %1493 = vmatprep.mubr.f32.mxu0 %v1245
      %1494 = vmatmul.mubr.f32.gmra.mxu0 %v1244
      %v1495 = vpop.f32.mrf.mxu0
      %v1496 = vpop.f32.mrf.mxu0
      %v1497 = vadd.f32 %v1408, %v1496
      %1498 = vdwg.mxu0
      %1499 = vmatprep.subr.mxu0 %v1366
      %1500 = vmatpush1.msra.mxu0 %v1365
      %1501 = vmatprep.subr.mxu0 %v1364
      %1502 = vmatpush1.msra.mxu0 %v1363
      %1503 = vmatprep.subr.mxu0 %v1362
      %1504 = vmatpush1.msra.mxu0 %v1361
      %1505 = vmatprep.subr.mxu0 %v1360
      %1506 = vmatpush1.msra.mxu0 %v1359
      %1507 = vmatprep.subr.mxu0 %v1358
      %1508 = vmatpush1.msra.mxu0 %v1357
      %1509 = vmatprep.subr.mxu0 %v1356
      %1510 = vmatpush1.msra.mxu0 %v1355
      %1511 = vmatprep.subr.mxu0 %v1354
      %1512 = vmatpush1.msra.mxu0 %v1353
      %1513 = vmatprep.subr.mxu0 %v1352
      %1514 = vmatpush1.msra.mxu0 %v1351
      %1515 = vmatprep.subr.mxu0 %v1350
      %1516 = vmatpush1.msra.mxu0 %v1349
      %1517 = vmatprep.subr.mxu0 %v1348
      %1518 = vmatpush1.msra.mxu0 %v1347
      %1519 = vmatprep.subr.mxu0 %v1346
      %1520 = vmatpush1.msra.mxu0 %v1345
      %1521 = vmatprep.subr.mxu0 %v1344
      %1522 = vmatpush1.msra.mxu0 %v1343
      %1523 = vmatprep.subr.mxu0 %v1342
      %1524 = vmatpush1.msra.mxu0 %v1341
      %1525 = vmatprep.subr.mxu0 %v1340
      %1526 = vmatpush1.msra.mxu0 %v1339
      %1527 = vmatprep.subr.mxu0 %v1338
      %1528 = vmatpush1.msra.mxu0 %v1337
      %1529 = vmatprep.subr.mxu0 %v1336
      %1530 = vmatpush1.msra.mxu0 %v1335
      %1531 = vmatprep.subr.mxu0 %v1398
      %1532 = vmatpush2.msra.mxu0 %v1397
      %1533 = vmatprep.subr.mxu0 %v1396
      %1534 = vmatpush2.msra.mxu0 %v1395
      %1535 = vmatprep.subr.mxu0 %v1394
      %1536 = vmatpush2.msra.mxu0 %v1393
      %1537 = vmatprep.subr.mxu0 %v1392
      %1538 = vmatpush2.msra.mxu0 %v1391
      %1539 = vmatprep.subr.mxu0 %v1390
      %1540 = vmatpush2.msra.mxu0 %v1389
      %1541 = vmatprep.subr.mxu0 %v1388
      %1542 = vmatpush2.msra.mxu0 %v1387
      %1543 = vmatprep.subr.mxu0 %v1386
      %1544 = vmatpush2.msra.mxu0 %v1385
      %1545 = vmatprep.subr.mxu0 %v1384
      %1546 = vmatpush2.msra.mxu0 %v1383
      %1547 = vmatprep.subr.mxu0 %v1382
      %1548 = vmatpush2.msra.mxu0 %v1381
      %1549 = vmatprep.subr.mxu0 %v1380
      %1550 = vmatpush2.msra.mxu0 %v1379
      %1551 = vmatprep.subr.mxu0 %v1378
      %1552 = vmatpush2.msra.mxu0 %v1377
      %1553 = vmatprep.subr.mxu0 %v1376
      %1554 = vmatpush2.msra.mxu0 %v1375
      %1555 = vmatprep.subr.mxu0 %v1374
      %1556 = vmatpush2.msra.mxu0 %v1373
      %1557 = vmatprep.subr.mxu0 %v1372
      %1558 = vmatpush2.msra.mxu0 %v1371
      %1559 = vmatprep.subr.mxu0 %v1370
      %1560 = vmatpush2.msra.mxu0 %v1369
      %1561 = vmatprep.subr.mxu0 %v1368
      %1562 = vmatpush2.msra.mxu0 %v1367
      %1563 = vmatprep.mubr.f32.mxu0 %v1256
      %1564 = vmatmul.mubr.f32.gmra.mxu0 %v1255
      %v1565 = vpop.f32.mrf.mxu0
      %v1566 = vadd.f32 %v1478, %v1565
      %v1567 = vpop.f32.mrf.mxu0
      %v1568 = vadd.f32 %v1480, %v1567
      %1569 = vmatprep.mubr.f32.mxu0 %v1266
      %1570 = vmatmul.mubr.f32.gmra.mxu0 %v1265
      %v1571 = vpop.f32.mrf.mxu0
      %v1572 = vadd.f32 %v1484, %v1571
      %v1573 = vpop.f32.mrf.mxu0
      %v1574 = vadd.f32 %v1486, %v1573
      %1575 = vmatprep.mubr.f32.mxu0 %v1270
      %1576 = vmatmul.mubr.f32.gmra.mxu0 %v1269
      %v1577 = vpop.f32.mrf.mxu0
      %v1578 = vadd.f32 %v1490, %v1577
      %v1579 = vpop.f32.mrf.mxu0
      %v1580 = vadd.f32 %v1492, %v1579
      %1581 = vmatprep.mubr.f32.mxu0 %v1247
      %1582 = vmatmul.mubr.f32.gmra.mxu0 %v1246
      %v1583 = vpop.f32.mrf.mxu0
      %v1584 = vpop.f32.mrf.mxu0
      %v1585 = vadd.f32 %v1497, %v1584
      %1586 = vdwg.mxu0
      %v1587 = vmax.f32 %v1566, 0.0
      %v1588 = vmax.f32 %v1568, 0.0
      %v1589 = vmax.f32 %v1572, 0.0
      %v1590 = vmax.f32 %v1574, 0.0
      %v1591 = vmax.f32 %v1578, 0.0
      %v1592 = vmax.f32 %v1580, 0.0
      %v1593 = vmax.f32 %v1585, 0.0
      %1594 = vst.msk [vmem:[#allocation4] sm:$0x3f] %vm477, 0.0
      %1595 = vst.msk [vmem:[#allocation4 + $0x8] sm:$0x3f] %vm477, 0.0
      %1596 = vst.msk [vmem:[#allocation4 + $0x10] sm:$0x3f] %vm477, 0.0
      %1597 = vst.msk [vmem:[#allocation4 + $0x18] sm:$0x3f] %vm477, 0.0
      %1598 = vst.msk [vmem:[#allocation4 + $0x20] sm:$0x3f] %vm477, 0.0
      %1599 = vst.msk [vmem:[#allocation4 + $0x28] sm:$0x3f] %vm477, 0.0
      %1600 = vst.msk [vmem:[#allocation4 + $0x30] sm:$0x3f] %vm477, 0.0
      %1601 = vst.msk [vmem:[#allocation4 + $0x38] sm:$0x3f] %vm477, 0.0
      %1602 = vst.msk [vmem:[#allocation4 + $0x40] sm:$0x3f] %vm477, 0.0
      %1603 = vst.msk [vmem:[#allocation4 + $0x48] sm:$0x3f] %vm477, 0.0
      %1604 = vst.msk [vmem:[#allocation4 + $0x50] sm:$0x3f] %vm477, 0.0
      %1605 = vst.msk [vmem:[#allocation4 + $0x58] sm:$0x3f] %vm477, 0.0
      %1606 = vst.msk [vmem:[#allocation4 + $0x60] sm:$0x3f] %vm477, 0.0
      %1607 = vst.msk [vmem:[#allocation4 + $0x68] sm:$0x3f] %vm477, 0.0
      %1608 = vst.msk [vmem:[#allocation4 + $0x70] sm:$0x3f] %vm477, 0.0
      %1609 = vst.msk [vmem:[#allocation4 + $0x78] sm:$0x3f] %vm477, 0.0
      %1610 = vst.msk [vmem:[#allocation4 + $0x80] sm:$0x3f] %vm477, 0.0
      %1611 = vst.msk [vmem:[#allocation4 + $0x88] sm:$0x3f] %vm477, 0.0
      %1612 = vst.msk [vmem:[#allocation4 + $0x90] sm:$0x3f] %vm477, 0.0
      %1613 = vst.msk [vmem:[#allocation4 + $0x98] sm:$0x3f] %vm477, 0.0
      %1614 = vst.msk [vmem:[#allocation4 + $0xa0] sm:$0x3f] %vm477, 0.0
      %1615 = vst.msk [vmem:[#allocation4 + $0xa8] sm:$0x3f] %vm477, 0.0
      %1616 = vst.msk [vmem:[#allocation4 + $0xb0] sm:$0x3f] %vm477, 0.0
      %1617 = vst.msk [vmem:[#allocation4 + $0xb8] sm:$0x3f] %vm477, 0.0
      %1620 = vrot.lane.b32.xlu0 %v1588, 64
      %v1621 = vpop.permute.xlu0 %1620
      %1622 = vrot.lane.b32.xlu0 %v1590, 64
      %v1623 = vpop.permute.xlu0 %1622
      %s1626 = scalar_lea.vmem [#allocation4], 8
      %vm1627 = vcmask 523270
      %1628 = vst.msk [vmem:[%s1626 - $0x5] sm:$0xc0] %vm1627, %v1621
      %vm1629 = vcmask 517120
      %1630 = vst.msk [vmem:[%s1626 + $0x3] sm:$0x3] %vm1629, %v1623
      %s1631 = scalar_lea.vmem [#allocation4], 16
      %vm1632 = vcmask 522243
      %1633 = vst.msk [vmem:[%s1631 - $0x2] sm:$0x78] %vm1632, %v1623
      %1635 = vrot.lane.b32.xlu0 %v1592, 64
      %v1636 = vpop.permute.xlu0 %1635
      %s1638 = scalar_lea.vmem [#allocation4], 24
      %1639 = vst.msk [vmem:[%s1638 + $0x1] sm:$0xf] %vm503, %v1636
      %1641 = vrot.lane.b32.xlu0 %v1593, 64
      %v1642 = vpop.permute.xlu0 %1641
      %s1644 = scalar_lea.vmem [#allocation4], 32
      %vm1645 = vcmask 523269
      %1646 = vst.msk [vmem:[%s1644 - $0x4] sm:$0xe0] %vm1645, %v1636
      %vm1647 = vcmask 516096
      %1648 = vst.msk [vmem:[%s1644 + $0x4] sm:$0x1] %vm1647, %v1642
      %s1649 = scalar_lea.vmem [#allocation4], 56
      %1650 = vst.msk [vmem:[%s1649 - $0x5] sm:$0xe0] %vm1645, %v1588
      %1651 = vst.msk [vmem:[%s1649 + $0x3] sm:$0x1] %vm1647, %v1590
      %s1652 = scalar_lea.vmem [#allocation4], 64
      %vm1653 = vcmask 521218
      %1654 = vst.msk [vmem:[%s1652 - $0x2] sm:$0x3c] %vm1653, %v1590
      %s1655 = scalar_lea.vmem [#allocation4], 72
      %vm1656 = vcmask 523271
      %1657 = vst.msk [vmem:[%s1655 - $0x7] sm:$0x80] %vm1656, %v1590
      %vm1658 = vcmask 518144
      %1659 = vst.msk [vmem:[%s1655 + $0x1] sm:$0x7] %vm1658, %v1592
      %s1660 = scalar_lea.vmem [#allocation4], 80
      %1661 = vst.msk [vmem:[%s1660 - $0x4] sm:$0xf0] %vm506, %v1592
      %1663 = vrot.lane.b32.xlu0 %v1587, 64
      %v1664 = vpop.permute.xlu0 %1663
      %s1666 = scalar_lea.vmem [#allocation4], 96
      %vm1667 = vcmask 520193
      %1668 = vst.msk [vmem:[%s1666] sm:$0x1e] %vm1667, %v1664
      %1670 = vrot.lane.b32.xlu0 %v1589, 64
      %v1671 = vpop.permute.xlu0 %1670
      %s1673 = scalar_lea.vmem [#allocation4], 104
      %1674 = vst.msk [vmem:[%s1673 - $0x5] sm:$0xc0] %vm1627, %v1664
      %1675 = vst.msk [vmem:[%s1673 + $0x3] sm:$0x3] %vm1629, %v1671
      %s1676 = scalar_lea.vmem [#allocation4], 112
      %1677 = vst.msk [vmem:[%s1676 - $0x2] sm:$0x78] %vm1632, %v1671
      %1679 = vrot.lane.b32.xlu0 %v1591, 64
      %v1680 = vpop.permute.xlu0 %1679
      %s1682 = scalar_lea.vmem [#allocation4], 120
      %1683 = vst.msk [vmem:[%s1682 + $0x1] sm:$0xf] %vm503, %v1680
      %s1684 = scalar_lea.vmem [#allocation4], 144
      %1685 = vst.msk [vmem:[%s1684] sm:$0xf] %vm503, %v1587
      %s1686 = scalar_lea.vmem [#allocation4], 152
      %1687 = vst.msk [vmem:[%s1686 - $0x5] sm:$0xe0] %vm1645, %v1587
      %1688 = vst.msk [vmem:[%s1686 + $0x3] sm:$0x1] %vm1647, %v1589
      %s1689 = scalar_lea.vmem [#allocation4], 160
      %1690 = vst.msk [vmem:[%s1689 - $0x2] sm:$0x3c] %vm1653, %v1589
      %s1691 = scalar_lea.vmem [#allocation4], 168
      %1692 = vst.msk [vmem:[%s1691 - $0x7] sm:$0x80] %vm1656, %v1589
      %1693 = vst.msk [vmem:[%s1691 + $0x1] sm:$0x7] %vm1658, %v1591
      %v1694 = vld [vmem:[#allocation4] sm:$0x1f]
      %s1695 = scalar_lea.vmem [#allocation4], 48
      %v1696 = vld [vmem:[%s1695] sm:$0x1f]
      %v1697 = vld [vmem:[%s1666] sm:$0x1f]
      %v1698 = vld [vmem:[%s1684] sm:$0x1f]
      %1700 = vrot.lane.b32.xlu0 %v1696, 64
      %v1701 = vpop.permute.xlu0 %1700
      %1704 = vrot.lane.b32.xlu0 %v1698, 64
      %v1705 = vpop.permute.xlu0 %1704
      %v1707 = vsel %vm586, %v1694, %v1701
      %v1708 = vsel %vm586, %v1697, %v1705
      %v1709 = vld [vmem:[%s1626] sm:$0x1f]
      %v1710 = vld [vmem:[%s1649] sm:$0x1f]
      %v1711 = vld [vmem:[%s1673] sm:$0x1f]
      %v1712 = vld [vmem:[%s1686] sm:$0x1f]
      %1714 = vrot.lane.b32.xlu0 %v1710, 64
      %v1715 = vpop.permute.xlu0 %1714
      %1718 = vrot.lane.b32.xlu0 %v1712, 64
      %v1719 = vpop.permute.xlu0 %1718
      %v1721 = vsel %vm586, %v1709, %v1715
      %v1722 = vsel %vm586, %v1711, %v1719
      %v1723 = vld [vmem:[%s1631] sm:$0x1f]
      %v1724 = vld [vmem:[%s1652] sm:$0x1f]
      %v1725 = vld [vmem:[%s1676] sm:$0x1f]
      %v1726 = vld [vmem:[%s1689] sm:$0x1f]
      %1728 = vrot.lane.b32.xlu0 %v1724, 64
      %v1729 = vpop.permute.xlu0 %1728
      %1732 = vrot.lane.b32.xlu0 %v1726, 64
      %v1733 = vpop.permute.xlu0 %1732
      %v1735 = vsel %vm586, %v1723, %v1729
      %v1736 = vsel %vm586, %v1725, %v1733
      %v1737 = vld [vmem:[%s1638] sm:$0x1f]
      %v1738 = vld [vmem:[%s1655] sm:$0x1f]
      %v1739 = vld [vmem:[%s1682] sm:$0x1f]
      %v1740 = vld [vmem:[%s1691] sm:$0x1f]
      %1742 = vrot.lane.b32.xlu0 %v1738, 64
      %v1743 = vpop.permute.xlu0 %1742
      %1746 = vrot.lane.b32.xlu0 %v1740, 64
      %v1747 = vpop.permute.xlu0 %1746
      %v1749 = vsel %vm586, %v1737, %v1743
      %v1750 = vsel %vm586, %v1739, %v1747
      %v1751 = vld [vmem:[%s1644] sm:$0x1f]
      %v1752 = vld [vmem:[%s1660] sm:$0x1f]
      %s1753 = scalar_lea.vmem [#allocation4], 128
      %v1754 = vld [vmem:[%s1753] sm:$0x1f]
      %s1755 = scalar_lea.vmem [#allocation4], 176
      %v1756 = vld [vmem:[%s1755] sm:$0x1f]
      %1758 = vrot.lane.b32.xlu0 %v1752, 64
      %v1759 = vpop.permute.xlu0 %1758
      %1762 = vrot.lane.b32.xlu0 %v1756, 64
      %v1763 = vpop.permute.xlu0 %1762
      %v1765 = vsel %vm586, %v1751, %v1759
      %v1766 = vsel %vm586, %v1754, %v1763
      %v1767 = vld [vmem:[#allocation4 + $0x1] sm:$0x1f]
      %v1768 = vld [vmem:[%s1666 + $0x1] sm:$0x1f]
      %1770 = vrot.lane.b32.xlu0 %v1767, 64
      %v1771 = vpop.permute.xlu0 %1770
      %1774 = vrot.lane.b32.xlu0 %v1768, 64
      %v1775 = vpop.permute.xlu0 %1774
      %v1777 = vsel %vm586, %v1696, %v1771
      %v1778 = vsel %vm586, %v1698, %v1775
      %v1779 = vld [vmem:[%s1626 + $0x1] sm:$0x1f]
      %v1780 = vld [vmem:[%s1673 + $0x1] sm:$0x1f]
      %1782 = vrot.lane.b32.xlu0 %v1779, 64
      %v1783 = vpop.permute.xlu0 %1782
      %1786 = vrot.lane.b32.xlu0 %v1780, 64
      %v1787 = vpop.permute.xlu0 %1786
      %v1789 = vsel %vm586, %v1710, %v1783
      %v1790 = vsel %vm586, %v1712, %v1787
      %v1791 = vld [vmem:[%s1631 + $0x1] sm:$0x1f]
      %v1792 = vld [vmem:[%s1676 + $0x1] sm:$0x1f]
      %1794 = vrot.lane.b32.xlu0 %v1791, 64
      %v1795 = vpop.permute.xlu0 %1794
      %1798 = vrot.lane.b32.xlu0 %v1792, 64
      %v1799 = vpop.permute.xlu0 %1798
      %v1801 = vsel %vm586, %v1724, %v1795
      %v1802 = vsel %vm586, %v1726, %v1799
      %v1803 = vld [vmem:[%s1638 + $0x1] sm:$0x1f]
      %v1804 = vld [vmem:[%s1682 + $0x1] sm:$0x1f]
      %1806 = vrot.lane.b32.xlu0 %v1803, 64
      %v1807 = vpop.permute.xlu0 %1806
      %1810 = vrot.lane.b32.xlu0 %v1804, 64
      %v1811 = vpop.permute.xlu0 %1810
      %v1813 = vsel %vm586, %v1738, %v1807
      %v1814 = vsel %vm586, %v1740, %v1811
      %v1815 = vld [vmem:[%s1644 + $0x1] sm:$0x1f]
      %v1816 = vld [vmem:[%s1753 + $0x1] sm:$0x1f]
      %1818 = vrot.lane.b32.xlu0 %v1815, 64
      %v1819 = vpop.permute.xlu0 %1818
      %1822 = vrot.lane.b32.xlu0 %v1816, 64
      %v1823 = vpop.permute.xlu0 %1822
      %v1825 = vsel %vm586, %v1752, %v1819
      %v1826 = vsel %vm586, %v1756, %v1823
      %s1827 = scalar_lea.vmem [#allocation4], 40
      %v1828 = vld [vmem:[%s1827] sm:$0x1f]
      %s1829 = scalar_lea.vmem [#allocation4], 88
      %v1830 = vld [vmem:[%s1829] sm:$0x1f]
      %1832 = vrot.lane.b32.xlu0 %v1830, 64
      %v1833 = vpop.permute.xlu0 %1832
      %v1835 = vsel %vm586, %v1828, %v1833
      %v1836 = vld [vmem:[%s1827 + $0x1] sm:$0x1f]
      %1838 = vrot.lane.b32.xlu0 %v1836, 64
      %v1839 = vpop.permute.xlu0 %1838
      %v1841 = vsel %vm586, %v1830, %v1839
      %v1844 = vrot.slane %v1721, 3
      %v1845 = vrot.slane %v1722, 3
      %v1850 = vrot.slane %v1735, 6
      %v1851 = vrot.slane %v1736, 6
      %v1856 = vrot.slane %v1749, 1
      %v1857 = vrot.slane %v1750, 1
      %v1862 = vrot.slane %v1765, 4
      %v1863 = vrot.slane %v1766, 4
      %v1868 = vrot.slane %v1777, 7
      %v1869 = vrot.slane %v1778, 7
      %v1874 = vrot.slane %v1789, 2
      %v1875 = vrot.slane %v1790, 2
      %v1880 = vrot.slane %v1801, 5
      %v1881 = vrot.slane %v1802, 5
      %v1886 = vrot.slane %v1825, 3
      %v1887 = vrot.slane %v1826, 3
      %v1891 = vrot.slane %v1708, 6
      %v1892 = vrot.slane %v1721, 6
      %v1895 = vrot.slane %v1722, 1
      %v1896 = vrot.slane %v1735, 1
      %v1899 = vrot.slane %v1736, 4
      %v1900 = vrot.slane %v1749, 4
      %v1903 = vrot.slane %v1750, 7
      %v1904 = vrot.slane %v1765, 7
      %v1908 = vrot.slane %v1766, 2
      %v1909 = vrot.slane %v1835, 2
      %v1912 = vrot.slane %v1778, 5
      %v1913 = vrot.slane %v1789, 5
      %v1916 = vsel %vm1252, %v1707, %v1844
      %v1917 = vsel %vm1252, %v1708, %v1845
      %v1918 = vsel %vm1257, %v1844, %v1850
      %v1919 = vsel %vm1257, %v1845, %v1851
      %v1920 = vsel %vm1262, %v1918, %v1856
      %v1921 = vsel %vm1262, %v1919, %v1857
      %v1922 = vsel %vm729, %v1856, %v1862
      %v1923 = vsel %vm729, %v1857, %v1863
      %vm1924 = vcmask 1040384
      %v1925 = vsel %vm1924, %v1862, %v1868
      %v1926 = vsel %vm1924, %v1863, %v1869
      %vm1927 = vcmask 1045504
      %v1928 = vsel %vm1927, %v1925, %v1874
      %v1929 = vsel %vm1927, %v1926, %v1875
      %vm1930 = vcmask 1042432
      %v1931 = vsel %vm1930, %v1874, %v1880
      %v1932 = vsel %vm1930, %v1875, %v1881
      %v1933 = vsel %vm1252, %v1813, %v1886
      %v1934 = vsel %vm1252, %v1814, %v1887
      %v1935 = vsel %vm1257, %v1886, %v1891
      %v1936 = vsel %vm1257, %v1887, %v1892
      %v1937 = vsel %vm1262, %v1935, %v1895
      %v1938 = vsel %vm1262, %v1936, %v1896
      %v1939 = vsel %vm729, %v1895, %v1899
      %v1940 = vsel %vm729, %v1896, %v1900
      %v1941 = vsel %vm1924, %v1899, %v1903
      %v1942 = vsel %vm1924, %v1900, %v1904
      %v1943 = vsel %vm1927, %v1941, %v1908
      %v1944 = vsel %vm1927, %v1942, %v1909
      %v1945 = vsel %vm1930, %v1908, %v1912
      %v1946 = vsel %vm1930, %v1909, %v1913
      %v1948 = vrot.slane %v1802, 3
      %v1949 = vrot.slane %v1813, 3
      %v1953 = vrot.slane %v1814, 6
      %v1954 = vrot.slane %v1825, 6
      %v1958 = vrot.slane %v1826, 1
      %v1959 = vrot.slane %v1841, 1
      %v1962 = vsel %vm1252, %v1790, %v1948
      %v1963 = vsel %vm1252, %v1801, %v1949
      %v1964 = vsel %vm1257, %v1948, %v1953
      %v1965 = vsel %vm1257, %v1949, %v1954
      %v1966 = vsel %vm1262, %v1964, %v1958
      %v1967 = vsel %vm1262, %v1965, %v1959
      %v1968 = vld [vmem:[%s7] sm:$0xff]
      %v1969 = vld [vmem:[%s7 + $0x8] sm:$0xff]
      %v1970 = vld [vmem:[%s7 + $0x10] sm:$0xff]
      %v1971 = vld [vmem:[%s7 + $0x18] sm:$0xff]
      %v1972 = vld [vmem:[%s7 + $0x20] sm:$0xff]
      %v1973 = vld [vmem:[%s7 + $0x28] sm:$0xff]
      %v1974 = vld [vmem:[%s7 + $0x30] sm:$0xff]
      %v1975 = vld [vmem:[%s7 + $0x38] sm:$0xff]
      %v1976 = vld [vmem:[%s7 + $0x40] sm:$0xff]
      %v1977 = vld [vmem:[%s7 + $0x48] sm:$0xff]
      %v1978 = vld [vmem:[%s7 + $0x50] sm:$0xff]
      %v1979 = vld [vmem:[%s7 + $0x58] sm:$0xff]
      %v1980 = vld [vmem:[%s7 + $0x60] sm:$0xff]
      %v1981 = vld [vmem:[%s7 + $0x68] sm:$0xff]
      %v1982 = vld [vmem:[%s7 + $0x70] sm:$0xff]
      %v1983 = vld [vmem:[%s7 + $0x78] sm:$0xff]
      %v1984 = vld [vmem:[%s7 + $0x80] sm:$0xff]
      %v1985 = vld [vmem:[%s7 + $0x88] sm:$0xff]
      %v1986 = vld [vmem:[%s7 + $0x90] sm:$0xff]
      %v1987 = vld [vmem:[%s7 + $0x98] sm:$0xff]
      %v1988 = vld [vmem:[%s7 + $0xa0] sm:$0xff]
      %v1989 = vld [vmem:[%s7 + $0xa8] sm:$0xff]
      %v1990 = vld [vmem:[%s7 + $0xb0] sm:$0xff]
      %v1991 = vld [vmem:[%s7 + $0xb8] sm:$0xff]
      %v1992 = vld [vmem:[%s7 + $0xc0] sm:$0xff]
      %v1993 = vld [vmem:[%s7 + $0xc8] sm:$0xff]
      %v1994 = vld [vmem:[%s7 + $0xd0] sm:$0xff]
      %v1995 = vld [vmem:[%s7 + $0xd8] sm:$0xff]
      %v1996 = vld [vmem:[%s7 + $0xe0] sm:$0xff]
      %v1997 = vld [vmem:[%s7 + $0xe8] sm:$0xff]
      %v1998 = vld [vmem:[%s7 + $0xf0] sm:$0xff]
      %v1999 = vld [vmem:[%s7 + $0xf8] sm:$0xff]
      %v2000 = vld [vmem:[%s8] sm:$0x1]
      %v2002 = vlaneseq
      %v2003 = vshrl.u32 %v2002, 7
      %v2004 = vsub.s32 0, %v2003
      %v2005 = vrot.slane %v2000, %v2004
      %2007 = vmatprep.subr.mxu0 0.0
      %2008 = vmatpush1.msra.mxu0 %v1983
      %2009 = vmatprep.subr.mxu0 0.0
      %2010 = vmatpush1.msra.mxu0 %v1982
      %2011 = vmatprep.subr.mxu0 0.0
      %2012 = vmatpush1.msra.mxu0 %v1981
      %2013 = vmatprep.subr.mxu0 0.0
      %2014 = vmatpush1.msra.mxu0 %v1980
      %2015 = vmatprep.subr.mxu0 0.0
      %2016 = vmatpush1.msra.mxu0 %v1979
      %2017 = vmatprep.subr.mxu0 0.0
      %2018 = vmatpush1.msra.mxu0 %v1978
      %2019 = vmatprep.subr.mxu0 0.0
      %2020 = vmatpush1.msra.mxu0 %v1977
      %2021 = vmatprep.subr.mxu0 0.0
      %2022 = vmatpush1.msra.mxu0 %v1976
      %2023 = vmatprep.subr.mxu0 0.0
      %2024 = vmatpush1.msra.mxu0 %v1975
      %2025 = vmatprep.subr.mxu0 0.0
      %2026 = vmatpush1.msra.mxu0 %v1974
      %2027 = vmatprep.subr.mxu0 0.0
      %2028 = vmatpush1.msra.mxu0 %v1973
      %2029 = vmatprep.subr.mxu0 0.0
      %2030 = vmatpush1.msra.mxu0 %v1972
      %2031 = vmatprep.subr.mxu0 0.0
      %2032 = vmatpush1.msra.mxu0 %v1971
      %2033 = vmatprep.subr.mxu0 0.0
      %2034 = vmatpush1.msra.mxu0 %v1970
      %2035 = vmatprep.subr.mxu0 0.0
      %2036 = vmatpush1.msra.mxu0 %v1969
      %2037 = vmatprep.subr.mxu0 0.0
      %2038 = vmatpush1.msra.mxu0 %v1968
      %2039 = vmatprep.subr.mxu0 0.0
      %2040 = vmatpush2.msra.mxu0 %v1999
      %2041 = vmatprep.subr.mxu0 0.0
      %2042 = vmatpush2.msra.mxu0 %v1998
      %2043 = vmatprep.subr.mxu0 0.0
      %2044 = vmatpush2.msra.mxu0 %v1997
      %2045 = vmatprep.subr.mxu0 0.0
      %2046 = vmatpush2.msra.mxu0 %v1996
      %2047 = vmatprep.subr.mxu0 0.0
      %2048 = vmatpush2.msra.mxu0 %v1995
      %2049 = vmatprep.subr.mxu0 0.0
      %2050 = vmatpush2.msra.mxu0 %v1994
      %2051 = vmatprep.subr.mxu0 0.0
      %2052 = vmatpush2.msra.mxu0 %v1993
      %2053 = vmatprep.subr.mxu0 0.0
      %2054 = vmatpush2.msra.mxu0 %v1992
      %2055 = vmatprep.subr.mxu0 0.0
      %2056 = vmatpush2.msra.mxu0 %v1991
      %2057 = vmatprep.subr.mxu0 0.0
      %2058 = vmatpush2.msra.mxu0 %v1990
      %2059 = vmatprep.subr.mxu0 0.0
      %2060 = vmatpush2.msra.mxu0 %v1989
      %2061 = vmatprep.subr.mxu0 0.0
      %2062 = vmatpush2.msra.mxu0 %v1988
      %2063 = vmatprep.subr.mxu0 0.0
      %2064 = vmatpush2.msra.mxu0 %v1987
      %2065 = vmatprep.subr.mxu0 0.0
      %2066 = vmatpush2.msra.mxu0 %v1986
      %2067 = vmatprep.subr.mxu0 0.0
      %2068 = vmatpush2.msra.mxu0 %v1985
      %2069 = vmatprep.subr.mxu0 0.0
      %2070 = vmatpush2.msra.mxu0 %v1984
      %2071 = vmatprep.mubr.f32.mxu0 %v1917
      %2072 = vmatmul.mubr.f32.gmra.mxu0 %v1916
      %v2073 = vpop.f32.mrf.mxu0
      %v2074 = vadd.f32 %v2005, %v2073
      %v2075 = vpop.f32.mrf.mxu0
      %2076 = vmatprep.mubr.f32.mxu0 %v1921
      %2077 = vmatmul.mubr.f32.gmra.mxu0 %v1920
      %v2078 = vpop.f32.mrf.mxu0
      %v2079 = vadd.f32 %v2005, %v2078
      %v2080 = vpop.f32.mrf.mxu0
      %2081 = vmatprep.mubr.f32.mxu0 %v1923
      %2082 = vmatmul.mubr.f32.gmra.mxu0 %v1922
      %v2083 = vpop.f32.mrf.mxu0
      %v2084 = vadd.f32 %v2005, %v2083
      %v2085 = vpop.f32.mrf.mxu0
      %2086 = vmatprep.mubr.f32.mxu0 %v1929
      %2087 = vmatmul.mubr.f32.gmra.mxu0 %v1928
      %v2088 = vpop.f32.mrf.mxu0
      %v2089 = vadd.f32 %v2005, %v2088
      %v2090 = vpop.f32.mrf.mxu0
      %2091 = vmatprep.mubr.f32.mxu0 %v1932
      %2092 = vmatmul.mubr.f32.gmra.mxu0 %v1931
      %v2093 = vpop.f32.mrf.mxu0
      %v2094 = vadd.f32 %v2005, %v2093
      %v2095 = vpop.f32.mrf.mxu0
      %2096 = vmatprep.mubr.f32.mxu0 %v1934
      %2097 = vmatmul.mubr.f32.gmra.mxu0 %v1933
      %v2098 = vpop.f32.mrf.mxu0
      %v2099 = vadd.f32 %v2005, %v2098
      %v2100 = vpop.f32.mrf.mxu0
      %2101 = vmatprep.mubr.f32.mxu0 %v1938
      %2102 = vmatmul.mubr.f32.gmra.mxu0 %v1937
      %v2103 = vpop.f32.mrf.mxu0
      %v2104 = vadd.f32 %v2005, %v2103
      %v2105 = vpop.f32.mrf.mxu0
      %2106 = vmatprep.mubr.f32.mxu0 %v1940
      %2107 = vmatmul.mubr.f32.gmra.mxu0 %v1939
      %v2108 = vpop.f32.mrf.mxu0
      %v2109 = vadd.f32 %v2005, %v2108
      %v2110 = vpop.f32.mrf.mxu0
      %2111 = vmatprep.mubr.f32.mxu0 %v1944
      %2112 = vmatmul.mubr.f32.gmra.mxu0 %v1943
      %v2113 = vpop.f32.mrf.mxu0
      %v2114 = vadd.f32 %v2005, %v2113
      %v2115 = vpop.f32.mrf.mxu0
      %2116 = vmatprep.mubr.f32.mxu0 %v1946
      %2117 = vmatmul.mubr.f32.gmra.mxu0 %v1945
      %v2118 = vpop.f32.mrf.mxu0
      %v2119 = vadd.f32 %v2005, %v2118
      %v2120 = vpop.f32.mrf.mxu0
      %2121 = vmatprep.mubr.f32.mxu0 %v1963
      %2122 = vmatmul.mubr.f32.gmra.mxu0 %v1962
      %v2123 = vpop.f32.mrf.mxu0
      %v2124 = vadd.f32 %v2005, %v2123
      %v2125 = vpop.f32.mrf.mxu0
      %2126 = vmatprep.mubr.f32.mxu0 %v1967
      %2127 = vmatmul.mubr.f32.gmra.mxu0 %v1966
      %v2128 = vpop.f32.mrf.mxu0
      %v2129 = vadd.f32 %v2005, %v2128
      %v2130 = vpop.f32.mrf.mxu0
      %2131 = vmatprep.mubr.f32.mxu0 %v1959
      %2132 = vmatmul.mubr.f32.gmra.mxu0 %v1958
      %v2133 = vpop.f32.mrf.mxu0
      %v2134 = vadd.f32 %v2005, %v2133
      %v2135 = vpop.f32.mrf.mxu0
      %2136 = vdwg.mxu0
      %v2137 = vtanh.pop %v2074
      %v2138 = vtanh.pop %v2079
      %v2139 = vtanh.pop %v2084
      %v2140 = vtanh.pop %v2089
      %v2141 = vtanh.pop %v2094
      %v2142 = vtanh.pop %v2099
      %v2143 = vtanh.pop %v2104
      %v2144 = vtanh.pop %v2109
      %v2145 = vtanh.pop %v2114
      %v2146 = vtanh.pop %v2119
      %v2147 = vtanh.pop %v2124
      %v2148 = vtanh.pop %v2129
      %v2149 = vtanh.pop %v2134
      %vm2150 = vcmask 97280
      %2151 = vst.msk [vmem:[%s332] sm:$0xff] %vm2150, %v2137
      %2152 = vst.msk [vmem:[%s332 + $0x8] sm:$0xff] %vm2150, %v2138
      %2153 = vst.msk [vmem:[%s332 + $0x10] sm:$0xff] %vm2150, %v2139
      %2154 = vst.msk [vmem:[%s332 + $0x18] sm:$0xff] %vm2150, %v2140
      %2155 = vst.msk [vmem:[%s332 + $0x20] sm:$0xff] %vm2150, %v2141
      %2156 = vst.msk [vmem:[%s332 + $0x28] sm:$0xff] %vm2150, %v2142
      %2157 = vst.msk [vmem:[%s332 + $0x30] sm:$0xff] %vm2150, %v2143
      %2158 = vst.msk [vmem:[%s332 + $0x38] sm:$0xff] %vm2150, %v2144
      %2159 = vst.msk [vmem:[%s332 + $0x40] sm:$0xff] %vm2150, %v2145
      %2160 = vst.msk [vmem:[%s332 + $0x48] sm:$0xff] %vm2150, %v2146
      %2161 = vst.msk [vmem:[%s332 + $0x50] sm:$0xff] %vm2150, %v2147
      %2162 = vst.msk [vmem:[%s332 + $0x58] sm:$0xff] %vm2150, %v2148
      %vm2163 = vcmask 93184
      %2164 = vst.msk [vmem:[%s332 + $0x60] sm:$0xf] %vm2163, %v2149
      %p2165 = scmp.lt.s32.totalorder %s20, 1
      %s2166 = scalar_select %p2165, %s20, 1
      %s2167 = smul.addr %s2166, 13
      %s2168 = smul.addr %s2167, 8
      %s2169 = scalar_lea.vmem %s9, %s2168
      // Predicated region
      $region57: #{cyclegan_forward.1} parent=55 // pred_check
        %p2170 = pneg %p232
      $region58: #{cyclegan_forward.1} parent=55 // pred_check_branch
        %2172 = sbr.rel (%p2170) target = $region60
      $region59: #{cyclegan_forward.1} parent=55 // pred_region
        _
      $region60: #{cyclegan_forward.1} parent=55 // pred_fallthru
        _
    $region56: #{cyclegan_forward.1} parent=5 // pred_fallthru
      _
    %p2173 = scmp.le.s32.totalorder 2, %s15
    // Predicated region
    $region61: #{cyclegan_forward.1} parent=5 // pred_check
      %p2174 = pneg %p2173
    $region62: #{cyclegan_forward.1} parent=5 // pred_check_branch
      %2176 = sbr.rel (%p2174) target = $region64
    $region63: #{cyclegan_forward.1} parent=5 // pred_region
      %s2177 = ssub.s32 %s15, 2
      // Predicated region
      $region65: #{cyclegan_forward.1} parent=63 // pred_check
        %p2178 = pneg %p238
      $region66: #{cyclegan_forward.1} parent=63 // pred_check_branch
        %2180 = sbr.rel (%p2178) target = $region68
      $region67: #{cyclegan_forward.1} parent=63 // pred_region
        %p2181 = scmp.lt.s32.totalorder %s21, 1
        %s2182 = scalar_select %p2181, %s21, 1
        %s2183 = smul.addr %s2182, 13
        %s2184 = smul.addr %s2183, 8
        %s2185 = scalar_lea.vmem %s9, %s2184
      $region68: #{cyclegan_forward.1} parent=63 // pred_fallthru
        _
    $region64: #{cyclegan_forward.1} parent=5 // pred_fallthru
      _
  $region6: #{cyclegan_forward.1} parent=0 // loop_footer
    %s19 = sadd.s32 1, %s15
  $region7: #{cyclegan_forward.1} parent=0 // loop_footer_branch
    %14 = sbr.rel target = $region3
  $region8: #{cyclegan_forward.1} parent=0 // loop_exit
    _

</llo_original>
